<compile_context>
chip_gen: v6e
topology: v6e:2x2x1
jax: 0.10.0
libtpu: 0.0.40
codegen_flags: <defaults>
</compile_context>

<pallas_src>
import numpy as np

import jax
import jax.numpy as jnp
from jax.experimental import pallas as pl
from jax.experimental.pallas import tpu as pltpu


_PAD = 16  # sublane halo for the shifted-slice depthwise conv (covers |off|<=13)
_TAPS = [(dt, dh, dw) for dt in (-1, 0, 1) for dh in (-1, 0, 1) for dw in (-1, 0, 1)]
_CENTER = _TAPS.index((0, 0, 0))


def _elu(h):
    # ELU(alpha=1).  expm1(h) is computed as tanh(h/2) * (exp(h) + 1), which is
    # exact mathematically and numerically stable for small |h| (no exp(h)-1
    # cancellation), using only exp/tanh (EUP slot, guaranteed Mosaic lowering).
    return jnp.where(h > 0, h, jnp.tanh(0.5 * h) * (jnp.exp(h) + 1.0))


# ----------------------------- Pallas kernel --------------------------------

def _ffn_kernel(x_ref, w1T_ref, b1_ref, mtap_ref, b2_ref, w2T_ref, b3_ref,
                o_ref, hpad_ref):
    M = x_ref.shape[1]           # TB * P tokens in this batch chunk
    F = hpad_ref.shape[1]
    pad_rows = hpad_ref.shape[0]

    # ---- fc1: 1x1x1 conv (bf16 MXU, f32 acc); BN1 scale folded into w1T ----
    h1 = jnp.dot(x_ref[0].astype(jnp.bfloat16), w1T_ref[...],
                 preferred_element_type=jnp.float32)          # (M, F)
    h1 = _elu(h1 + b1_ref[...])

    # ---- STConv: depthwise 3x3x3 conv (padding=1) over the (T,3,3) volume ----
    # Statically-shifted slices out of a zero-halo VMEM scratch; each tap uses
    # a host-fused (validity mask x tap weight x BN2 scale) tensor, so the
    # unrolled loop is a single multiply-add per tap.
    hpad_ref[0:_PAD, :] = jnp.zeros((_PAD, F), jnp.float32)
    hpad_ref[_PAD + M:pad_rows, :] = jnp.zeros((pad_rows - _PAD - M, F),
                                               jnp.float32)
    hpad_ref[_PAD:_PAD + M, :] = h1

    acc = mtap_ref[_CENTER] * h1                              # center tap (off=0)
    for tap, (dt, dh, dw) in enumerate(_TAPS):
        off = dt * 9 + dh * 3 + dw
        if off == 0:
            continue
        acc = acc + mtap_ref[tap] * hpad_ref[_PAD + off:_PAD + off + M, :]
    h2 = _elu(acc + b2_ref[...])

    # ---- fc2: 1x1x1 conv (bf16 MXU, f32 acc); BN3 scale folded into w2T ----
    out = jnp.dot(h2.astype(jnp.bfloat16), w2T_ref[...],
                  preferred_element_type=jnp.float32)         # (M, C)
    o_ref[0] = (out + b3_ref[...]).astype(o_ref.dtype)


# ------------------------------ JAX wrapper ----------------------------------

def _fold_bn(gamma, beta, mean, var, eps=1e-5):
    scale = gamma / jnp.sqrt(var + eps)
    shift = beta - mean * scale
    return scale, shift


def _tap_masks(T):
    """(P, 27) f32 validity mask for every (position, conv-tap) pair."""
    P = T * 9
    p = np.arange(P)
    t, r = p // 9, p % 9
    h, w = r // 3, r % 3
    m = np.zeros((P, 27), np.float32)
    for i, (dt, dh, dw) in enumerate(_TAPS):
        ok = ((t + dt >= 0) & (t + dt < T) &
              (h + dh >= 0) & (h + dh < 3) &
              (w + dw >= 0) & (w + dw < 3))
        m[:, i] = ok.astype(np.float32)
    return m


def pwff_st_forward(x, params):
    """Pallas implementation of PositionWiseFeedForward_ST.forward (inference)."""
    B, P, C = x.shape
    assert P % 9 == 0, "sequence length must be T*3*3"
    T = P // 9
    F = params["w1"].shape[0]

    # Batch chunking: fold TB batches into the matmul M dimension; keep >=2
    # "parallel" chunks when B is even so v7x can shard across its two
    # TensorCores.  (For very large B / realistic dims, cap TB against the
    # VMEM budget -- the fused tap tensor is 27*TB*P*F*4 bytes -- and raise
    # vmem_limit_bytes; unnecessary at these sizes.)
    TB = B // 2 if B % 2 == 0 else B
    num_chunks = B // TB
    M = TB * P

    s1, b1 = _fold_bn(params["bn1_gamma"], params["bn1_beta"],
                      params["bn1_mean"], params["bn1_var"])
    s2, b2 = _fold_bn(params["bn2_gamma"], params["bn2_beta"],
                      params["bn2_mean"], params["bn2_var"])
    s3, b3 = _fold_bn(params["bn3_gamma"], params["bn3_beta"],
                      params["bn3_mean"], params["bn3_var"])

    # 1x1x1 conv weights: transpose, fold BN scale, pre-cast to bf16 (MXU dtype).
    w1T = (params["w1"].reshape(F, C).T * s1[None, :]).astype(jnp.bfloat16)  # (C, F)
    w2T = (params["w2"].reshape(C, F).T * s3[None, :]).astype(jnp.bfloat16)  # (F, C)

    # Depthwise taps: fold BN2 scale per channel, fuse with per-position
    # validity masks (tiled across the TB folded batches) -> (27, M, F), f32.
    wdw = params["wdw"].reshape(F, 27).T * s2[None, :]                       # (27, F)
    masks = jnp.asarray(np.tile(_tap_masks(T), (TB, 1)))                     # (M, 27)
    mtap = masks.T[:, :, None] * wdw[:, None, :]                             # (27, M, F)

    b1 = b1.reshape(1, F).astype(jnp.float32)
    b2 = b2.reshape(1, F).astype(jnp.float32)
    b3 = b3.reshape(1, C).astype(jnp.float32)

    x3 = x.reshape(num_chunks, M, C)

    pad_rows = pl.cdiv(M + 2 * _PAD, 8) * 8                   # sublane-aligned scratch
    assert _PAD >= 13 and pad_rows >= _PAD + M + 13           # halo covers max |offset|

    out3 = pl.pallas_call(
        _ffn_kernel,
        out_shape=jax.ShapeDtypeStruct((num_chunks, M, C), x.dtype),
        grid_spec=pltpu.PrefetchScalarGridSpec(
            num_scalar_prefetch=0,
            grid=(num_chunks,),
            in_specs=[
                pl.BlockSpec((1, M, C), lambda i: (i, 0, 0)),    # x chunk (token-major)
                pl.BlockSpec((C, F), lambda i: (0, 0)),          # fc1 weight^T (bf16, BN1-scaled)
                pl.BlockSpec((1, F), lambda i: (0, 0)),          # BN1 shift
                pl.BlockSpec((27, M, F), lambda i: (0, 0, 0)),   # fused mask*tap*BN2 weights
                pl.BlockSpec((1, F), lambda i: (0, 0)),          # BN2 shift
                pl.BlockSpec((F, C), lambda i: (0, 0)),          # fc2 weight^T (bf16, BN3-scaled)
                pl.BlockSpec((1, C), lambda i: (0, 0)),          # BN3 shift
            ],
            out_specs=pl.BlockSpec((1, M, C), lambda i: (i, 0, 0)),
            scratch_shapes=[pltpu.VMEM((pad_rows, F), jnp.float32)],
        ),
        compiler_params=pltpu.CompilerParams(
            dimension_semantics=("parallel",)),
    )(x3, w1T, b1, mtap, b2, w2T, b3)

    return out3.reshape(B, P, C)


# --------------------------- pure-JAX reference ------------------------------

def reference_forward(x, params, eps=1e-5):
    B, P, C = x.shape
    T = P // 9
    F = params["w1"].shape[0]
    xv = jnp.transpose(x, (0, 2, 1)).reshape(B, C, T, 3, 3)

    def conv3d(v, w, padding, groups=1):
        return jax.lax.conv_general_dilated(
            v, w, window_strides=(1, 1, 1), padding=padding,
            dimension_numbers=("NCDHW", "OIDHW", "NCDHW"),
            feature_group_count=groups)

    def bn(v, g, b, m, var):
        s = (1, -1, 1, 1, 1)
        return ((v - m.reshape(s)) / jnp.sqrt(var.reshape(s) + eps)
                * g.reshape(s) + b.reshape(s))

    h = conv3d(xv, params["w1"], ((0, 0),) * 3)
    h = jax.nn.elu(bn(h, params["bn1_gamma"], params["bn1_beta"],
                      params["bn1_mean"], params["bn1_var"]))
    h = conv3d(h, params["wdw"], ((1, 1),) * 3, groups=F)
    h = jax.nn.elu(bn(h, params["bn2_gamma"], params["bn2_beta"],
                      params["bn2_mean"], params["bn2_var"]))
    h = conv3d(h, params["w2"], ((0, 0),) * 3)
    h = bn(h, params["bn3_gamma"], params["bn3_beta"],
           params["bn3_mean"], params["bn3_var"])
    return h.reshape(B, C, P).transpose(0, 2, 1)


# --------------------------------- main ---------------------------------------

if __name__ == "__main__":
    B, dim, ff_dim, T = 8, 32, 64, 4     # B even -> 2 parallel chunks, TB=4
    P = T * 9                            # seq length must be divisible by 9 (T x 3 x 3)

    key = jax.random.PRNGKey(0)
    ks = jax.random.split(key, 16)

    def n(k, shape, s=1.0):
        return s * jax.random.normal(k, shape, jnp.float32)

    params = dict(
        w1=n(ks[0], (ff_dim, dim, 1, 1, 1), 0.05),
        wdw=n(ks[1], (ff_dim, 1, 3, 3, 3), 0.05),
        w2=n(ks[2], (dim, ff_dim, 1, 1, 1), 0.05),
        bn1_gamma=1.0 + n(ks[3], (ff_dim,), 0.1),
        bn1_beta=n(ks[4], (ff_dim,), 0.1),
        bn1_mean=n(ks[5], (ff_dim,), 0.1),
        bn1_var=jnp.abs(n(ks[6], (ff_dim,))) + 0.5,
        bn2_gamma=1.0 + n(ks[7], (ff_dim,), 0.1),
        bn2_beta=n(ks[8], (ff_dim,), 0.1),
        bn2_mean=n(ks[9], (ff_dim,), 0.1),
        bn2_var=jnp.abs(n(ks[10], (ff_dim,))) + 0.5,
        bn3_gamma=1.0 + n(ks[11], (dim,), 0.1),
        bn3_beta=n(ks[12], (dim,), 0.1),
        bn3_mean=n(ks[13], (dim,), 0.1),
        bn3_var=jnp.abs(n(ks[14], (dim,))) + 0.5,
    )
    x = n(ks[15], (B, P, dim))

    out = pwff_st_forward(x, params)
    jax.block_until_ready(out)

    out_ref = reference_forward(x, params)
    np.testing.assert_allclose(np.asarray(out), np.asarray(out_ref),
                               rtol=2e-2, atol=2e-2)
    print("KERNEL_OK")
</pallas_src>

<mosaic_0001>
module attributes {stable_mosaic.version = 11 : i64} {
  func.func @_ffn_kernel(%arg0: i32, %arg1: memref<1x144x32xf32, #tpu.memory_space<vmem>>, %arg2: memref<32x64xbf16, #tpu.memory_space<vmem>>, %arg3: memref<1x64xf32, #tpu.memory_space<vmem>>, %arg4: memref<27x144x64xf32, #tpu.memory_space<vmem>>, %arg5: memref<1x64xf32, #tpu.memory_space<vmem>>, %arg6: memref<64x32xbf16, #tpu.memory_space<vmem>>, %arg7: memref<1x32xf32, #tpu.memory_space<vmem>>, %arg8: memref<1x144x32xf32, #tpu.memory_space<vmem>>, %arg9: memref<176x64xf32, #tpu.memory_space<vmem>>) attributes {dimension_semantics = [#tpu.dimension_semantics<parallel>], iteration_bounds = array<i64: 2>, scalar_prefetch = 0 : i64, scratch_operands = 1 : i64, tpu.core_type = #tpu.core_type<tc>, window_params = [{transform_indices = @transform_0, window_bounds = array<i64: 1, 144, 32>}, {pipeline_mode = #tpu.pipeline_mode<synchronous>, transform_indices = @transform_1, window_bounds = array<i64: 32, 64>}, {pipeline_mode = #tpu.pipeline_mode<synchronous>, transform_indices = @transform_2, window_bounds = array<i64: 1, 64>}, {pipeline_mode = #tpu.pipeline_mode<synchronous>, transform_indices = @transform_3, window_bounds = array<i64: 27, 144, 64>}, {pipeline_mode = #tpu.pipeline_mode<synchronous>, transform_indices = @transform_4, window_bounds = array<i64: 1, 64>}, {pipeline_mode = #tpu.pipeline_mode<synchronous>, transform_indices = @transform_5, window_bounds = array<i64: 64, 32>}, {pipeline_mode = #tpu.pipeline_mode<synchronous>, transform_indices = @transform_6, window_bounds = array<i64: 1, 32>}, {transform_indices = @transform_7, window_bounds = array<i64: 1, 144, 32>}]} {
    %c0 = arith.constant 0 : index
    %c0_0 = arith.constant 0 : index
    %c0_1 = arith.constant 0 : index
    %0 = vector.load %arg1[%c0, %c0_0, %c0_1] : memref<1x144x32xf32, #tpu.memory_space<vmem>>, vector<1x144x32xf32>
    %1 = vector.shape_cast %0 : vector<1x144x32xf32> to vector<144x32xf32>
    %2 = arith.truncf %1 : vector<144x32xf32> to vector<144x32xbf16>
    %c0_2 = arith.constant 0 : index
    %c0_3 = arith.constant 0 : index
    %3 = vector.load %arg2[%c0_2, %c0_3] : memref<32x64xbf16, #tpu.memory_space<vmem>>, vector<32x64xbf16>
    %cst = arith.constant dense<0.000000e+00> : vector<144x64xf32>
    %4 = tpu.matmul %2, %3, %cst {dimension_numbers = #tpu.dot_dimension_numbers<[1], [0], [0], [1], [0, 0, 1, 1], [], []>} : vector<144x32xbf16>, vector<32x64xbf16>, vector<144x64xf32> -> vector<144x64xf32>
    %c0_4 = arith.constant 0 : index
    %c0_5 = arith.constant 0 : index
    %5 = vector.load %arg3[%c0_4, %c0_5] : memref<1x64xf32, #tpu.memory_space<vmem>>, vector<1x64xf32>
    %6 = vector.broadcast %5 : vector<1x64xf32> to vector<144x64xf32>
    %7 = arith.addf %4, %6 : vector<144x64xf32>
    %cst_6 = arith.constant 0.000000e+00 : f32
    %8 = vector.broadcast %cst_6 : f32 to vector<144x64xf32>
    %9 = arith.cmpf ogt, %7, %8 : vector<144x64xf32>
    %cst_7 = arith.constant 5.000000e-01 : f32
    %10 = vector.broadcast %cst_7 : f32 to vector<144x64xf32>
    %11 = arith.mulf %10, %7 : vector<144x64xf32>
    %12 = math.tanh %11 : vector<144x64xf32>
    %13 = math.exp %7 : vector<144x64xf32>
    %cst_8 = arith.constant 1.000000e+00 : f32
    %14 = vector.broadcast %cst_8 : f32 to vector<144x64xf32>
    %15 = arith.addf %13, %14 : vector<144x64xf32>
    %16 = arith.mulf %12, %15 : vector<144x64xf32>
    %17 = arith.select %9, %7, %16 : vector<144x64xi1>, vector<144x64xf32>
    %cst_9 = arith.constant 0.000000e+00 : f32
    %18 = vector.broadcast %cst_9 : f32 to vector<16x64xf32>
    %c0_10 = arith.constant 0 : index
    %c0_11 = arith.constant 0 : index
    %19 = vector.load %arg9[%c0_10, %c0_11] : memref<176x64xf32, #tpu.memory_space<vmem>>, vector<16x64xf32>
    tpu.vector_store %arg9[%c0_10, %c0_11], %18 {strides = array<i32>} : memref<176x64xf32, #tpu.memory_space<vmem>>, vector<16x64xf32>,
    %cst_12 = arith.constant 0.000000e+00 : f32
    %20 = vector.broadcast %cst_12 : f32 to vector<16x64xf32>
    %c160 = arith.constant 160 : index
    %c0_13 = arith.constant 0 : index
    %21 = vector.load %arg9[%c160, %c0_13] : memref<176x64xf32, #tpu.memory_space<vmem>>, vector<16x64xf32>
    tpu.vector_store %arg9[%c160, %c0_13], %20 {strides = array<i32>} : memref<176x64xf32, #tpu.memory_space<vmem>>, vector<16x64xf32>,
    %c16 = arith.constant 16 : index
    %c0_14 = arith.constant 0 : index
    %22 = vector.load %arg9[%c16, %c0_14] : memref<176x64xf32, #tpu.memory_space<vmem>>, vector<144x64xf32>
    tpu.vector_store %arg9[%c16, %c0_14], %17 {strides = array<i32>} : memref<176x64xf32, #tpu.memory_space<vmem>>, vector<144x64xf32>,
    %c13 = arith.constant 13 : index
    %c0_15 = arith.constant 0 : index
    %c0_16 = arith.constant 0 : index
    %23 = vector.load %arg4[%c13, %c0_15, %c0_16] : memref<27x144x64xf32, #tpu.memory_space<vmem>>, vector<1x144x64xf32>
    %24 = vector.shape_cast %23 : vector<1x144x64xf32> to vector<144x64xf32>
    %25 = arith.mulf %24, %17 : vector<144x64xf32>
    %c0_17 = arith.constant 0 : index
    %c0_18 = arith.constant 0 : index
    %c0_19 = arith.constant 0 : index
    %26 = vector.load %arg4[%c0_17, %c0_18, %c0_19] : memref<27x144x64xf32, #tpu.memory_space<vmem>>, vector<1x144x64xf32>
    %27 = vector.shape_cast %26 : vector<1x144x64xf32> to vector<144x64xf32>
    %c3 = arith.constant 3 : index
    %c0_20 = arith.constant 0 : index
    %28 = vector.load %arg9[%c3, %c0_20] : memref<176x64xf32, #tpu.memory_space<vmem>>, vector<144x64xf32>
    %29 = arith.mulf %27, %28 : vector<144x64xf32>
    %30 = arith.addf %25, %29 : vector<144x64xf32>
    %c1 = arith.constant 1 : index
    %c0_21 = arith.constant 0 : index
    %c0_22 = arith.constant 0 : index
    %31 = vector.load %arg4[%c1, %c0_21, %c0_22] : memref<27x144x64xf32, #tpu.memory_space<vmem>>, vector<1x144x64xf32>
    %32 = vector.shape_cast %31 : vector<1x144x64xf32> to vector<144x64xf32>
    %c4 = arith.constant 4 : index
    %c0_23 = arith.constant 0 : index
    %33 = vector.load %arg9[%c4, %c0_23] : memref<176x64xf32, #tpu.memory_space<vmem>>, vector<144x64xf32>
    %34 = arith.mulf %32, %33 : vector<144x64xf32>
    %35 = arith.addf %30, %34 : vector<144x64xf32>
    %c2 = arith.constant 2 : index
    %c0_24 = arith.constant 0 : index
    %c0_25 = arith.constant 0 : index
    %36 = vector.load %arg4[%c2, %c0_24, %c0_25] : memref<27x144x64xf32, #tpu.memory_space<vmem>>, vector<1x144x64xf32>
    %37 = vector.shape_cast %36 : vector<1x144x64xf32> to vector<144x64xf32>
    %c5 = arith.constant 5 : index
    %c0_26 = arith.constant 0 : index
    %38 = vector.load %arg9[%c5, %c0_26] : memref<176x64xf32, #tpu.memory_space<vmem>>, vector<144x64xf32>
    %39 = arith.mulf %37, %38 : vector<144x64xf32>
    %40 = arith.addf %35, %39 : vector<144x64xf32>
    %c3_27 = arith.constant 3 : index
    %c0_28 = arith.constant 0 : index
    %c0_29 = arith.constant 0 : index
    %41 = vector.load %arg4[%c3_27, %c0_28, %c0_29] : memref<27x144x64xf32, #tpu.memory_space<vmem>>, vector<1x144x64xf32>
    %42 = vector.shape_cast %41 : vector<1x144x64xf32> to vector<144x64xf32>
    %c6 = arith.constant 6 : index
    %c0_30 = arith.constant 0 : index
    %43 = vector.load %arg9[%c6, %c0_30] : memref<176x64xf32, #tpu.memory_space<vmem>>, vector<144x64xf32>
    %44 = arith.mulf %42, %43 : vector<144x64xf32>
    %45 = arith.addf %40, %44 : vector<144x64xf32>
    %c4_31 = arith.constant 4 : index
    %c0_32 = arith.constant 0 : index
    %c0_33 = arith.constant 0 : index
    %46 = vector.load %arg4[%c4_31, %c0_32, %c0_33] : memref<27x144x64xf32, #tpu.memory_space<vmem>>, vector<1x144x64xf32>
    %47 = vector.shape_cast %46 : vector<1x144x64xf32> to vector<144x64xf32>
    %c7 = arith.constant 7 : index
    %c0_34 = arith.constant 0 : index
    %48 = vector.load %arg9[%c7, %c0_34] : memref<176x64xf32, #tpu.memory_space<vmem>>, vector<144x64xf32>
    %49 = arith.mulf %47, %48 : vector<144x64xf32>
    %50 = arith.addf %45, %49 : vector<144x64xf32>
    %c5_35 = arith.constant 5 : index
    %c0_36 = arith.constant 0 : index
    %c0_37 = arith.constant 0 : index
    %51 = vector.load %arg4[%c5_35, %c0_36, %c0_37] : memref<27x144x64xf32, #tpu.memory_space<vmem>>, vector<1x144x64xf32>
    %52 = vector.shape_cast %51 : vector<1x144x64xf32> to vector<144x64xf32>
    %c8 = arith.constant 8 : index
    %c0_38 = arith.constant 0 : index
    %53 = vector.load %arg9[%c8, %c0_38] : memref<176x64xf32, #tpu.memory_space<vmem>>, vector<144x64xf32>
    %54 = arith.mulf %52, %53 : vector<144x64xf32>
    %55 = arith.addf %50, %54 : vector<144x64xf32>
    %c6_39 = arith.constant 6 : index
    %c0_40 = arith.constant 0 : index
    %c0_41 = arith.constant 0 : index
    %56 = vector.load %arg4[%c6_39, %c0_40, %c0_41] : memref<27x144x64xf32, #tpu.memory_space<vmem>>, vector<1x144x64xf32>
    %57 = vector.shape_cast %56 : vector<1x144x64xf32> to vector<144x64xf32>
    %c9 = arith.constant 9 : index
    %c0_42 = arith.constant 0 : index
    %58 = vector.load %arg9[%c9, %c0_42] : memref<176x64xf32, #tpu.memory_space<vmem>>, vector<144x64xf32>
    %59 = arith.mulf %57, %58 : vector<144x64xf32>
    %60 = arith.addf %55, %59 : vector<144x64xf32>
    %c7_43 = arith.constant 7 : index
    %c0_44 = arith.constant 0 : index
    %c0_45 = arith.constant 0 : index
    %61 = vector.load %arg4[%c7_43, %c0_44, %c0_45] : memref<27x144x64xf32, #tpu.memory_space<vmem>>, vector<1x144x64xf32>
    %62 = vector.shape_cast %61 : vector<1x144x64xf32> to vector<144x64xf32>
    %c10 = arith.constant 10 : index
    %c0_46 = arith.constant 0 : index
    %63 = vector.load %arg9[%c10, %c0_46] : memref<176x64xf32, #tpu.memory_space<vmem>>, vector<144x64xf32>
    %64 = arith.mulf %62, %63 : vector<144x64xf32>
    %65 = arith.addf %60, %64 : vector<144x64xf32>
    %c8_47 = arith.constant 8 : index
    %c0_48 = arith.constant 0 : index
    %c0_49 = arith.constant 0 : index
    %66 = vector.load %arg4[%c8_47, %c0_48, %c0_49] : memref<27x144x64xf32, #tpu.memory_space<vmem>>, vector<1x144x64xf32>
    %67 = vector.shape_cast %66 : vector<1x144x64xf32> to vector<144x64xf32>
    %c11 = arith.constant 11 : index
    %c0_50 = arith.constant 0 : index
    %68 = vector.load %arg9[%c11, %c0_50] : memref<176x64xf32, #tpu.memory_space<vmem>>, vector<144x64xf32>
    %69 = arith.mulf %67, %68 : vector<144x64xf32>
    %70 = arith.addf %65, %69 : vector<144x64xf32>
    %c9_51 = arith.constant 9 : index
    %c0_52 = arith.constant 0 : index
    %c0_53 = arith.constant 0 : index
    %71 = vector.load %arg4[%c9_51, %c0_52, %c0_53] : memref<27x144x64xf32, #tpu.memory_space<vmem>>, vector<1x144x64xf32>
    %72 = vector.shape_cast %71 : vector<1x144x64xf32> to vector<144x64xf32>
    %c12 = arith.constant 12 : index
    %c0_54 = arith.constant 0 : index
    %73 = vector.load %arg9[%c12, %c0_54] : memref<176x64xf32, #tpu.memory_space<vmem>>, vector<144x64xf32>
    %74 = arith.mulf %72, %73 : vector<144x64xf32>
    %75 = arith.addf %70, %74 : vector<144x64xf32>
    %c10_55 = arith.constant 10 : index
    %c0_56 = arith.constant 0 : index
    %c0_57 = arith.constant 0 : index
    %76 = vector.load %arg4[%c10_55, %c0_56, %c0_57] : memref<27x144x64xf32, #tpu.memory_space<vmem>>, vector<1x144x64xf32>
    %77 = vector.shape_cast %76 : vector<1x144x64xf32> to vector<144x64xf32>
    %c13_58 = arith.constant 13 : index
    %c0_59 = arith.constant 0 : index
    %78 = vector.load %arg9[%c13_58, %c0_59] : memref<176x64xf32, #tpu.memory_space<vmem>>, vector<144x64xf32>
    %79 = arith.mulf %77, %78 : vector<144x64xf32>
    %80 = arith.addf %75, %79 : vector<144x64xf32>
    %c11_60 = arith.constant 11 : index
    %c0_61 = arith.constant 0 : index
    %c0_62 = arith.constant 0 : index
    %81 = vector.load %arg4[%c11_60, %c0_61, %c0_62] : memref<27x144x64xf32, #tpu.memory_space<vmem>>, vector<1x144x64xf32>
    %82 = vector.shape_cast %81 : vector<1x144x64xf32> to vector<144x64xf32>
    %c14 = arith.constant 14 : index
    %c0_63 = arith.constant 0 : index
    %83 = vector.load %arg9[%c14, %c0_63] : memref<176x64xf32, #tpu.memory_space<vmem>>, vector<144x64xf32>
    %84 = arith.mulf %82, %83 : vector<144x64xf32>
    %85 = arith.addf %80, %84 : vector<144x64xf32>
    %c12_64 = arith.constant 12 : index
    %c0_65 = arith.constant 0 : index
    %c0_66 = arith.constant 0 : index
    %86 = vector.load %arg4[%c12_64, %c0_65, %c0_66] : memref<27x144x64xf32, #tpu.memory_space<vmem>>, vector<1x144x64xf32>
    %87 = vector.shape_cast %86 : vector<1x144x64xf32> to vector<144x64xf32>
    %c15 = arith.constant 15 : index
    %c0_67 = arith.constant 0 : index
    %88 = vector.load %arg9[%c15, %c0_67] : memref<176x64xf32, #tpu.memory_space<vmem>>, vector<144x64xf32>
    %89 = arith.mulf %87, %88 : vector<144x64xf32>
    %90 = arith.addf %85, %89 : vector<144x64xf32>
    %c14_68 = arith.constant 14 : index
    %c0_69 = arith.constant 0 : index
    %c0_70 = arith.constant 0 : index
    %91 = vector.load %arg4[%c14_68, %c0_69, %c0_70] : memref<27x144x64xf32, #tpu.memory_space<vmem>>, vector<1x144x64xf32>
    %92 = vector.shape_cast %91 : vector<1x144x64xf32> to vector<144x64xf32>
    %c17 = arith.constant 17 : index
    %c0_71 = arith.constant 0 : index
    %93 = vector.load %arg9[%c17, %c0_71] : memref<176x64xf32, #tpu.memory_space<vmem>>, vector<144x64xf32>
    %94 = arith.mulf %92, %93 : vector<144x64xf32>
    %95 = arith.addf %90, %94 : vector<144x64xf32>
    %c15_72 = arith.constant 15 : index
    %c0_73 = arith.constant 0 : index
    %c0_74 = arith.constant 0 : index
    %96 = vector.load %arg4[%c15_72, %c0_73, %c0_74] : memref<27x144x64xf32, #tpu.memory_space<vmem>>, vector<1x144x64xf32>
    %97 = vector.shape_cast %96 : vector<1x144x64xf32> to vector<144x64xf32>
    %c18 = arith.constant 18 : index
    %c0_75 = arith.constant 0 : index
    %98 = vector.load %arg9[%c18, %c0_75] : memref<176x64xf32, #tpu.memory_space<vmem>>, vector<144x64xf32>
    %99 = arith.mulf %97, %98 : vector<144x64xf32>
    %100 = arith.addf %95, %99 : vector<144x64xf32>
    %c16_76 = arith.constant 16 : index
    %c0_77 = arith.constant 0 : index
    %c0_78 = arith.constant 0 : index
    %101 = vector.load %arg4[%c16_76, %c0_77, %c0_78] : memref<27x144x64xf32, #tpu.memory_space<vmem>>, vector<1x144x64xf32>
    %102 = vector.shape_cast %101 : vector<1x144x64xf32> to vector<144x64xf32>
    %c19 = arith.constant 19 : index
    %c0_79 = arith.constant 0 : index
    %103 = vector.load %arg9[%c19, %c0_79] : memref<176x64xf32, #tpu.memory_space<vmem>>, vector<144x64xf32>
    %104 = arith.mulf %102, %103 : vector<144x64xf32>
    %105 = arith.addf %100, %104 : vector<144x64xf32>
    %c17_80 = arith.constant 17 : index
    %c0_81 = arith.constant 0 : index
    %c0_82 = arith.constant 0 : index
    %106 = vector.load %arg4[%c17_80, %c0_81, %c0_82] : memref<27x144x64xf32, #tpu.memory_space<vmem>>, vector<1x144x64xf32>
    %107 = vector.shape_cast %106 : vector<1x144x64xf32> to vector<144x64xf32>
    %c20 = arith.constant 20 : index
    %c0_83 = arith.constant 0 : index
    %108 = vector.load %arg9[%c20, %c0_83] : memref<176x64xf32, #tpu.memory_space<vmem>>, vector<144x64xf32>
    %109 = arith.mulf %107, %108 : vector<144x64xf32>
    %110 = arith.addf %105, %109 : vector<144x64xf32>
    %c18_84 = arith.constant 18 : index
    %c0_85 = arith.constant 0 : index
    %c0_86 = arith.constant 0 : index
    %111 = vector.load %arg4[%c18_84, %c0_85, %c0_86] : memref<27x144x64xf32, #tpu.memory_space<vmem>>, vector<1x144x64xf32>
    %112 = vector.shape_cast %111 : vector<1x144x64xf32> to vector<144x64xf32>
    %c21 = arith.constant 21 : index
    %c0_87 = arith.constant 0 : index
    %113 = vector.load %arg9[%c21, %c0_87] : memref<176x64xf32, #tpu.memory_space<vmem>>, vector<144x64xf32>
    %114 = arith.mulf %112, %113 : vector<144x64xf32>
    %115 = arith.addf %110, %114 : vector<144x64xf32>
    %c19_88 = arith.constant 19 : index
    %c0_89 = arith.constant 0 : index
    %c0_90 = arith.constant 0 : index
    %116 = vector.load %arg4[%c19_88, %c0_89, %c0_90] : memref<27x144x64xf32, #tpu.memory_space<vmem>>, vector<1x144x64xf32>
    %117 = vector.shape_cast %116 : vector<1x144x64xf32> to vector<144x64xf32>
    %c22 = arith.constant 22 : index
    %c0_91 = arith.constant 0 : index
    %118 = vector.load %arg9[%c22, %c0_91] : memref<176x64xf32, #tpu.memory_space<vmem>>, vector<144x64xf32>
    %119 = arith.mulf %117, %118 : vector<144x64xf32>
    %120 = arith.addf %115, %119 : vector<144x64xf32>
    %c20_92 = arith.constant 20 : index
    %c0_93 = arith.constant 0 : index
    %c0_94 = arith.constant 0 : index
    %121 = vector.load %arg4[%c20_92, %c0_93, %c0_94] : memref<27x144x64xf32, #tpu.memory_space<vmem>>, vector<1x144x64xf32>
    %122 = vector.shape_cast %121 : vector<1x144x64xf32> to vector<144x64xf32>
    %c23 = arith.constant 23 : index
    %c0_95 = arith.constant 0 : index
    %123 = vector.load %arg9[%c23, %c0_95] : memref<176x64xf32, #tpu.memory_space<vmem>>, vector<144x64xf32>
    %124 = arith.mulf %122, %123 : vector<144x64xf32>
    %125 = arith.addf %120, %124 : vector<144x64xf32>
    %c21_96 = arith.constant 21 : index
    %c0_97 = arith.constant 0 : index
    %c0_98 = arith.constant 0 : index
    %126 = vector.load %arg4[%c21_96, %c0_97, %c0_98] : memref<27x144x64xf32, #tpu.memory_space<vmem>>, vector<1x144x64xf32>
    %127 = vector.shape_cast %126 : vector<1x144x64xf32> to vector<144x64xf32>
    %c24 = arith.constant 24 : index
    %c0_99 = arith.constant 0 : index
    %128 = vector.load %arg9[%c24, %c0_99] : memref<176x64xf32, #tpu.memory_space<vmem>>, vector<144x64xf32>
    %129 = arith.mulf %127, %128 : vector<144x64xf32>
    %130 = arith.addf %125, %129 : vector<144x64xf32>
    %c22_100 = arith.constant 22 : index
    %c0_101 = arith.constant 0 : index
    %c0_102 = arith.constant 0 : index
    %131 = vector.load %arg4[%c22_100, %c0_101, %c0_102] : memref<27x144x64xf32, #tpu.memory_space<vmem>>, vector<1x144x64xf32>
    %132 = vector.shape_cast %131 : vector<1x144x64xf32> to vector<144x64xf32>
    %c25 = arith.constant 25 : index
    %c0_103 = arith.constant 0 : index
    %133 = vector.load %arg9[%c25, %c0_103] : memref<176x64xf32, #tpu.memory_space<vmem>>, vector<144x64xf32>
    %134 = arith.mulf %132, %133 : vector<144x64xf32>
    %135 = arith.addf %130, %134 : vector<144x64xf32>
    %c23_104 = arith.constant 23 : index
    %c0_105 = arith.constant 0 : index
    %c0_106 = arith.constant 0 : index
    %136 = vector.load %arg4[%c23_104, %c0_105, %c0_106] : memref<27x144x64xf32, #tpu.memory_space<vmem>>, vector<1x144x64xf32>
    %137 = vector.shape_cast %136 : vector<1x144x64xf32> to vector<144x64xf32>
    %c26 = arith.constant 26 : index
    %c0_107 = arith.constant 0 : index
    %138 = vector.load %arg9[%c26, %c0_107] : memref<176x64xf32, #tpu.memory_space<vmem>>, vector<144x64xf32>
    %139 = arith.mulf %137, %138 : vector<144x64xf32>
    %140 = arith.addf %135, %139 : vector<144x64xf32>
    %c24_108 = arith.constant 24 : index
    %c0_109 = arith.constant 0 : index
    %c0_110 = arith.constant 0 : index
    %141 = vector.load %arg4[%c24_108, %c0_109, %c0_110] : memref<27x144x64xf32, #tpu.memory_space<vmem>>, vector<1x144x64xf32>
    %142 = vector.shape_cast %141 : vector<1x144x64xf32> to vector<144x64xf32>
    %c27 = arith.constant 27 : index
    %c0_111 = arith.constant 0 : index
    %143 = vector.load %arg9[%c27, %c0_111] : memref<176x64xf32, #tpu.memory_space<vmem>>, vector<144x64xf32>
    %144 = arith.mulf %142, %143 : vector<144x64xf32>
    %145 = arith.addf %140, %144 : vector<144x64xf32>
    %c25_112 = arith.constant 25 : index
    %c0_113 = arith.constant 0 : index
    %c0_114 = arith.constant 0 : index
    %146 = vector.load %arg4[%c25_112, %c0_113, %c0_114] : memref<27x144x64xf32, #tpu.memory_space<vmem>>, vector<1x144x64xf32>
    %147 = vector.shape_cast %146 : vector<1x144x64xf32> to vector<144x64xf32>
    %c28 = arith.constant 28 : index
    %c0_115 = arith.constant 0 : index
    %148 = vector.load %arg9[%c28, %c0_115] : memref<176x64xf32, #tpu.memory_space<vmem>>, vector<144x64xf32>
    %149 = arith.mulf %147, %148 : vector<144x64xf32>
    %150 = arith.addf %145, %149 : vector<144x64xf32>
    %c26_116 = arith.constant 26 : index
    %c0_117 = arith.constant 0 : index
    %c0_118 = arith.constant 0 : index
    %151 = vector.load %arg4[%c26_116, %c0_117, %c0_118] : memref<27x144x64xf32, #tpu.memory_space<vmem>>, vector<1x144x64xf32>
    %152 = vector.shape_cast %151 : vector<1x144x64xf32> to vector<144x64xf32>
    %c29 = arith.constant 29 : index
    %c0_119 = arith.constant 0 : index
    %153 = vector.load %arg9[%c29, %c0_119] : memref<176x64xf32, #tpu.memory_space<vmem>>, vector<144x64xf32>
    %154 = arith.mulf %152, %153 : vector<144x64xf32>
    %155 = arith.addf %150, %154 : vector<144x64xf32>
    %c0_120 = arith.constant 0 : index
    %c0_121 = arith.constant 0 : index
    %156 = vector.load %arg5[%c0_120, %c0_121] : memref<1x64xf32, #tpu.memory_space<vmem>>, vector<1x64xf32>
    %157 = vector.broadcast %156 : vector<1x64xf32> to vector<144x64xf32>
    %158 = arith.addf %155, %157 : vector<144x64xf32>
    %cst_122 = arith.constant 0.000000e+00 : f32
    %159 = vector.broadcast %cst_122 : f32 to vector<144x64xf32>
    %160 = arith.cmpf ogt, %158, %159 : vector<144x64xf32>
    %cst_123 = arith.constant 5.000000e-01 : f32
    %161 = vector.broadcast %cst_123 : f32 to vector<144x64xf32>
    %162 = arith.mulf %161, %158 : vector<144x64xf32>
    %163 = math.tanh %162 : vector<144x64xf32>
    %164 = math.exp %158 : vector<144x64xf32>
    %cst_124 = arith.constant 1.000000e+00 : f32
    %165 = vector.broadcast %cst_124 : f32 to vector<144x64xf32>
    %166 = arith.addf %164, %165 : vector<144x64xf32>
    %167 = arith.mulf %163, %166 : vector<144x64xf32>
    %168 = arith.select %160, %158, %167 : vector<144x64xi1>, vector<144x64xf32>
    %169 = arith.truncf %168 : vector<144x64xf32> to vector<144x64xbf16>
    %c0_125 = arith.constant 0 : index
    %c0_126 = arith.constant 0 : index
    %170 = vector.load %arg6[%c0_125, %c0_126] : memref<64x32xbf16, #tpu.memory_space<vmem>>, vector<64x32xbf16>
    %cst_127 = arith.constant dense<0.000000e+00> : vector<144x32xf32>
    %171 = tpu.matmul %169, %170, %cst_127 {dimension_numbers = #tpu.dot_dimension_numbers<[1], [0], [0], [1], [0, 0, 1, 1], [], []>} : vector<144x64xbf16>, vector<64x32xbf16>, vector<144x32xf32> -> vector<144x32xf32>
    %c0_128 = arith.constant 0 : index
    %c0_129 = arith.constant 0 : index
    %172 = vector.load %arg7[%c0_128, %c0_129] : memref<1x32xf32, #tpu.memory_space<vmem>>, vector<1x32xf32>
    %173 = vector.broadcast %172 : vector<1x32xf32> to vector<144x32xf32>
    %174 = arith.addf %171, %173 : vector<144x32xf32>
    %c0_130 = arith.constant 0 : index
    %c0_131 = arith.constant 0 : index
    %c0_132 = arith.constant 0 : index
    %175 = vector.load %arg8[%c0_130, %c0_131, %c0_132] : memref<1x144x32xf32, #tpu.memory_space<vmem>>, vector<1x144x32xf32>
    %176 = vector.shape_cast %175 : vector<1x144x32xf32> to vector<144x32xf32>
    %177 = vector.shape_cast %174 : vector<144x32xf32> to vector<1x144x32xf32>
    tpu.vector_store %arg8[%c0_130, %c0_131, %c0_132], %177 {strides = array<i32>} : memref<1x144x32xf32, #tpu.memory_space<vmem>>, vector<1x144x32xf32>,
    return
  }
  func.func @transform_0(%arg0: i32) -> (i32, i32, i32) {
    %c0_i32 = arith.constant 0 : i32
    %c0_i32_0 = arith.constant 0 : i32
    %c0_i32_1 = arith.constant 0 : i32
    return %arg0, %c0_i32, %c0_i32_0 : i32, i32, i32
  }
  func.func @transform_1(%arg0: i32) -> (i32, i32) {
    %c0_i32 = arith.constant 0 : i32
    %c0_i32_0 = arith.constant 0 : i32
    %c0_i32_1 = arith.constant 0 : i32
    return %c0_i32, %c0_i32_0 : i32, i32
  }
  func.func @transform_2(%arg0: i32) -> (i32, i32) {
    %c0_i32 = arith.constant 0 : i32
    %c0_i32_0 = arith.constant 0 : i32
    %c0_i32_1 = arith.constant 0 : i32
    return %c0_i32, %c0_i32_0 : i32, i32
  }
  func.func @transform_3(%arg0: i32) -> (i32, i32, i32) {
    %c0_i32 = arith.constant 0 : i32
    %c0_i32_0 = arith.constant 0 : i32
    %c0_i32_1 = arith.constant 0 : i32
    %c0_i32_2 = arith.constant 0 : i32
    return %c0_i32, %c0_i32_0, %c0_i32_1 : i32, i32, i32
  }
  func.func @transform_4(%arg0: i32) -> (i32, i32) {
    %c0_i32 = arith.constant 0 : i32
    %c0_i32_0 = arith.constant 0 : i32
    %c0_i32_1 = arith.constant 0 : i32
    return %c0_i32, %c0_i32_0 : i32, i32
  }
  func.func @transform_5(%arg0: i32) -> (i32, i32) {
    %c0_i32 = arith.constant 0 : i32
    %c0_i32_0 = arith.constant 0 : i32
    %c0_i32_1 = arith.constant 0 : i32
    return %c0_i32, %c0_i32_0 : i32, i32
  }
  func.func @transform_6(%arg0: i32) -> (i32, i32) {
    %c0_i32 = arith.constant 0 : i32
    %c0_i32_0 = arith.constant 0 : i32
    %c0_i32_1 = arith.constant 0 : i32
    return %c0_i32, %c0_i32_0 : i32, i32
  }
  func.func @transform_7(%arg0: i32) -> (i32, i32, i32) {
    %c0_i32 = arith.constant 0 : i32
    %c0_i32_0 = arith.constant 0 : i32
    %c0_i32_1 = arith.constant 0 : i32
    return %arg0, %c0_i32, %c0_i32_0 : i32, i32, i32
  }
}

</mosaic_0001>

<llo_original>
// kernel: tpu_custom_call.1
$region0: #{tpu_custom_call.1}
  #allocation0 [shape = 'u32[]', space=smem, size = 0x4, offset = 0x4, fixed_abs, tag = 'smem constant byte address 0x4 - core index']
  #allocation1 [shape = 'u32[144,128]{1,0:T(1,128)}', space=vmem, size = 0x12000, scoped, tag = 'internal scratch']
  #allocation2 [shape = 'f32[176,64]{1,0:T(8,128)}', space=vmem, size = 0x16000, scoped, tag = 'scratch operand']
  %s0 = inlined_call_operand.vmem [shape: f32[2,144,32], index: 0, kind: input, shape index: {}]
  %s1 = inlined_call_operand.vmem [shape: bf16[32,64], index: 1, kind: input, shape index: {}]
  %s2 = inlined_call_operand.vmem [shape: f32[1,64], index: 2, kind: input, shape index: {}]
  %s3 = inlined_call_operand.vmem [shape: f32[27,144,64], index: 3, kind: input, shape index: {}]
  %s4 = inlined_call_operand.vmem [shape: f32[1,64], index: 4, kind: input, shape index: {}]
  %s5 = inlined_call_operand.vmem [shape: bf16[64,32], index: 5, kind: input, shape index: {}]
  %s6 = inlined_call_operand.vmem [shape: f32[1,32], index: 6, kind: input, shape index: {}]
  %s7 = inlined_call_operand.vmem [shape: f32[2,144,32], index: 7, kind: output, shape index: {}]
  %s8 = sld [smem:[#allocation0]]
  $region61: #{tpu_custom_call.1} parent=0
    _
  %s10 = ssub.s32 1, %s8
  %s11 = scalar_select 0, %s10, %s8
  loop: start=0, step=1, limit=4
  $region2: #{tpu_custom_call.1} parent=0 // loop_pre_header
    _
  $region3: #{tpu_custom_call.1} parent=0 // loop_header
    %s13 = sphi 0, %s17
    %p14 = scmp.ge.s32.totalorder %s13, 4
    %s23 = sphi 0, %s25
    %s26 = sphi 0, %s23
    %s27 = sphi 0, %s26
    %s43 = sphi 0, %s27
    %s47 = sphi 0, %s47
    %s49 = sphi 0, %s47
    %s50 = sphi 0, %s49
    %s64 = sphi 0, %s50
    %s68 = sphi 0, %s68
    %s70 = sphi 0, %s68
    %s71 = sphi 0, %s70
    %s85 = sphi 0, %s71
    %s89 = sphi 0, %s89
    %s91 = sphi 0, %s89
    %s92 = sphi 0, %s91
    %s106 = sphi 0, %s92
    %s110 = sphi 0, %s110
    %s112 = sphi 0, %s110
    %s113 = sphi 0, %s112
    %s127 = sphi 0, %s113
    %s131 = sphi 0, %s131
    %s133 = sphi 0, %s131
    %s134 = sphi 0, %s133
    %s148 = sphi 0, %s134
    %s152 = sphi 0, %s152
    %s154 = sphi 0, %s152
    %s155 = sphi 0, %s154
    %s169 = sphi 0, %s155
    %s175 = sphi 0, %s177
    %s178 = sphi 0, %s175
    %s179 = sphi 0, %s178
    %s195 = sphi 0, %s179
  $region4: #{tpu_custom_call.1} parent=0 // loop_header_branch
    %16 = sbr.rel (%p14) target = $region8
  $region5: #{tpu_custom_call.1} parent=0 // loop_body
    %s18 = ssub.s32 %s13, 1
    %s19 = ssub.s32 %s13, 2
    %s20 = sadd.s32 %s13, 1
    %s21 = ssub.s32 %s13, %s20
    %p22 = scmp.eq.s32.totalorder %s21, 0
    %s24 = sadd.s32 %s23, 1
    %s25 = scalar_select %p22, %s23, %s24
    %p28 = pneg %p22
    %p29 = scmp.eq.s32.totalorder %s13, 1
    %p30 = por %p28, %p29
    %p31 = scmp.ne.s32.totalorder %s23, %s26
    %p32 = scmp.eq.s32.totalorder %s13, 0
    %p33 = por %p31, %p32
    %p34 = scmp.ne.s32.totalorder %s23, %s26
    %p35 = scmp.eq.s32.totalorder %s18, 1
    %p36 = por %p34, %p35
    %p37 = scmp.ne.s32.totalorder %s26, %s27
    %p38 = scmp.eq.s32.totalorder %s18, 0
    %p39 = por %p37, %p38
    %p40 = scmp.ne.s32.totalorder %s26, %s27
    %p41 = scmp.eq.s32.totalorder %s19, 1
    %p42 = por %p40, %p41
    %p44 = scmp.ne.s32.totalorder %s27, %s43
    %p45 = scmp.eq.s32.totalorder %s19, 0
    %p46 = por %p44, %p45
    %s48 = sadd.s32 %s47, 1
    %p51 = scmp.eq.s32.totalorder %s13, 1
    %p52 = scmp.ne.s32.totalorder %s47, %s49
    %p53 = scmp.eq.s32.totalorder %s13, 0
    %p54 = por %p52, %p53
    %p55 = scmp.ne.s32.totalorder %s47, %s49
    %p56 = scmp.eq.s32.totalorder %s18, 1
    %p57 = por %p55, %p56
    %p58 = scmp.ne.s32.totalorder %s49, %s50
    %p59 = scmp.eq.s32.totalorder %s18, 0
    %p60 = por %p58, %p59
    %p61 = scmp.ne.s32.totalorder %s49, %s50
    %p62 = scmp.eq.s32.totalorder %s19, 1
    %p63 = por %p61, %p62
    %p65 = scmp.ne.s32.totalorder %s50, %s64
    %p66 = scmp.eq.s32.totalorder %s19, 0
    %p67 = por %p65, %p66
    %s69 = sadd.s32 %s68, 1
    %p72 = scmp.eq.s32.totalorder %s13, 1
    %p73 = scmp.ne.s32.totalorder %s68, %s70
    %p74 = scmp.eq.s32.totalorder %s13, 0
    %p75 = por %p73, %p74
    %p76 = scmp.ne.s32.totalorder %s68, %s70
    %p77 = scmp.eq.s32.totalorder %s18, 1
    %p78 = por %p76, %p77
    %p79 = scmp.ne.s32.totalorder %s70, %s71
    %p80 = scmp.eq.s32.totalorder %s18, 0
    %p81 = por %p79, %p80
    %p82 = scmp.ne.s32.totalorder %s70, %s71
    %p83 = scmp.eq.s32.totalorder %s19, 1
    %p84 = por %p82, %p83
    %p86 = scmp.ne.s32.totalorder %s71, %s85
    %p87 = scmp.eq.s32.totalorder %s19, 0
    %p88 = por %p86, %p87
    %s90 = sadd.s32 %s89, 1
    %p93 = scmp.eq.s32.totalorder %s13, 1
    %p94 = scmp.ne.s32.totalorder %s89, %s91
    %p95 = scmp.eq.s32.totalorder %s13, 0
    %p96 = por %p94, %p95
    %p97 = scmp.ne.s32.totalorder %s89, %s91
    %p98 = scmp.eq.s32.totalorder %s18, 1
    %p99 = por %p97, %p98
    %p100 = scmp.ne.s32.totalorder %s91, %s92
    %p101 = scmp.eq.s32.totalorder %s18, 0
    %p102 = por %p100, %p101
    %p103 = scmp.ne.s32.totalorder %s91, %s92
    %p104 = scmp.eq.s32.totalorder %s19, 1
    %p105 = por %p103, %p104
    %p107 = scmp.ne.s32.totalorder %s92, %s106
    %p108 = scmp.eq.s32.totalorder %s19, 0
    %p109 = por %p107, %p108
    %s111 = sadd.s32 %s110, 1
    %p114 = scmp.eq.s32.totalorder %s13, 1
    %p115 = scmp.ne.s32.totalorder %s110, %s112
    %p116 = scmp.eq.s32.totalorder %s13, 0
    %p117 = por %p115, %p116
    %p118 = scmp.ne.s32.totalorder %s110, %s112
    %p119 = scmp.eq.s32.totalorder %s18, 1
    %p120 = por %p118, %p119
    %p121 = scmp.ne.s32.totalorder %s112, %s113
    %p122 = scmp.eq.s32.totalorder %s18, 0
    %p123 = por %p121, %p122
    %p124 = scmp.ne.s32.totalorder %s112, %s113
    %p125 = scmp.eq.s32.totalorder %s19, 1
    %p126 = por %p124, %p125
    %p128 = scmp.ne.s32.totalorder %s113, %s127
    %p129 = scmp.eq.s32.totalorder %s19, 0
    %p130 = por %p128, %p129
    %s132 = sadd.s32 %s131, 1
    %p135 = scmp.eq.s32.totalorder %s13, 1
    %p136 = scmp.ne.s32.totalorder %s131, %s133
    %p137 = scmp.eq.s32.totalorder %s13, 0
    %p138 = por %p136, %p137
    %p139 = scmp.ne.s32.totalorder %s131, %s133
    %p140 = scmp.eq.s32.totalorder %s18, 1
    %p141 = por %p139, %p140
    %p142 = scmp.ne.s32.totalorder %s133, %s134
    %p143 = scmp.eq.s32.totalorder %s18, 0
    %p144 = por %p142, %p143
    %p145 = scmp.ne.s32.totalorder %s133, %s134
    %p146 = scmp.eq.s32.totalorder %s19, 1
    %p147 = por %p145, %p146
    %p149 = scmp.ne.s32.totalorder %s134, %s148
    %p150 = scmp.eq.s32.totalorder %s19, 0
    %p151 = por %p149, %p150
    %s153 = sadd.s32 %s152, 1
    %p156 = scmp.eq.s32.totalorder %s13, 1
    %p157 = scmp.ne.s32.totalorder %s152, %s154
    %p158 = scmp.eq.s32.totalorder %s13, 0
    %p159 = por %p157, %p158
    %p160 = scmp.ne.s32.totalorder %s152, %s154
    %p161 = scmp.eq.s32.totalorder %s18, 1
    %p162 = por %p160, %p161
    %p163 = scmp.ne.s32.totalorder %s154, %s155
    %p164 = scmp.eq.s32.totalorder %s18, 0
    %p165 = por %p163, %p164
    %p166 = scmp.ne.s32.totalorder %s154, %s155
    %p167 = scmp.eq.s32.totalorder %s19, 1
    %p168 = por %p166, %p167
    %p170 = scmp.ne.s32.totalorder %s155, %s169
    %p171 = scmp.eq.s32.totalorder %s19, 0
    %p172 = por %p170, %p171
    %s173 = ssub.s32 %s13, %s20
    %p174 = scmp.eq.s32.totalorder %s173, 0
    %s176 = sadd.s32 %s175, 1
    %s177 = scalar_select %p174, %s175, %s176
    %p180 = pneg %p174
    %p181 = scmp.eq.s32.totalorder %s13, 1
    %p182 = por %p180, %p181
    %p183 = scmp.ne.s32.totalorder %s175, %s178
    %p184 = scmp.eq.s32.totalorder %s13, 0
    %p185 = por %p183, %p184
    %p186 = scmp.ne.s32.totalorder %s175, %s178
    %p187 = scmp.eq.s32.totalorder %s18, 1
    %p188 = por %p186, %p187
    %p189 = scmp.ne.s32.totalorder %s178, %s179
    %p190 = scmp.eq.s32.totalorder %s18, 0
    %p191 = por %p189, %p190
    %p192 = scmp.ne.s32.totalorder %s178, %s179
    %p193 = scmp.eq.s32.totalorder %s19, 1
    %p194 = por %p192, %p193
    %p196 = scmp.ne.s32.totalorder %s179, %s195
    %p197 = scmp.eq.s32.totalorder %s19, 0
    %p198 = por %p196, %p197
    %p199 = scmp.le.s32.totalorder 1, %s13
    %p200 = scmp.lt.s32.totalorder %s13, 3
    %p201 = pnand %p199, %p200
    %p202 = pneg %p201
    // Predicated region
    $region9: #{tpu_custom_call.1} parent=5 // pred_check
      _
    $region10: #{tpu_custom_call.1} parent=5 // pred_check_branch
      %204 = sbr.rel (%p201) target = $region12
    $region11: #{tpu_custom_call.1} parent=5 // pred_region
      %s205 = ssub.s32 %s13, 1
      // Predicated region
      $region13: #{tpu_custom_call.1} parent=11 // pred_check
        %p206 = pneg %p60
      $region14: #{tpu_custom_call.1} parent=11 // pred_check_branch
        %208 = sbr.rel (%p206) target = $region16
      $region15: #{tpu_custom_call.1} parent=11 // pred_region
        _
      $region16: #{tpu_custom_call.1} parent=11 // pred_fallthru
        _
      // Predicated region
      $region17: #{tpu_custom_call.1} parent=11 // pred_check
        %p209 = pneg %p81
      $region18: #{tpu_custom_call.1} parent=11 // pred_check_branch
        %211 = sbr.rel (%p209) target = $region20
      $region19: #{tpu_custom_call.1} parent=11 // pred_region
        _
      $region20: #{tpu_custom_call.1} parent=11 // pred_fallthru
        _
      // Predicated region
      $region21: #{tpu_custom_call.1} parent=11 // pred_check
        %p212 = pneg %p102
      $region22: #{tpu_custom_call.1} parent=11 // pred_check_branch
        %214 = sbr.rel (%p212) target = $region24
      $region23: #{tpu_custom_call.1} parent=11 // pred_region
        _
      $region24: #{tpu_custom_call.1} parent=11 // pred_fallthru
        _
      // Predicated region
      $region25: #{tpu_custom_call.1} parent=11 // pred_check
        %p215 = pneg %p123
      $region26: #{tpu_custom_call.1} parent=11 // pred_check_branch
        %217 = sbr.rel (%p215) target = $region28
      $region27: #{tpu_custom_call.1} parent=11 // pred_region
        _
      $region28: #{tpu_custom_call.1} parent=11 // pred_fallthru
        _
      // Predicated region
      $region29: #{tpu_custom_call.1} parent=11 // pred_check
        %p218 = pneg %p144
      $region30: #{tpu_custom_call.1} parent=11 // pred_check_branch
        %220 = sbr.rel (%p218) target = $region32
      $region31: #{tpu_custom_call.1} parent=11 // pred_region
        _
      $region32: #{tpu_custom_call.1} parent=11 // pred_fallthru
        _
      // Predicated region
      $region33: #{tpu_custom_call.1} parent=11 // pred_check
        %p221 = pneg %p165
      $region34: #{tpu_custom_call.1} parent=11 // pred_check_branch
        %223 = sbr.rel (%p221) target = $region36
      $region35: #{tpu_custom_call.1} parent=11 // pred_region
        _
      $region36: #{tpu_custom_call.1} parent=11 // pred_fallthru
        _
    $region12: #{tpu_custom_call.1} parent=5 // pred_fallthru
      _
    %p224 = scmp.lt.s32.totalorder %s13, 2
    // Predicated region
    $region37: #{tpu_custom_call.1} parent=5 // pred_check
      %p225 = pneg %p224
    $region38: #{tpu_custom_call.1} parent=5 // pred_check_branch
      %227 = sbr.rel (%p225) target = $region40
    $region39: #{tpu_custom_call.1} parent=5 // pred_region
      // Predicated region
      $region41: #{tpu_custom_call.1} parent=39 // pred_check
        %p228 = pneg %p33
      $region42: #{tpu_custom_call.1} parent=39 // pred_check_branch
        %230 = sbr.rel (%p228) target = $region44
      $region43: #{tpu_custom_call.1} parent=39 // pred_region
        %p231 = scmp.lt.s32.totalorder %s13, 1
        %s232 = scalar_select %p231, %s13, 1
        %s233 = smul.addr %s232, 18
        %s234 = smul.addr %s233, 8
        %s235 = scalar_lea.vmem %s0, %s234
      $region44: #{tpu_custom_call.1} parent=39 // pred_fallthru
        _
    $region40: #{tpu_custom_call.1} parent=5 // pred_fallthru
      _
    %p236 = scmp.le.s32.totalorder 1, %s13
    %p237 = scmp.lt.s32.totalorder %s13, 3
    %p238 = pnand %p236, %p237
    %p239 = pneg %p238
    // Predicated region
    $region45: #{tpu_custom_call.1} parent=5 // pred_check
      _
    $region46: #{tpu_custom_call.1} parent=5 // pred_check_branch
      %241 = sbr.rel (%p238) target = $region48
    $region47: #{tpu_custom_call.1} parent=5 // pred_region
      %s242 = ssub.s32 %s13, 1
      %p243 = scmp.lt.s32.totalorder %s18, 1
      %s244 = scalar_select %p243, %s18, 1
      %s245 = smul.addr %s244, 18
      %s246 = smul.addr %s245, 8
      %s247 = scalar_lea.vmem %s0, %s246
      %p248 = pneg %p39
      %p249 = pneg %p36
      %p250 = pneg %p60
      %p251 = pneg %p57
      %p252 = pneg %p81
      %p253 = pneg %p78
      %p254 = pneg %p102
      %p255 = pneg %p99
      %p256 = pneg %p123
      %p257 = pneg %p120
      %p258 = pneg %p144
      %p259 = pneg %p141
      %p260 = pneg %p165
      %p261 = pneg %p162
      %p262 = pneg %p191
      %p263 = pneg %p188
      %p264 = scmp.lt.s32.totalorder %s18, 1
      %s265 = scalar_select %p264, %s18, 1
      %s266 = smul.addr %s265, 18
      %s267 = smul.addr %s266, 8
      %s268 = scalar_lea.vmem %s7, %s267
      %p269 = scmp.lt.s32.totalorder %s18, 1
      %s270 = scalar_select %p269, %s18, 1
      %s271 = smul.addr %s270, 18
      %s272 = smul.addr %s271, 8
      %s273 = scalar_lea.vmem %s0, %s272
      %p274 = scmp.lt.s32.totalorder %s18, 1
      %s275 = scalar_select %p274, %s18, 1
      %s276 = smul.addr %s275, 18
      %s277 = smul.addr %s276, 8
      %s278 = scalar_lea.vmem %s7, %s277
      %v280 = vld [vmem:[%s273] sm:$0xff]
      %v281 = vld [vmem:[%s273 + $0x8] sm:$0xff]
      %v282 = vld [vmem:[%s273 + $0x10] sm:$0xff]
      %v283 = vld [vmem:[%s273 + $0x18] sm:$0xff]
      %v284 = vld [vmem:[%s273 + $0x20] sm:$0xff]
      %v285 = vld [vmem:[%s273 + $0x28] sm:$0xff]
      %v286 = vld [vmem:[%s273 + $0x30] sm:$0xff]
      %v287 = vld [vmem:[%s273 + $0x38] sm:$0xff]
      %v288 = vld [vmem:[%s273 + $0x40] sm:$0xff]
      %v289 = vld [vmem:[%s273 + $0x48] sm:$0xff]
      %v290 = vld [vmem:[%s273 + $0x50] sm:$0xff]
      %v291 = vld [vmem:[%s273 + $0x58] sm:$0xff]
      %v292 = vld [vmem:[%s273 + $0x60] sm:$0xff]
      %v293 = vld [vmem:[%s273 + $0x68] sm:$0xff]
      %v294 = vld [vmem:[%s273 + $0x70] sm:$0xff]
      %v295 = vld [vmem:[%s273 + $0x78] sm:$0xff]
      %v296 = vld [vmem:[%s273 + $0x80] sm:$0xff]
      %v297 = vld [vmem:[%s273 + $0x88] sm:$0xff]
      %v298 = vpack.c.bf16 %v281, %v280
      %v299 = vpack.c.bf16 %v283, %v282
      %v300 = vpack.c.bf16 %v285, %v284
      %v301 = vpack.c.bf16 %v287, %v286
      %v302 = vpack.c.bf16 %v289, %v288
      %v303 = vpack.c.bf16 %v291, %v290
      %v304 = vpack.c.bf16 %v293, %v292
      %v305 = vpack.c.bf16 %v295, %v294
      %v306 = vpack.c.bf16 %v297, %v296
      %v307 = vld [vmem:[%s1] sm:$0xf]
      %v308 = vld [vmem:[%s1 + $0x4] sm:$0xf]
      %v309 = vld [vmem:[%s1 + $0x8] sm:$0xf]
      %v310 = vld [vmem:[%s1 + $0xc] sm:$0xf]
      %v311 = vld [vmem:[%s2] sm:$0x1]
      %v313 = vlaneseq
      %v314 = vshrl.u32 %v313, 7
      %v315 = vsub.s32 0, %v314
      %v316 = vrot.slane %v311, %v315
      %v322 = vunpack.c.l.b16 %v307
      %v323 = vunpack.c.l.b16 %v308
      %v324 = vunpack.c.l.b16 %v309
      %v325 = vunpack.c.l.b16 %v310
      %v326 = vpack.c.b16 %v323, %v322
      %v327 = vpack.c.b16 %v325, %v324
      %vm330 = vcmask 261120
      %v332 = vsel %vm330, %v298, 0
      %v335 = vsel %vm330, %v299, 0
      %v338 = vsel %vm330, %v300, 0
      %v341 = vsel %vm330, %v301, 0
      %v344 = vsel %vm330, %v302, 0
      %v347 = vsel %vm330, %v303, 0
      %v350 = vsel %vm330, %v304, 0
      %v353 = vsel %vm330, %v305, 0
      %v356 = vsel %vm330, %v306, 0
      %358 = vmatprep.subr.bf16.mxu0 0
      %359 = vmatpush1.bf16.msra.mxu0 0
      %360 = vmatprep.subr.bf16.mxu0 0
      %361 = vmatpush1.bf16.msra.mxu0 0
      %362 = vmatprep.subr.bf16.mxu0 0
      %363 = vmatpush1.bf16.msra.mxu0 0
      %364 = vmatprep.subr.bf16.mxu0 0
      %365 = vmatpush1.bf16.msra.mxu0 0
      %366 = vmatprep.subr.bf16.mxu0 0
      %367 = vmatpush1.bf16.msra.mxu0 0
      %368 = vmatprep.subr.bf16.mxu0 0
      %369 = vmatpush1.bf16.msra.mxu0 0
      %370 = vmatprep.subr.bf16.mxu0 0
      %371 = vmatpush1.bf16.msra.mxu0 %v327
      %372 = vmatprep.subr.bf16.mxu0 0
      %373 = vmatpush1.bf16.msra.mxu0 %v326
      %374 = vmatprep.subr.bf16.mxu0 0
      %375 = vmatpush2.bf16.msra.mxu0 0
      %376 = vmatprep.subr.bf16.mxu0 0
      %377 = vmatpush2.bf16.msra.mxu0 0
      %378 = vmatprep.subr.bf16.mxu0 0
      %379 = vmatpush2.bf16.msra.mxu0 0
      %380 = vmatprep.subr.bf16.mxu0 0
      %381 = vmatpush2.bf16.msra.mxu0 0
      %382 = vmatprep.subr.bf16.mxu0 0
      %383 = vmatpush2.bf16.msra.mxu0 0
      %384 = vmatprep.subr.bf16.mxu0 0
      %385 = vmatpush2.bf16.msra.mxu0 0
      %386 = vmatprep.subr.bf16.mxu0 0
      %387 = vmatpush2.bf16.msra.mxu0 0
      %388 = vmatprep.subr.bf16.mxu0 0
      %389 = vmatpush2.bf16.msra.mxu0 0
      %390 = vmatprep.mubr.bf16.mxu0 0
      %391 = vmatmul.mubr.bf16.gmra.mxu0 %v332
      %v392 = vpop.f32.mrf.mxu0
      %v393 = vadd.f32 %v316, %v392
      %v394 = vpop.f32.mrf.mxu0
      %v395 = vpop.f32.mrf.mxu0
      %v396 = vadd.f32 %v316, %v395
      %v397 = vpop.f32.mrf.mxu0
      %398 = vmatprep.mubr.bf16.mxu0 0
      %399 = vmatmul.mubr.bf16.gmra.mxu0 %v335
      %v400 = vpop.f32.mrf.mxu0
      %v401 = vadd.f32 %v316, %v400
      %v402 = vpop.f32.mrf.mxu0
      %v403 = vpop.f32.mrf.mxu0
      %v404 = vadd.f32 %v316, %v403
      %v405 = vpop.f32.mrf.mxu0
      %406 = vmatprep.mubr.bf16.mxu0 0
      %407 = vmatmul.mubr.bf16.gmra.mxu0 %v338
      %v408 = vpop.f32.mrf.mxu0
      %v409 = vadd.f32 %v316, %v408
      %v410 = vpop.f32.mrf.mxu0
      %v411 = vpop.f32.mrf.mxu0
      %v412 = vadd.f32 %v316, %v411
      %v413 = vpop.f32.mrf.mxu0
      %414 = vmatprep.mubr.bf16.mxu0 0
      %415 = vmatmul.mubr.bf16.gmra.mxu0 %v341
      %v416 = vpop.f32.mrf.mxu0
      %v417 = vadd.f32 %v316, %v416
      %v418 = vpop.f32.mrf.mxu0
      %v419 = vpop.f32.mrf.mxu0
      %v420 = vadd.f32 %v316, %v419
      %v421 = vpop.f32.mrf.mxu0
      %422 = vmatprep.mubr.bf16.mxu0 0
      %423 = vmatmul.mubr.bf16.gmra.mxu0 %v344
      %v424 = vpop.f32.mrf.mxu0
      %v425 = vadd.f32 %v316, %v424
      %v426 = vpop.f32.mrf.mxu0
      %v427 = vpop.f32.mrf.mxu0
      %v428 = vadd.f32 %v316, %v427
      %v429 = vpop.f32.mrf.mxu0
      %430 = vmatprep.mubr.bf16.mxu0 0
      %431 = vmatmul.mubr.bf16.gmra.mxu0 %v347
      %v432 = vpop.f32.mrf.mxu0
      %v433 = vadd.f32 %v316, %v432
      %v434 = vpop.f32.mrf.mxu0
      %v435 = vpop.f32.mrf.mxu0
      %v436 = vadd.f32 %v316, %v435
      %v437 = vpop.f32.mrf.mxu0
      %438 = vmatprep.mubr.bf16.mxu0 0
      %439 = vmatmul.mubr.bf16.gmra.mxu0 %v350
      %v440 = vpop.f32.mrf.mxu0
      %v441 = vadd.f32 %v316, %v440
      %v442 = vpop.f32.mrf.mxu0
      %v443 = vpop.f32.mrf.mxu0
      %v444 = vadd.f32 %v316, %v443
      %v445 = vpop.f32.mrf.mxu0
      %446 = vmatprep.mubr.bf16.mxu0 0
      %447 = vmatmul.mubr.bf16.gmra.mxu0 %v353
      %v448 = vpop.f32.mrf.mxu0
      %v449 = vadd.f32 %v316, %v448
      %v450 = vpop.f32.mrf.mxu0
      %v451 = vpop.f32.mrf.mxu0
      %v452 = vadd.f32 %v316, %v451
      %v453 = vpop.f32.mrf.mxu0
      %454 = vmatprep.mubr.bf16.mxu0 0
      %455 = vmatmul.mubr.bf16.gmra.mxu0 %v356
      %v456 = vpop.f32.mrf.mxu0
      %v457 = vadd.f32 %v316, %v456
      %v458 = vpop.f32.mrf.mxu0
      %v459 = vpop.f32.mrf.mxu0
      %v460 = vadd.f32 %v316, %v459
      %v461 = vpop.f32.mrf.mxu0
      %462 = vdwg.mxu0
      %vm463 = vcmp.gt.f32.partialorder %v393, 0.0
      %vm464 = vcmp.gt.f32.partialorder %v396, 0.0
      %vm465 = vcmp.gt.f32.partialorder %v401, 0.0
      %vm466 = vcmp.gt.f32.partialorder %v404, 0.0
      %vm467 = vcmp.gt.f32.partialorder %v409, 0.0
      %vm468 = vcmp.gt.f32.partialorder %v412, 0.0
      %vm469 = vcmp.gt.f32.partialorder %v417, 0.0
      %vm470 = vcmp.gt.f32.partialorder %v420, 0.0
      %vm471 = vcmp.gt.f32.partialorder %v425, 0.0
      %vm472 = vcmp.gt.f32.partialorder %v428, 0.0
      %vm473 = vcmp.gt.f32.partialorder %v433, 0.0
      %vm474 = vcmp.gt.f32.partialorder %v436, 0.0
      %vm475 = vcmp.gt.f32.partialorder %v441, 0.0
      %vm476 = vcmp.gt.f32.partialorder %v444, 0.0
      %vm477 = vcmp.gt.f32.partialorder %v449, 0.0
      %vm478 = vcmp.gt.f32.partialorder %v452, 0.0
      %vm479 = vcmp.gt.f32.partialorder %v457, 0.0
      %vm480 = vcmp.gt.f32.partialorder %v460, 0.0
      %v481 = vmul.f32 %v393, 0.5
      %v482 = vmul.f32 %v396, 0.5
      %v483 = vmul.f32 %v401, 0.5
      %v484 = vmul.f32 %v404, 0.5
      %v485 = vmul.f32 %v409, 0.5
      %v486 = vmul.f32 %v412, 0.5
      %v487 = vmul.f32 %v417, 0.5
      %v488 = vmul.f32 %v420, 0.5
      %v489 = vmul.f32 %v425, 0.5
      %v490 = vmul.f32 %v428, 0.5
      %v491 = vmul.f32 %v433, 0.5
      %v492 = vmul.f32 %v436, 0.5
      %v493 = vmul.f32 %v441, 0.5
      %v494 = vmul.f32 %v444, 0.5
      %v495 = vmul.f32 %v449, 0.5
      %v496 = vmul.f32 %v452, 0.5
      %v497 = vmul.f32 %v457, 0.5
      %v498 = vmul.f32 %v460, 0.5
      %v499 = vtanh.pop %v481
      %v500 = vtanh.pop %v482
      %v501 = vtanh.pop %v483
      %v502 = vtanh.pop %v484
      %v503 = vtanh.pop %v485
      %v504 = vtanh.pop %v486
      %v505 = vtanh.pop %v487
      %v506 = vtanh.pop %v488
      %v507 = vtanh.pop %v489
      %v508 = vtanh.pop %v490
      %v509 = vtanh.pop %v491
      %v510 = vtanh.pop %v492
      %v511 = vtanh.pop %v493
      %v512 = vtanh.pop %v494
      %v513 = vtanh.pop %v495
      %v514 = vtanh.pop %v496
      %v515 = vtanh.pop %v497
      %v516 = vtanh.pop %v498
      %v517 = vmul.f32 %v393, 1.442695
      %v518 = vpow.pop %v517
      %v519 = vmul.f32 %v396, 1.442695
      %v520 = vpow.pop %v519
      %v521 = vmul.f32 %v401, 1.442695
      %v522 = vpow.pop %v521
      %v523 = vmul.f32 %v404, 1.442695
      %v524 = vpow.pop %v523
      %v525 = vmul.f32 %v409, 1.442695
      %v526 = vpow.pop %v525
      %v527 = vmul.f32 %v412, 1.442695
      %v528 = vpow.pop %v527
      %v529 = vmul.f32 %v417, 1.442695
      %v530 = vpow.pop %v529
      %v531 = vmul.f32 %v420, 1.442695
      %v532 = vpow.pop %v531
      %v533 = vmul.f32 %v425, 1.442695
      %v534 = vpow.pop %v533
      %v535 = vmul.f32 %v428, 1.442695
      %v536 = vpow.pop %v535
      %v537 = vmul.f32 %v433, 1.442695
      %v538 = vpow.pop %v537
      %v539 = vmul.f32 %v436, 1.442695
      %v540 = vpow.pop %v539
      %v541 = vmul.f32 %v441, 1.442695
      %v542 = vpow.pop %v541
      %v543 = vmul.f32 %v444, 1.442695
      %v544 = vpow.pop %v543
      %v545 = vmul.f32 %v449, 1.442695
      %v546 = vpow.pop %v545
      %v547 = vmul.f32 %v452, 1.442695
      %v548 = vpow.pop %v547
      %v549 = vmul.f32 %v457, 1.442695
      %v550 = vpow.pop %v549
      %v551 = vmul.f32 %v460, 1.442695
      %v552 = vpow.pop %v551
      %v553 = vadd.f32 %v518, 1.0
      %v554 = vadd.f32 %v520, 1.0
      %v555 = vadd.f32 %v522, 1.0
      %v556 = vadd.f32 %v524, 1.0
      %v557 = vadd.f32 %v526, 1.0
      %v558 = vadd.f32 %v528, 1.0
      %v559 = vadd.f32 %v530, 1.0
      %v560 = vadd.f32 %v532, 1.0
      %v561 = vadd.f32 %v534, 1.0
      %v562 = vadd.f32 %v536, 1.0
      %v563 = vadd.f32 %v538, 1.0
      %v564 = vadd.f32 %v540, 1.0
      %v565 = vadd.f32 %v542, 1.0
      %v566 = vadd.f32 %v544, 1.0
      %v567 = vadd.f32 %v546, 1.0
      %v568 = vadd.f32 %v548, 1.0
      %v569 = vadd.f32 %v550, 1.0
      %v570 = vadd.f32 %v552, 1.0
      %v571 = vmul.f32 %v499, %v553
      %v572 = vmul.f32 %v500, %v554
      %v573 = vmul.f32 %v501, %v555
      %v574 = vmul.f32 %v502, %v556
      %v575 = vmul.f32 %v503, %v557
      %v576 = vmul.f32 %v504, %v558
      %v577 = vmul.f32 %v505, %v559
      %v578 = vmul.f32 %v506, %v560
      %v579 = vmul.f32 %v507, %v561
      %v580 = vmul.f32 %v508, %v562
      %v581 = vmul.f32 %v509, %v563
      %v582 = vmul.f32 %v510, %v564
      %v583 = vmul.f32 %v511, %v565
      %v584 = vmul.f32 %v512, %v566
      %v585 = vmul.f32 %v513, %v567
      %v586 = vmul.f32 %v514, %v568
      %v587 = vmul.f32 %v515, %v569
      %v588 = vmul.f32 %v516, %v570
      %v589 = vsel %vm463, %v393, %v571
      %v590 = vsel %vm464, %v396, %v572
      %v591 = vsel %vm465, %v401, %v573
      %v592 = vsel %vm466, %v404, %v574
      %v593 = vsel %vm467, %v409, %v575
      %v594 = vsel %vm468, %v412, %v576
      %v595 = vsel %vm469, %v417, %v577
      %v596 = vsel %vm470, %v420, %v578
      %v597 = vsel %vm471, %v425, %v579
      %v598 = vsel %vm472, %v428, %v580
      %v599 = vsel %vm473, %v433, %v581
      %v600 = vsel %vm474, %v436, %v582
      %v601 = vsel %vm475, %v441, %v583
      %v602 = vsel %vm476, %v444, %v584
      %v603 = vsel %vm477, %v449, %v585
      %v604 = vsel %vm478, %v452, %v586
      %v605 = vsel %vm479, %v457, %v587
      %v606 = vsel %vm480, %v460, %v588
      %vm607 = vcmask 523264
      %608 = vst.msk [vmem:[#allocation2] sm:$0xff] %vm607, 0.0
      %609 = vst.msk [vmem:[#allocation2 + $0x8] sm:$0xff] %vm607, 0.0
      %610 = vst.msk [vmem:[#allocation2 + $0xa0] sm:$0xff] %vm607, 0.0
      %611 = vst.msk [vmem:[#allocation2 + $0xa8] sm:$0xff] %vm607, 0.0
      %612 = vst.msk [vmem:[#allocation2 + $0x10] sm:$0xff] %vm607, %v589
      %613 = vst.msk [vmem:[#allocation2 + $0x18] sm:$0xff] %vm607, %v590
      %614 = vst.msk [vmem:[#allocation2 + $0x20] sm:$0xff] %vm607, %v591
      %615 = vst.msk [vmem:[#allocation2 + $0x28] sm:$0xff] %vm607, %v592
      %616 = vst.msk [vmem:[#allocation2 + $0x30] sm:$0xff] %vm607, %v593
      %617 = vst.msk [vmem:[#allocation2 + $0x38] sm:$0xff] %vm607, %v594
      %618 = vst.msk [vmem:[#allocation2 + $0x40] sm:$0xff] %vm607, %v595
      %619 = vst.msk [vmem:[#allocation2 + $0x48] sm:$0xff] %vm607, %v596
      %620 = vst.msk [vmem:[#allocation2 + $0x50] sm:$0xff] %vm607, %v597
      %621 = vst.msk [vmem:[#allocation2 + $0x58] sm:$0xff] %vm607, %v598
      %622 = vst.msk [vmem:[#allocation2 + $0x60] sm:$0xff] %vm607, %v599
      %623 = vst.msk [vmem:[#allocation2 + $0x68] sm:$0xff] %vm607, %v600
      %624 = vst.msk [vmem:[#allocation2 + $0x70] sm:$0xff] %vm607, %v601
      %625 = vst.msk [vmem:[#allocation2 + $0x78] sm:$0xff] %vm607, %v602
      %626 = vst.msk [vmem:[#allocation2 + $0x80] sm:$0xff] %vm607, %v603
      %627 = vst.msk [vmem:[#allocation2 + $0x88] sm:$0xff] %vm607, %v604
      %628 = vst.msk [vmem:[#allocation2 + $0x90] sm:$0xff] %vm607, %v605
      %629 = vst.msk [vmem:[#allocation2 + $0x98] sm:$0xff] %vm607, %v606
      %s630 = scalar_lea.vmem %s3, 1872
      %v631 = vld [vmem:[%s630] sm:$0xff]
      %v632 = vld [vmem:[%s630 + $0x8] sm:$0xff]
      %v633 = vld [vmem:[%s630 + $0x10] sm:$0xff]
      %v634 = vld [vmem:[%s630 + $0x18] sm:$0xff]
      %v635 = vld [vmem:[%s630 + $0x20] sm:$0xff]
      %v636 = vld [vmem:[%s630 + $0x28] sm:$0xff]
      %v637 = vld [vmem:[%s630 + $0x30] sm:$0xff]
      %v638 = vld [vmem:[%s630 + $0x38] sm:$0xff]
      %v639 = vld [vmem:[%s630 + $0x40] sm:$0xff]
      %v640 = vld [vmem:[%s630 + $0x48] sm:$0xff]
      %v641 = vld [vmem:[%s630 + $0x50] sm:$0xff]
      %v642 = vld [vmem:[%s630 + $0x58] sm:$0xff]
      %v643 = vld [vmem:[%s630 + $0x60] sm:$0xff]
      %v644 = vld [vmem:[%s630 + $0x68] sm:$0xff]
      %v645 = vld [vmem:[%s630 + $0x70] sm:$0xff]
      %v646 = vld [vmem:[%s630 + $0x78] sm:$0xff]
      %v647 = vld [vmem:[%s630 + $0x80] sm:$0xff]
      %v648 = vld [vmem:[%s630 + $0x88] sm:$0xff]
      %v649 = vmul.f32 %v631, %v589
      %v650 = vmul.f32 %v632, %v590
      %v651 = vmul.f32 %v633, %v591
      %v652 = vmul.f32 %v634, %v592
      %v653 = vmul.f32 %v635, %v593
      %v654 = vmul.f32 %v636, %v594
      %v655 = vmul.f32 %v637, %v595
      %v656 = vmul.f32 %v638, %v596
      %v657 = vmul.f32 %v639, %v597
      %v658 = vmul.f32 %v640, %v598
      %v659 = vmul.f32 %v641, %v599
      %v660 = vmul.f32 %v642, %v600
      %v661 = vmul.f32 %v643, %v601
      %v662 = vmul.f32 %v644, %v602
      %v663 = vmul.f32 %v645, %v603
      %v664 = vmul.f32 %v646, %v604
      %v665 = vmul.f32 %v647, %v605
      %v666 = vmul.f32 %v648, %v606
      %v667 = vld [vmem:[%s3] sm:$0xff]
      %v668 = vld [vmem:[%s3 + $0x8] sm:$0xff]
      %v669 = vld [vmem:[%s3 + $0x10] sm:$0xff]
      %v670 = vld [vmem:[%s3 + $0x18] sm:$0xff]
      %v671 = vld [vmem:[%s3 + $0x20] sm:$0xff]
      %v672 = vld [vmem:[%s3 + $0x28] sm:$0xff]
      %v673 = vld [vmem:[%s3 + $0x30] sm:$0xff]
      %v674 = vld [vmem:[%s3 + $0x38] sm:$0xff]
      %v675 = vld [vmem:[%s3 + $0x40] sm:$0xff]
      %v676 = vld [vmem:[%s3 + $0x48] sm:$0xff]
      %v677 = vld [vmem:[%s3 + $0x50] sm:$0xff]
      %v678 = vld [vmem:[%s3 + $0x58] sm:$0xff]
      %v679 = vld [vmem:[%s3 + $0x60] sm:$0xff]
      %v680 = vld [vmem:[%s3 + $0x68] sm:$0xff]
      %v681 = vld [vmem:[%s3 + $0x70] sm:$0xff]
      %v682 = vld [vmem:[%s3 + $0x78] sm:$0xff]
      %v683 = vld [vmem:[%s3 + $0x80] sm:$0xff]
      %v684 = vld [vmem:[%s3 + $0x88] sm:$0xff]
      %v685 = vld [vmem:[#allocation2 + $0x3] sm:$0xff]
      %v686 = vld [vmem:[#allocation2 + $0xb] sm:$0xff]
      %v687 = vld [vmem:[#allocation2 + $0x13] sm:$0xff]
      %v688 = vld [vmem:[#allocation2 + $0x1b] sm:$0xff]
      %v689 = vld [vmem:[#allocation2 + $0x23] sm:$0xff]
      %v690 = vld [vmem:[#allocation2 + $0x2b] sm:$0xff]
      %v691 = vld [vmem:[#allocation2 + $0x33] sm:$0xff]
      %v692 = vld [vmem:[#allocation2 + $0x3b] sm:$0xff]
      %v693 = vld [vmem:[#allocation2 + $0x43] sm:$0xff]
      %v694 = vld [vmem:[#allocation2 + $0x4b] sm:$0xff]
      %v695 = vld [vmem:[#allocation2 + $0x53] sm:$0xff]
      %v696 = vld [vmem:[#allocation2 + $0x5b] sm:$0xff]
      %v697 = vld [vmem:[#allocation2 + $0x63] sm:$0xff]
      %v698 = vld [vmem:[#allocation2 + $0x6b] sm:$0xff]
      %v699 = vld [vmem:[#allocation2 + $0x73] sm:$0xff]
      %v700 = vld [vmem:[#allocation2 + $0x7b] sm:$0xff]
      %v701 = vld [vmem:[#allocation2 + $0x83] sm:$0xff]
      %v702 = vld [vmem:[#allocation2 + $0x8b] sm:$0xff]
      %v703 = vmul.f32 %v667, %v685
      %v704 = vmul.f32 %v668, %v686
      %v705 = vmul.f32 %v669, %v687
      %v706 = vmul.f32 %v670, %v688
      %v707 = vmul.f32 %v671, %v689
      %v708 = vmul.f32 %v672, %v690
      %v709 = vmul.f32 %v673, %v691
      %v710 = vmul.f32 %v674, %v692
      %v711 = vmul.f32 %v675, %v693
      %v712 = vmul.f32 %v676, %v694
      %v713 = vmul.f32 %v677, %v695
      %v714 = vmul.f32 %v678, %v696
      %v715 = vmul.f32 %v679, %v697
      %v716 = vmul.f32 %v680, %v698
      %v717 = vmul.f32 %v681, %v699
      %v718 = vmul.f32 %v682, %v700
      %v719 = vmul.f32 %v683, %v701
      %v720 = vmul.f32 %v684, %v702
      %v721 = vadd.f32 %v649, %v703
      %v722 = vadd.f32 %v650, %v704
      %v723 = vadd.f32 %v651, %v705
      %v724 = vadd.f32 %v652, %v706
      %v725 = vadd.f32 %v653, %v707
      %v726 = vadd.f32 %v654, %v708
      %v727 = vadd.f32 %v655, %v709
      %v728 = vadd.f32 %v656, %v710
      %v729 = vadd.f32 %v657, %v711
      %v730 = vadd.f32 %v658, %v712
      %v731 = vadd.f32 %v659, %v713
      %v732 = vadd.f32 %v660, %v714
      %v733 = vadd.f32 %v661, %v715
      %v734 = vadd.f32 %v662, %v716
      %v735 = vadd.f32 %v663, %v717
      %v736 = vadd.f32 %v664, %v718
      %v737 = vadd.f32 %v665, %v719
      %v738 = vadd.f32 %v666, %v720
      %s739 = scalar_lea.vmem %s3, 144
      %v740 = vld [vmem:[%s739] sm:$0xff]
      %v741 = vld [vmem:[%s739 + $0x8] sm:$0xff]
      %v742 = vld [vmem:[%s739 + $0x10] sm:$0xff]
      %v743 = vld [vmem:[%s739 + $0x18] sm:$0xff]
      %v744 = vld [vmem:[%s739 + $0x20] sm:$0xff]
      %v745 = vld [vmem:[%s739 + $0x28] sm:$0xff]
      %v746 = vld [vmem:[%s739 + $0x30] sm:$0xff]
      %v747 = vld [vmem:[%s739 + $0x38] sm:$0xff]
      %v748 = vld [vmem:[%s739 + $0x40] sm:$0xff]
      %v749 = vld [vmem:[%s739 + $0x48] sm:$0xff]
      %v750 = vld [vmem:[%s739 + $0x50] sm:$0xff]
      %v751 = vld [vmem:[%s739 + $0x58] sm:$0xff]
      %v752 = vld [vmem:[%s739 + $0x60] sm:$0xff]
      %v753 = vld [vmem:[%s739 + $0x68] sm:$0xff]
      %v754 = vld [vmem:[%s739 + $0x70] sm:$0xff]
      %v755 = vld [vmem:[%s739 + $0x78] sm:$0xff]
      %v756 = vld [vmem:[%s739 + $0x80] sm:$0xff]
      %v757 = vld [vmem:[%s739 + $0x88] sm:$0xff]
      %v758 = vld [vmem:[#allocation2 + $0x4] sm:$0xff]
      %v759 = vld [vmem:[#allocation2 + $0xc] sm:$0xff]
      %v760 = vld [vmem:[#allocation2 + $0x14] sm:$0xff]
      %v761 = vld [vmem:[#allocation2 + $0x1c] sm:$0xff]
      %v762 = vld [vmem:[#allocation2 + $0x24] sm:$0xff]
      %v763 = vld [vmem:[#allocation2 + $0x2c] sm:$0xff]
      %v764 = vld [vmem:[#allocation2 + $0x34] sm:$0xff]
      %v765 = vld [vmem:[#allocation2 + $0x3c] sm:$0xff]
      %v766 = vld [vmem:[#allocation2 + $0x44] sm:$0xff]
      %v767 = vld [vmem:[#allocation2 + $0x4c] sm:$0xff]
      %v768 = vld [vmem:[#allocation2 + $0x54] sm:$0xff]
      %v769 = vld [vmem:[#allocation2 + $0x5c] sm:$0xff]
      %v770 = vld [vmem:[#allocation2 + $0x64] sm:$0xff]
      %v771 = vld [vmem:[#allocation2 + $0x6c] sm:$0xff]
      %v772 = vld [vmem:[#allocation2 + $0x74] sm:$0xff]
      %v773 = vld [vmem:[#allocation2 + $0x7c] sm:$0xff]
      %v774 = vld [vmem:[#allocation2 + $0x84] sm:$0xff]
      %v775 = vld [vmem:[#allocation2 + $0x8c] sm:$0xff]
      %v776 = vmul.f32 %v740, %v758
      %v777 = vmul.f32 %v741, %v759
      %v778 = vmul.f32 %v742, %v760
      %v779 = vmul.f32 %v743, %v761
      %v780 = vmul.f32 %v744, %v762
      %v781 = vmul.f32 %v745, %v763
      %v782 = vmul.f32 %v746, %v764
      %v783 = vmul.f32 %v747, %v765
      %v784 = vmul.f32 %v748, %v766
      %v785 = vmul.f32 %v749, %v767
      %v786 = vmul.f32 %v750, %v768
      %v787 = vmul.f32 %v751, %v769
      %v788 = vmul.f32 %v752, %v770
      %v789 = vmul.f32 %v753, %v771
      %v790 = vmul.f32 %v754, %v772
      %v791 = vmul.f32 %v755, %v773
      %v792 = vmul.f32 %v756, %v774
      %v793 = vmul.f32 %v757, %v775
      %v794 = vadd.f32 %v721, %v776
      %v795 = vadd.f32 %v722, %v777
      %v796 = vadd.f32 %v723, %v778
      %v797 = vadd.f32 %v724, %v779
      %v798 = vadd.f32 %v725, %v780
      %v799 = vadd.f32 %v726, %v781
      %v800 = vadd.f32 %v727, %v782
      %v801 = vadd.f32 %v728, %v783
      %v802 = vadd.f32 %v729, %v784
      %v803 = vadd.f32 %v730, %v785
      %v804 = vadd.f32 %v731, %v786
      %v805 = vadd.f32 %v732, %v787
      %v806 = vadd.f32 %v733, %v788
      %v807 = vadd.f32 %v734, %v789
      %v808 = vadd.f32 %v735, %v790
      %v809 = vadd.f32 %v736, %v791
      %v810 = vadd.f32 %v737, %v792
      %v811 = vadd.f32 %v738, %v793
      %s812 = scalar_lea.vmem %s3, 288
      %v813 = vld [vmem:[%s812] sm:$0xff]
      %v814 = vld [vmem:[%s812 + $0x8] sm:$0xff]
      %v815 = vld [vmem:[%s812 + $0x10] sm:$0xff]
      %v816 = vld [vmem:[%s812 + $0x18] sm:$0xff]
      %v817 = vld [vmem:[%s812 + $0x20] sm:$0xff]
      %v818 = vld [vmem:[%s812 + $0x28] sm:$0xff]
      %v819 = vld [vmem:[%s812 + $0x30] sm:$0xff]
      %v820 = vld [vmem:[%s812 + $0x38] sm:$0xff]
      %v821 = vld [vmem:[%s812 + $0x40] sm:$0xff]
      %v822 = vld [vmem:[%s812 + $0x48] sm:$0xff]
      %v823 = vld [vmem:[%s812 + $0x50] sm:$0xff]
      %v824 = vld [vmem:[%s812 + $0x58] sm:$0xff]
      %v825 = vld [vmem:[%s812 + $0x60] sm:$0xff]
      %v826 = vld [vmem:[%s812 + $0x68] sm:$0xff]
      %v827 = vld [vmem:[%s812 + $0x70] sm:$0xff]
      %v828 = vld [vmem:[%s812 + $0x78] sm:$0xff]
      %v829 = vld [vmem:[%s812 + $0x80] sm:$0xff]
      %v830 = vld [vmem:[%s812 + $0x88] sm:$0xff]
      %v831 = vld [vmem:[#allocation2 + $0x5] sm:$0xff]
      %v832 = vld [vmem:[#allocation2 + $0xd] sm:$0xff]
      %v833 = vld [vmem:[#allocation2 + $0x15] sm:$0xff]
      %v834 = vld [vmem:[#allocation2 + $0x1d] sm:$0xff]
      %v835 = vld [vmem:[#allocation2 + $0x25] sm:$0xff]
      %v836 = vld [vmem:[#allocation2 + $0x2d] sm:$0xff]
      %v837 = vld [vmem:[#allocation2 + $0x35] sm:$0xff]
      %v838 = vld [vmem:[#allocation2 + $0x3d] sm:$0xff]
      %v839 = vld [vmem:[#allocation2 + $0x45] sm:$0xff]
      %v840 = vld [vmem:[#allocation2 + $0x4d] sm:$0xff]
      %v841 = vld [vmem:[#allocation2 + $0x55] sm:$0xff]
      %v842 = vld [vmem:[#allocation2 + $0x5d] sm:$0xff]
      %v843 = vld [vmem:[#allocation2 + $0x65] sm:$0xff]
      %v844 = vld [vmem:[#allocation2 + $0x6d] sm:$0xff]
      %v845 = vld [vmem:[#allocation2 + $0x75] sm:$0xff]
      %v846 = vld [vmem:[#allocation2 + $0x7d] sm:$0xff]
      %v847 = vld [vmem:[#allocation2 + $0x85] sm:$0xff]
      %v848 = vld [vmem:[#allocation2 + $0x8d] sm:$0xff]
      %v849 = vmul.f32 %v813, %v831
      %v850 = vmul.f32 %v814, %v832
      %v851 = vmul.f32 %v815, %v833
      %v852 = vmul.f32 %v816, %v834
      %v853 = vmul.f32 %v817, %v835
      %v854 = vmul.f32 %v818, %v836
      %v855 = vmul.f32 %v819, %v837
      %v856 = vmul.f32 %v820, %v838
      %v857 = vmul.f32 %v821, %v839
      %v858 = vmul.f32 %v822, %v840
      %v859 = vmul.f32 %v823, %v841
      %v860 = vmul.f32 %v824, %v842
      %v861 = vmul.f32 %v825, %v843
      %v862 = vmul.f32 %v826, %v844
      %v863 = vmul.f32 %v827, %v845
      %v864 = vmul.f32 %v828, %v846
      %v865 = vmul.f32 %v829, %v847
      %v866 = vmul.f32 %v830, %v848
      %v867 = vadd.f32 %v794, %v849
      %v868 = vadd.f32 %v795, %v850
      %v869 = vadd.f32 %v796, %v851
      %v870 = vadd.f32 %v797, %v852
      %v871 = vadd.f32 %v798, %v853
      %v872 = vadd.f32 %v799, %v854
      %v873 = vadd.f32 %v800, %v855
      %v874 = vadd.f32 %v801, %v856
      %v875 = vadd.f32 %v802, %v857
      %v876 = vadd.f32 %v803, %v858
      %v877 = vadd.f32 %v804, %v859
      %v878 = vadd.f32 %v805, %v860
      %v879 = vadd.f32 %v806, %v861
      %v880 = vadd.f32 %v807, %v862
      %v881 = vadd.f32 %v808, %v863
      %v882 = vadd.f32 %v809, %v864
      %v883 = vadd.f32 %v810, %v865
      %v884 = vadd.f32 %v811, %v866
      %s885 = scalar_lea.vmem %s3, 432
      %v886 = vld [vmem:[%s885] sm:$0xff]
      %v887 = vld [vmem:[%s885 + $0x8] sm:$0xff]
      %v888 = vld [vmem:[%s885 + $0x10] sm:$0xff]
      %v889 = vld [vmem:[%s885 + $0x18] sm:$0xff]
      %v890 = vld [vmem:[%s885 + $0x20] sm:$0xff]
      %v891 = vld [vmem:[%s885 + $0x28] sm:$0xff]
      %v892 = vld [vmem:[%s885 + $0x30] sm:$0xff]
      %v893 = vld [vmem:[%s885 + $0x38] sm:$0xff]
      %v894 = vld [vmem:[%s885 + $0x40] sm:$0xff]
      %v895 = vld [vmem:[%s885 + $0x48] sm:$0xff]
      %v896 = vld [vmem:[%s885 + $0x50] sm:$0xff]
      %v897 = vld [vmem:[%s885 + $0x58] sm:$0xff]
      %v898 = vld [vmem:[%s885 + $0x60] sm:$0xff]
      %v899 = vld [vmem:[%s885 + $0x68] sm:$0xff]
      %v900 = vld [vmem:[%s885 + $0x70] sm:$0xff]
      %v901 = vld [vmem:[%s885 + $0x78] sm:$0xff]
      %v902 = vld [vmem:[%s885 + $0x80] sm:$0xff]
      %v903 = vld [vmem:[%s885 + $0x88] sm:$0xff]
      %v904 = vld [vmem:[#allocation2 + $0x6] sm:$0xff]
      %v905 = vld [vmem:[#allocation2 + $0xe] sm:$0xff]
      %v906 = vld [vmem:[#allocation2 + $0x16] sm:$0xff]
      %v907 = vld [vmem:[#allocation2 + $0x1e] sm:$0xff]
      %v908 = vld [vmem:[#allocation2 + $0x26] sm:$0xff]
      %v909 = vld [vmem:[#allocation2 + $0x2e] sm:$0xff]
      %v910 = vld [vmem:[#allocation2 + $0x36] sm:$0xff]
      %v911 = vld [vmem:[#allocation2 + $0x3e] sm:$0xff]
      %v912 = vld [vmem:[#allocation2 + $0x46] sm:$0xff]
      %v913 = vld [vmem:[#allocation2 + $0x4e] sm:$0xff]
      %v914 = vld [vmem:[#allocation2 + $0x56] sm:$0xff]
      %v915 = vld [vmem:[#allocation2 + $0x5e] sm:$0xff]
      %v916 = vld [vmem:[#allocation2 + $0x66] sm:$0xff]
      %v917 = vld [vmem:[#allocation2 + $0x6e] sm:$0xff]
      %v918 = vld [vmem:[#allocation2 + $0x76] sm:$0xff]
      %v919 = vld [vmem:[#allocation2 + $0x7e] sm:$0xff]
      %v920 = vld [vmem:[#allocation2 + $0x86] sm:$0xff]
      %v921 = vld [vmem:[#allocation2 + $0x8e] sm:$0xff]
      %v922 = vmul.f32 %v886, %v904
      %v923 = vmul.f32 %v887, %v905
      %v924 = vmul.f32 %v888, %v906
      %v925 = vmul.f32 %v889, %v907
      %v926 = vmul.f32 %v890, %v908
      %v927 = vmul.f32 %v891, %v909
      %v928 = vmul.f32 %v892, %v910
      %v929 = vmul.f32 %v893, %v911
      %v930 = vmul.f32 %v894, %v912
      %v931 = vmul.f32 %v895, %v913
      %v932 = vmul.f32 %v896, %v914
      %v933 = vmul.f32 %v897, %v915
      %v934 = vmul.f32 %v898, %v916
      %v935 = vmul.f32 %v899, %v917
      %v936 = vmul.f32 %v900, %v918
      %v937 = vmul.f32 %v901, %v919
      %v938 = vmul.f32 %v902, %v920
      %v939 = vmul.f32 %v903, %v921
      %v940 = vadd.f32 %v867, %v922
      %v941 = vadd.f32 %v868, %v923
      %v942 = vadd.f32 %v869, %v924
      %v943 = vadd.f32 %v870, %v925
      %v944 = vadd.f32 %v871, %v926
      %v945 = vadd.f32 %v872, %v927
      %v946 = vadd.f32 %v873, %v928
      %v947 = vadd.f32 %v874, %v929
      %v948 = vadd.f32 %v875, %v930
      %v949 = vadd.f32 %v876, %v931
      %v950 = vadd.f32 %v877, %v932
      %v951 = vadd.f32 %v878, %v933
      %v952 = vadd.f32 %v879, %v934
      %v953 = vadd.f32 %v880, %v935
      %v954 = vadd.f32 %v881, %v936
      %v955 = vadd.f32 %v882, %v937
      %v956 = vadd.f32 %v883, %v938
      %v957 = vadd.f32 %v884, %v939
      %s958 = scalar_lea.vmem %s3, 576
      %v959 = vld [vmem:[%s958] sm:$0xff]
      %v960 = vld [vmem:[%s958 + $0x8] sm:$0xff]
      %v961 = vld [vmem:[%s958 + $0x10] sm:$0xff]
      %v962 = vld [vmem:[%s958 + $0x18] sm:$0xff]
      %v963 = vld [vmem:[%s958 + $0x20] sm:$0xff]
      %v964 = vld [vmem:[%s958 + $0x28] sm:$0xff]
      %v965 = vld [vmem:[%s958 + $0x30] sm:$0xff]
      %v966 = vld [vmem:[%s958 + $0x38] sm:$0xff]
      %v967 = vld [vmem:[%s958 + $0x40] sm:$0xff]
      %v968 = vld [vmem:[%s958 + $0x48] sm:$0xff]
      %v969 = vld [vmem:[%s958 + $0x50] sm:$0xff]
      %v970 = vld [vmem:[%s958 + $0x58] sm:$0xff]
      %v971 = vld [vmem:[%s958 + $0x60] sm:$0xff]
      %v972 = vld [vmem:[%s958 + $0x68] sm:$0xff]
      %v973 = vld [vmem:[%s958 + $0x70] sm:$0xff]
      %v974 = vld [vmem:[%s958 + $0x78] sm:$0xff]
      %v975 = vld [vmem:[%s958 + $0x80] sm:$0xff]
      %v976 = vld [vmem:[%s958 + $0x88] sm:$0xff]
      %v977 = vld [vmem:[#allocation2 + $0x7] sm:$0xff]
      %v978 = vld [vmem:[#allocation2 + $0xf] sm:$0xff]
      %v979 = vld [vmem:[#allocation2 + $0x17] sm:$0xff]
      %v980 = vld [vmem:[#allocation2 + $0x1f] sm:$0xff]
      %v981 = vld [vmem:[#allocation2 + $0x27] sm:$0xff]
      %v982 = vld [vmem:[#allocation2 + $0x2f] sm:$0xff]
      %v983 = vld [vmem:[#allocation2 + $0x37] sm:$0xff]
      %v984 = vld [vmem:[#allocation2 + $0x3f] sm:$0xff]
      %v985 = vld [vmem:[#allocation2 + $0x47] sm:$0xff]
      %v986 = vld [vmem:[#allocation2 + $0x4f] sm:$0xff]
      %v987 = vld [vmem:[#allocation2 + $0x57] sm:$0xff]
      %v988 = vld [vmem:[#allocation2 + $0x5f] sm:$0xff]
      %v989 = vld [vmem:[#allocation2 + $0x67] sm:$0xff]
      %v990 = vld [vmem:[#allocation2 + $0x6f] sm:$0xff]
      %v991 = vld [vmem:[#allocation2 + $0x77] sm:$0xff]
      %v992 = vld [vmem:[#allocation2 + $0x7f] sm:$0xff]
      %v993 = vld [vmem:[#allocation2 + $0x87] sm:$0xff]
      %v994 = vld [vmem:[#allocation2 + $0x8f] sm:$0xff]
      %v995 = vmul.f32 %v959, %v977
      %v996 = vmul.f32 %v960, %v978
      %v997 = vmul.f32 %v961, %v979
      %v998 = vmul.f32 %v962, %v980
      %v999 = vmul.f32 %v963, %v981
      %v1000 = vmul.f32 %v964, %v982
      %v1001 = vmul.f32 %v965, %v983
      %v1002 = vmul.f32 %v966, %v984
      %v1003 = vmul.f32 %v967, %v985
      %v1004 = vmul.f32 %v968, %v986
      %v1005 = vmul.f32 %v969, %v987
      %v1006 = vmul.f32 %v970, %v988
      %v1007 = vmul.f32 %v971, %v989
      %v1008 = vmul.f32 %v972, %v990
      %v1009 = vmul.f32 %v973, %v991
      %v1010 = vmul.f32 %v974, %v992
      %v1011 = vmul.f32 %v975, %v993
      %v1012 = vmul.f32 %v976, %v994
      %v1013 = vadd.f32 %v940, %v995
      %v1014 = vadd.f32 %v941, %v996
      %v1015 = vadd.f32 %v942, %v997
      %v1016 = vadd.f32 %v943, %v998
      %v1017 = vadd.f32 %v944, %v999
      %v1018 = vadd.f32 %v945, %v1000
      %v1019 = vadd.f32 %v946, %v1001
      %v1020 = vadd.f32 %v947, %v1002
      %v1021 = vadd.f32 %v948, %v1003
      %v1022 = vadd.f32 %v949, %v1004
      %v1023 = vadd.f32 %v950, %v1005
      %v1024 = vadd.f32 %v951, %v1006
      %v1025 = vadd.f32 %v952, %v1007
      %v1026 = vadd.f32 %v953, %v1008
      %v1027 = vadd.f32 %v954, %v1009
      %v1028 = vadd.f32 %v955, %v1010
      %v1029 = vadd.f32 %v956, %v1011
      %v1030 = vadd.f32 %v957, %v1012
      %s1031 = scalar_lea.vmem %s3, 720
      %v1032 = vld [vmem:[%s1031] sm:$0xff]
      %v1033 = vld [vmem:[%s1031 + $0x8] sm:$0xff]
      %v1034 = vld [vmem:[%s1031 + $0x10] sm:$0xff]
      %v1035 = vld [vmem:[%s1031 + $0x18] sm:$0xff]
      %v1036 = vld [vmem:[%s1031 + $0x20] sm:$0xff]
      %v1037 = vld [vmem:[%s1031 + $0x28] sm:$0xff]
      %v1038 = vld [vmem:[%s1031 + $0x30] sm:$0xff]
      %v1039 = vld [vmem:[%s1031 + $0x38] sm:$0xff]
      %v1040 = vld [vmem:[%s1031 + $0x40] sm:$0xff]
      %v1041 = vld [vmem:[%s1031 + $0x48] sm:$0xff]
      %v1042 = vld [vmem:[%s1031 + $0x50] sm:$0xff]
      %v1043 = vld [vmem:[%s1031 + $0x58] sm:$0xff]
      %v1044 = vld [vmem:[%s1031 + $0x60] sm:$0xff]
      %v1045 = vld [vmem:[%s1031 + $0x68] sm:$0xff]
      %v1046 = vld [vmem:[%s1031 + $0x70] sm:$0xff]
      %v1047 = vld [vmem:[%s1031 + $0x78] sm:$0xff]
      %v1048 = vld [vmem:[%s1031 + $0x80] sm:$0xff]
      %v1049 = vld [vmem:[%s1031 + $0x88] sm:$0xff]
      %v1050 = vld [vmem:[#allocation2 + $0x8] sm:$0xff]
      %v1051 = vld [vmem:[#allocation2 + $0x10] sm:$0xff]
      %v1052 = vld [vmem:[#allocation2 + $0x18] sm:$0xff]
      %v1053 = vld [vmem:[#allocation2 + $0x20] sm:$0xff]
      %v1054 = vld [vmem:[#allocation2 + $0x28] sm:$0xff]
      %v1055 = vld [vmem:[#allocation2 + $0x30] sm:$0xff]
      %v1056 = vld [vmem:[#allocation2 + $0x38] sm:$0xff]
      %v1057 = vld [vmem:[#allocation2 + $0x40] sm:$0xff]
      %v1058 = vld [vmem:[#allocation2 + $0x48] sm:$0xff]
      %v1059 = vld [vmem:[#allocation2 + $0x50] sm:$0xff]
      %v1060 = vld [vmem:[#allocation2 + $0x58] sm:$0xff]
      %v1061 = vld [vmem:[#allocation2 + $0x60] sm:$0xff]
      %v1062 = vld [vmem:[#allocation2 + $0x68] sm:$0xff]
      %v1063 = vld [vmem:[#allocation2 + $0x70] sm:$0xff]
      %v1064 = vld [vmem:[#allocation2 + $0x78] sm:$0xff]
      %v1065 = vld [vmem:[#allocation2 + $0x80] sm:$0xff]
      %v1066 = vld [vmem:[#allocation2 + $0x88] sm:$0xff]
      %v1067 = vld [vmem:[#allocation2 + $0x90] sm:$0xff]
      %v1068 = vmul.f32 %v1032, %v1050
      %v1069 = vmul.f32 %v1033, %v1051
      %v1070 = vmul.f32 %v1034, %v1052
      %v1071 = vmul.f32 %v1035, %v1053
      %v1072 = vmul.f32 %v1036, %v1054
      %v1073 = vmul.f32 %v1037, %v1055
      %v1074 = vmul.f32 %v1038, %v1056
      %v1075 = vmul.f32 %v1039, %v1057
      %v1076 = vmul.f32 %v1040, %v1058
      %v1077 = vmul.f32 %v1041, %v1059
      %v1078 = vmul.f32 %v1042, %v1060
      %v1079 = vmul.f32 %v1043, %v1061
      %v1080 = vmul.f32 %v1044, %v1062
      %v1081 = vmul.f32 %v1045, %v1063
      %v1082 = vmul.f32 %v1046, %v1064
      %v1083 = vmul.f32 %v1047, %v1065
      %v1084 = vmul.f32 %v1048, %v1066
      %v1085 = vmul.f32 %v1049, %v1067
      %v1086 = vadd.f32 %v1013, %v1068
      %v1087 = vadd.f32 %v1014, %v1069
      %v1088 = vadd.f32 %v1015, %v1070
      %v1089 = vadd.f32 %v1016, %v1071
      %v1090 = vadd.f32 %v1017, %v1072
      %v1091 = vadd.f32 %v1018, %v1073
      %v1092 = vadd.f32 %v1019, %v1074
      %v1093 = vadd.f32 %v1020, %v1075
      %v1094 = vadd.f32 %v1021, %v1076
      %v1095 = vadd.f32 %v1022, %v1077
      %v1096 = vadd.f32 %v1023, %v1078
      %v1097 = vadd.f32 %v1024, %v1079
      %v1098 = vadd.f32 %v1025, %v1080
      %v1099 = vadd.f32 %v1026, %v1081
      %v1100 = vadd.f32 %v1027, %v1082
      %v1101 = vadd.f32 %v1028, %v1083
      %v1102 = vadd.f32 %v1029, %v1084
      %v1103 = vadd.f32 %v1030, %v1085
      %s1104 = scalar_lea.vmem %s3, 864
      %v1105 = vld [vmem:[%s1104] sm:$0xff]
      %v1106 = vld [vmem:[%s1104 + $0x8] sm:$0xff]
      %v1107 = vld [vmem:[%s1104 + $0x10] sm:$0xff]
      %v1108 = vld [vmem:[%s1104 + $0x18] sm:$0xff]
      %v1109 = vld [vmem:[%s1104 + $0x20] sm:$0xff]
      %v1110 = vld [vmem:[%s1104 + $0x28] sm:$0xff]
      %v1111 = vld [vmem:[%s1104 + $0x30] sm:$0xff]
      %v1112 = vld [vmem:[%s1104 + $0x38] sm:$0xff]
      %v1113 = vld [vmem:[%s1104 + $0x40] sm:$0xff]
      %v1114 = vld [vmem:[%s1104 + $0x48] sm:$0xff]
      %v1115 = vld [vmem:[%s1104 + $0x50] sm:$0xff]
      %v1116 = vld [vmem:[%s1104 + $0x58] sm:$0xff]
      %v1117 = vld [vmem:[%s1104 + $0x60] sm:$0xff]
      %v1118 = vld [vmem:[%s1104 + $0x68] sm:$0xff]
      %v1119 = vld [vmem:[%s1104 + $0x70] sm:$0xff]
      %v1120 = vld [vmem:[%s1104 + $0x78] sm:$0xff]
      %v1121 = vld [vmem:[%s1104 + $0x80] sm:$0xff]
      %v1122 = vld [vmem:[%s1104 + $0x88] sm:$0xff]
      %v1123 = vld [vmem:[#allocation2 + $0x9] sm:$0xff]
      %v1124 = vld [vmem:[#allocation2 + $0x11] sm:$0xff]
      %v1125 = vld [vmem:[#allocation2 + $0x19] sm:$0xff]
      %v1126 = vld [vmem:[#allocation2 + $0x21] sm:$0xff]
      %v1127 = vld [vmem:[#allocation2 + $0x29] sm:$0xff]
      %v1128 = vld [vmem:[#allocation2 + $0x31] sm:$0xff]
      %v1129 = vld [vmem:[#allocation2 + $0x39] sm:$0xff]
      %v1130 = vld [vmem:[#allocation2 + $0x41] sm:$0xff]
      %v1131 = vld [vmem:[#allocation2 + $0x49] sm:$0xff]
      %v1132 = vld [vmem:[#allocation2 + $0x51] sm:$0xff]
      %v1133 = vld [vmem:[#allocation2 + $0x59] sm:$0xff]
      %v1134 = vld [vmem:[#allocation2 + $0x61] sm:$0xff]
      %v1135 = vld [vmem:[#allocation2 + $0x69] sm:$0xff]
      %v1136 = vld [vmem:[#allocation2 + $0x71] sm:$0xff]
      %v1137 = vld [vmem:[#allocation2 + $0x79] sm:$0xff]
      %v1138 = vld [vmem:[#allocation2 + $0x81] sm:$0xff]
      %v1139 = vld [vmem:[#allocation2 + $0x89] sm:$0xff]
      %v1140 = vld [vmem:[#allocation2 + $0x91] sm:$0xff]
      %v1141 = vmul.f32 %v1105, %v1123
      %v1142 = vmul.f32 %v1106, %v1124
      %v1143 = vmul.f32 %v1107, %v1125
      %v1144 = vmul.f32 %v1108, %v1126
      %v1145 = vmul.f32 %v1109, %v1127
      %v1146 = vmul.f32 %v1110, %v1128
      %v1147 = vmul.f32 %v1111, %v1129
      %v1148 = vmul.f32 %v1112, %v1130
      %v1149 = vmul.f32 %v1113, %v1131
      %v1150 = vmul.f32 %v1114, %v1132
      %v1151 = vmul.f32 %v1115, %v1133
      %v1152 = vmul.f32 %v1116, %v1134
      %v1153 = vmul.f32 %v1117, %v1135
      %v1154 = vmul.f32 %v1118, %v1136
      %v1155 = vmul.f32 %v1119, %v1137
      %v1156 = vmul.f32 %v1120, %v1138
      %v1157 = vmul.f32 %v1121, %v1139
      %v1158 = vmul.f32 %v1122, %v1140
      %v1159 = vadd.f32 %v1086, %v1141
      %v1160 = vadd.f32 %v1087, %v1142
      %v1161 = vadd.f32 %v1088, %v1143
      %v1162 = vadd.f32 %v1089, %v1144
      %v1163 = vadd.f32 %v1090, %v1145
      %v1164 = vadd.f32 %v1091, %v1146
      %v1165 = vadd.f32 %v1092, %v1147
      %v1166 = vadd.f32 %v1093, %v1148
      %v1167 = vadd.f32 %v1094, %v1149
      %v1168 = vadd.f32 %v1095, %v1150
      %v1169 = vadd.f32 %v1096, %v1151
      %v1170 = vadd.f32 %v1097, %v1152
      %v1171 = vadd.f32 %v1098, %v1153
      %v1172 = vadd.f32 %v1099, %v1154
      %v1173 = vadd.f32 %v1100, %v1155
      %v1174 = vadd.f32 %v1101, %v1156
      %v1175 = vadd.f32 %v1102, %v1157
      %v1176 = vadd.f32 %v1103, %v1158
      %s1177 = scalar_lea.vmem %s3, 1008
      %v1178 = vld [vmem:[%s1177] sm:$0xff]
      %v1179 = vld [vmem:[%s1177 + $0x8] sm:$0xff]
      %v1180 = vld [vmem:[%s1177 + $0x10] sm:$0xff]
      %v1181 = vld [vmem:[%s1177 + $0x18] sm:$0xff]
      %v1182 = vld [vmem:[%s1177 + $0x20] sm:$0xff]
      %v1183 = vld [vmem:[%s1177 + $0x28] sm:$0xff]
      %v1184 = vld [vmem:[%s1177 + $0x30] sm:$0xff]
      %v1185 = vld [vmem:[%s1177 + $0x38] sm:$0xff]
      %v1186 = vld [vmem:[%s1177 + $0x40] sm:$0xff]
      %v1187 = vld [vmem:[%s1177 + $0x48] sm:$0xff]
      %v1188 = vld [vmem:[%s1177 + $0x50] sm:$0xff]
      %v1189 = vld [vmem:[%s1177 + $0x58] sm:$0xff]
      %v1190 = vld [vmem:[%s1177 + $0x60] sm:$0xff]
      %v1191 = vld [vmem:[%s1177 + $0x68] sm:$0xff]
      %v1192 = vld [vmem:[%s1177 + $0x70] sm:$0xff]
      %v1193 = vld [vmem:[%s1177 + $0x78] sm:$0xff]
      %v1194 = vld [vmem:[%s1177 + $0x80] sm:$0xff]
      %v1195 = vld [vmem:[%s1177 + $0x88] sm:$0xff]
      %v1196 = vld [vmem:[#allocation2 + $0xa] sm:$0xff]
      %v1197 = vld [vmem:[#allocation2 + $0x12] sm:$0xff]
      %v1198 = vld [vmem:[#allocation2 + $0x1a] sm:$0xff]
      %v1199 = vld [vmem:[#allocation2 + $0x22] sm:$0xff]
      %v1200 = vld [vmem:[#allocation2 + $0x2a] sm:$0xff]
      %v1201 = vld [vmem:[#allocation2 + $0x32] sm:$0xff]
      %v1202 = vld [vmem:[#allocation2 + $0x3a] sm:$0xff]
      %v1203 = vld [vmem:[#allocation2 + $0x42] sm:$0xff]
      %v1204 = vld [vmem:[#allocation2 + $0x4a] sm:$0xff]
      %v1205 = vld [vmem:[#allocation2 + $0x52] sm:$0xff]
      %v1206 = vld [vmem:[#allocation2 + $0x5a] sm:$0xff]
      %v1207 = vld [vmem:[#allocation2 + $0x62] sm:$0xff]
      %v1208 = vld [vmem:[#allocation2 + $0x6a] sm:$0xff]
      %v1209 = vld [vmem:[#allocation2 + $0x72] sm:$0xff]
      %v1210 = vld [vmem:[#allocation2 + $0x7a] sm:$0xff]
      %v1211 = vld [vmem:[#allocation2 + $0x82] sm:$0xff]
      %v1212 = vld [vmem:[#allocation2 + $0x8a] sm:$0xff]
      %v1213 = vld [vmem:[#allocation2 + $0x92] sm:$0xff]
      %v1214 = vmul.f32 %v1178, %v1196
      %v1215 = vmul.f32 %v1179, %v1197
      %v1216 = vmul.f32 %v1180, %v1198
      %v1217 = vmul.f32 %v1181, %v1199
      %v1218 = vmul.f32 %v1182, %v1200
      %v1219 = vmul.f32 %v1183, %v1201
      %v1220 = vmul.f32 %v1184, %v1202
      %v1221 = vmul.f32 %v1185, %v1203
      %v1222 = vmul.f32 %v1186, %v1204
      %v1223 = vmul.f32 %v1187, %v1205
      %v1224 = vmul.f32 %v1188, %v1206
      %v1225 = vmul.f32 %v1189, %v1207
      %v1226 = vmul.f32 %v1190, %v1208
      %v1227 = vmul.f32 %v1191, %v1209
      %v1228 = vmul.f32 %v1192, %v1210
      %v1229 = vmul.f32 %v1193, %v1211
      %v1230 = vmul.f32 %v1194, %v1212
      %v1231 = vmul.f32 %v1195, %v1213
      %v1232 = vadd.f32 %v1159, %v1214
      %v1233 = vadd.f32 %v1160, %v1215
      %v1234 = vadd.f32 %v1161, %v1216
      %v1235 = vadd.f32 %v1162, %v1217
      %v1236 = vadd.f32 %v1163, %v1218
      %v1237 = vadd.f32 %v1164, %v1219
      %v1238 = vadd.f32 %v1165, %v1220
      %v1239 = vadd.f32 %v1166, %v1221
      %v1240 = vadd.f32 %v1167, %v1222
      %v1241 = vadd.f32 %v1168, %v1223
      %v1242 = vadd.f32 %v1169, %v1224
      %v1243 = vadd.f32 %v1170, %v1225
      %v1244 = vadd.f32 %v1171, %v1226
      %v1245 = vadd.f32 %v1172, %v1227
      %v1246 = vadd.f32 %v1173, %v1228
      %v1247 = vadd.f32 %v1174, %v1229
      %v1248 = vadd.f32 %v1175, %v1230
      %v1249 = vadd.f32 %v1176, %v1231
      %s1250 = scalar_lea.vmem %s3, 1152
      %v1251 = vld [vmem:[%s1250] sm:$0xff]
      %v1252 = vld [vmem:[%s1250 + $0x8] sm:$0xff]
      %v1253 = vld [vmem:[%s1250 + $0x10] sm:$0xff]
      %v1254 = vld [vmem:[%s1250 + $0x18] sm:$0xff]
      %v1255 = vld [vmem:[%s1250 + $0x20] sm:$0xff]
      %v1256 = vld [vmem:[%s1250 + $0x28] sm:$0xff]
      %v1257 = vld [vmem:[%s1250 + $0x30] sm:$0xff]
      %v1258 = vld [vmem:[%s1250 + $0x38] sm:$0xff]
      %v1259 = vld [vmem:[%s1250 + $0x40] sm:$0xff]
      %v1260 = vld [vmem:[%s1250 + $0x48] sm:$0xff]
      %v1261 = vld [vmem:[%s1250 + $0x50] sm:$0xff]
      %v1262 = vld [vmem:[%s1250 + $0x58] sm:$0xff]
      %v1263 = vld [vmem:[%s1250 + $0x60] sm:$0xff]
      %v1264 = vld [vmem:[%s1250 + $0x68] sm:$0xff]
      %v1265 = vld [vmem:[%s1250 + $0x70] sm:$0xff]
      %v1266 = vld [vmem:[%s1250 + $0x78] sm:$0xff]
      %v1267 = vld [vmem:[%s1250 + $0x80] sm:$0xff]
      %v1268 = vld [vmem:[%s1250 + $0x88] sm:$0xff]
      %v1269 = vld [vmem:[#allocation2 + $0x93] sm:$0xff]
      %v1270 = vmul.f32 %v1251, %v686
      %v1271 = vmul.f32 %v1252, %v687
      %v1272 = vmul.f32 %v1253, %v688
      %v1273 = vmul.f32 %v1254, %v689
      %v1274 = vmul.f32 %v1255, %v690
      %v1275 = vmul.f32 %v1256, %v691
      %v1276 = vmul.f32 %v1257, %v692
      %v1277 = vmul.f32 %v1258, %v693
      %v1278 = vmul.f32 %v1259, %v694
      %v1279 = vmul.f32 %v1260, %v695
      %v1280 = vmul.f32 %v1261, %v696
      %v1281 = vmul.f32 %v1262, %v697
      %v1282 = vmul.f32 %v1263, %v698
      %v1283 = vmul.f32 %v1264, %v699
      %v1284 = vmul.f32 %v1265, %v700
      %v1285 = vmul.f32 %v1266, %v701
      %v1286 = vmul.f32 %v1267, %v702
      %v1287 = vmul.f32 %v1268, %v1269
      %v1288 = vadd.f32 %v1232, %v1270
      %v1289 = vadd.f32 %v1233, %v1271
      %v1290 = vadd.f32 %v1234, %v1272
      %v1291 = vadd.f32 %v1235, %v1273
      %v1292 = vadd.f32 %v1236, %v1274
      %v1293 = vadd.f32 %v1237, %v1275
      %v1294 = vadd.f32 %v1238, %v1276
      %v1295 = vadd.f32 %v1239, %v1277
      %v1296 = vadd.f32 %v1240, %v1278
      %v1297 = vadd.f32 %v1241, %v1279
      %v1298 = vadd.f32 %v1242, %v1280
      %v1299 = vadd.f32 %v1243, %v1281
      %v1300 = vadd.f32 %v1244, %v1282
      %v1301 = vadd.f32 %v1245, %v1283
      %v1302 = vadd.f32 %v1246, %v1284
      %v1303 = vadd.f32 %v1247, %v1285
      %v1304 = vadd.f32 %v1248, %v1286
      %v1305 = vadd.f32 %v1249, %v1287
      %s1306 = scalar_lea.vmem %s3, 1296
      %v1307 = vld [vmem:[%s1306] sm:$0xff]
      %v1308 = vld [vmem:[%s1306 + $0x8] sm:$0xff]
      %v1309 = vld [vmem:[%s1306 + $0x10] sm:$0xff]
      %v1310 = vld [vmem:[%s1306 + $0x18] sm:$0xff]
      %v1311 = vld [vmem:[%s1306 + $0x20] sm:$0xff]
      %v1312 = vld [vmem:[%s1306 + $0x28] sm:$0xff]
      %v1313 = vld [vmem:[%s1306 + $0x30] sm:$0xff]
      %v1314 = vld [vmem:[%s1306 + $0x38] sm:$0xff]
      %v1315 = vld [vmem:[%s1306 + $0x40] sm:$0xff]
      %v1316 = vld [vmem:[%s1306 + $0x48] sm:$0xff]
      %v1317 = vld [vmem:[%s1306 + $0x50] sm:$0xff]
      %v1318 = vld [vmem:[%s1306 + $0x58] sm:$0xff]
      %v1319 = vld [vmem:[%s1306 + $0x60] sm:$0xff]
      %v1320 = vld [vmem:[%s1306 + $0x68] sm:$0xff]
      %v1321 = vld [vmem:[%s1306 + $0x70] sm:$0xff]
      %v1322 = vld [vmem:[%s1306 + $0x78] sm:$0xff]
      %v1323 = vld [vmem:[%s1306 + $0x80] sm:$0xff]
      %v1324 = vld [vmem:[%s1306 + $0x88] sm:$0xff]
      %v1325 = vld [vmem:[#allocation2 + $0x94] sm:$0xff]
      %v1326 = vmul.f32 %v1307, %v759
      %v1327 = vmul.f32 %v1308, %v760
      %v1328 = vmul.f32 %v1309, %v761
      %v1329 = vmul.f32 %v1310, %v762
      %v1330 = vmul.f32 %v1311, %v763
      %v1331 = vmul.f32 %v1312, %v764
      %v1332 = vmul.f32 %v1313, %v765
      %v1333 = vmul.f32 %v1314, %v766
      %v1334 = vmul.f32 %v1315, %v767
      %v1335 = vmul.f32 %v1316, %v768
      %v1336 = vmul.f32 %v1317, %v769
      %v1337 = vmul.f32 %v1318, %v770
      %v1338 = vmul.f32 %v1319, %v771
      %v1339 = vmul.f32 %v1320, %v772
      %v1340 = vmul.f32 %v1321, %v773
      %v1341 = vmul.f32 %v1322, %v774
      %v1342 = vmul.f32 %v1323, %v775
      %v1343 = vmul.f32 %v1324, %v1325
      %v1344 = vadd.f32 %v1288, %v1326
      %v1345 = vadd.f32 %v1289, %v1327
      %v1346 = vadd.f32 %v1290, %v1328
      %v1347 = vadd.f32 %v1291, %v1329
      %v1348 = vadd.f32 %v1292, %v1330
      %v1349 = vadd.f32 %v1293, %v1331
      %v1350 = vadd.f32 %v1294, %v1332
      %v1351 = vadd.f32 %v1295, %v1333
      %v1352 = vadd.f32 %v1296, %v1334
      %v1353 = vadd.f32 %v1297, %v1335
      %v1354 = vadd.f32 %v1298, %v1336
      %v1355 = vadd.f32 %v1299, %v1337
      %v1356 = vadd.f32 %v1300, %v1338
      %v1357 = vadd.f32 %v1301, %v1339
      %v1358 = vadd.f32 %v1302, %v1340
      %v1359 = vadd.f32 %v1303, %v1341
      %v1360 = vadd.f32 %v1304, %v1342
      %v1361 = vadd.f32 %v1305, %v1343
      %s1362 = scalar_lea.vmem %s3, 1440
      %v1363 = vld [vmem:[%s1362] sm:$0xff]
      %v1364 = vld [vmem:[%s1362 + $0x8] sm:$0xff]
      %v1365 = vld [vmem:[%s1362 + $0x10] sm:$0xff]
      %v1366 = vld [vmem:[%s1362 + $0x18] sm:$0xff]
      %v1367 = vld [vmem:[%s1362 + $0x20] sm:$0xff]
      %v1368 = vld [vmem:[%s1362 + $0x28] sm:$0xff]
      %v1369 = vld [vmem:[%s1362 + $0x30] sm:$0xff]
      %v1370 = vld [vmem:[%s1362 + $0x38] sm:$0xff]
      %v1371 = vld [vmem:[%s1362 + $0x40] sm:$0xff]
      %v1372 = vld [vmem:[%s1362 + $0x48] sm:$0xff]
      %v1373 = vld [vmem:[%s1362 + $0x50] sm:$0xff]
      %v1374 = vld [vmem:[%s1362 + $0x58] sm:$0xff]
      %v1375 = vld [vmem:[%s1362 + $0x60] sm:$0xff]
      %v1376 = vld [vmem:[%s1362 + $0x68] sm:$0xff]
      %v1377 = vld [vmem:[%s1362 + $0x70] sm:$0xff]
      %v1378 = vld [vmem:[%s1362 + $0x78] sm:$0xff]
      %v1379 = vld [vmem:[%s1362 + $0x80] sm:$0xff]
      %v1380 = vld [vmem:[%s1362 + $0x88] sm:$0xff]
      %v1381 = vld [vmem:[#allocation2 + $0x95] sm:$0xff]
      %v1382 = vmul.f32 %v1363, %v832
      %v1383 = vmul.f32 %v1364, %v833
      %v1384 = vmul.f32 %v1365, %v834
      %v1385 = vmul.f32 %v1366, %v835
      %v1386 = vmul.f32 %v1367, %v836
      %v1387 = vmul.f32 %v1368, %v837
      %v1388 = vmul.f32 %v1369, %v838
      %v1389 = vmul.f32 %v1370, %v839
      %v1390 = vmul.f32 %v1371, %v840
      %v1391 = vmul.f32 %v1372, %v841
      %v1392 = vmul.f32 %v1373, %v842
      %v1393 = vmul.f32 %v1374, %v843
      %v1394 = vmul.f32 %v1375, %v844
      %v1395 = vmul.f32 %v1376, %v845
      %v1396 = vmul.f32 %v1377, %v846
      %v1397 = vmul.f32 %v1378, %v847
      %v1398 = vmul.f32 %v1379, %v848
      %v1399 = vmul.f32 %v1380, %v1381
      %v1400 = vadd.f32 %v1344, %v1382
      %v1401 = vadd.f32 %v1345, %v1383
      %v1402 = vadd.f32 %v1346, %v1384
      %v1403 = vadd.f32 %v1347, %v1385
      %v1404 = vadd.f32 %v1348, %v1386
      %v1405 = vadd.f32 %v1349, %v1387
      %v1406 = vadd.f32 %v1350, %v1388
      %v1407 = vadd.f32 %v1351, %v1389
      %v1408 = vadd.f32 %v1352, %v1390
      %v1409 = vadd.f32 %v1353, %v1391
      %v1410 = vadd.f32 %v1354, %v1392
      %v1411 = vadd.f32 %v1355, %v1393
      %v1412 = vadd.f32 %v1356, %v1394
      %v1413 = vadd.f32 %v1357, %v1395
      %v1414 = vadd.f32 %v1358, %v1396
      %v1415 = vadd.f32 %v1359, %v1397
      %v1416 = vadd.f32 %v1360, %v1398
      %v1417 = vadd.f32 %v1361, %v1399
      %s1418 = scalar_lea.vmem %s3, 1584
      %v1419 = vld [vmem:[%s1418] sm:$0xff]
      %v1420 = vld [vmem:[%s1418 + $0x8] sm:$0xff]
      %v1421 = vld [vmem:[%s1418 + $0x10] sm:$0xff]
      %v1422 = vld [vmem:[%s1418 + $0x18] sm:$0xff]
      %v1423 = vld [vmem:[%s1418 + $0x20] sm:$0xff]
      %v1424 = vld [vmem:[%s1418 + $0x28] sm:$0xff]
      %v1425 = vld [vmem:[%s1418 + $0x30] sm:$0xff]
      %v1426 = vld [vmem:[%s1418 + $0x38] sm:$0xff]
      %v1427 = vld [vmem:[%s1418 + $0x40] sm:$0xff]
      %v1428 = vld [vmem:[%s1418 + $0x48] sm:$0xff]
      %v1429 = vld [vmem:[%s1418 + $0x50] sm:$0xff]
      %v1430 = vld [vmem:[%s1418 + $0x58] sm:$0xff]
      %v1431 = vld [vmem:[%s1418 + $0x60] sm:$0xff]
      %v1432 = vld [vmem:[%s1418 + $0x68] sm:$0xff]
      %v1433 = vld [vmem:[%s1418 + $0x70] sm:$0xff]
      %v1434 = vld [vmem:[%s1418 + $0x78] sm:$0xff]
      %v1435 = vld [vmem:[%s1418 + $0x80] sm:$0xff]
      %v1436 = vld [vmem:[%s1418 + $0x88] sm:$0xff]
      %v1437 = vld [vmem:[#allocation2 + $0x96] sm:$0xff]
      %v1438 = vmul.f32 %v1419, %v905
      %v1439 = vmul.f32 %v1420, %v906
      %v1440 = vmul.f32 %v1421, %v907
      %v1441 = vmul.f32 %v1422, %v908
      %v1442 = vmul.f32 %v1423, %v909
      %v1443 = vmul.f32 %v1424, %v910
      %v1444 = vmul.f32 %v1425, %v911
      %v1445 = vmul.f32 %v1426, %v912
      %v1446 = vmul.f32 %v1427, %v913
      %v1447 = vmul.f32 %v1428, %v914
      %v1448 = vmul.f32 %v1429, %v915
      %v1449 = vmul.f32 %v1430, %v916
      %v1450 = vmul.f32 %v1431, %v917
      %v1451 = vmul.f32 %v1432, %v918
      %v1452 = vmul.f32 %v1433, %v919
      %v1453 = vmul.f32 %v1434, %v920
      %v1454 = vmul.f32 %v1435, %v921
      %v1455 = vmul.f32 %v1436, %v1437
      %v1456 = vadd.f32 %v1400, %v1438
      %v1457 = vadd.f32 %v1401, %v1439
      %v1458 = vadd.f32 %v1402, %v1440
      %v1459 = vadd.f32 %v1403, %v1441
      %v1460 = vadd.f32 %v1404, %v1442
      %v1461 = vadd.f32 %v1405, %v1443
      %v1462 = vadd.f32 %v1406, %v1444
      %v1463 = vadd.f32 %v1407, %v1445
      %v1464 = vadd.f32 %v1408, %v1446
      %v1465 = vadd.f32 %v1409, %v1447
      %v1466 = vadd.f32 %v1410, %v1448
      %v1467 = vadd.f32 %v1411, %v1449
      %v1468 = vadd.f32 %v1412, %v1450
      %v1469 = vadd.f32 %v1413, %v1451
      %v1470 = vadd.f32 %v1414, %v1452
      %v1471 = vadd.f32 %v1415, %v1453
      %v1472 = vadd.f32 %v1416, %v1454
      %v1473 = vadd.f32 %v1417, %v1455
      %s1474 = scalar_lea.vmem %s3, 1728
      %v1475 = vld [vmem:[%s1474] sm:$0xff]
      %v1476 = vld [vmem:[%s1474 + $0x8] sm:$0xff]
      %v1477 = vld [vmem:[%s1474 + $0x10] sm:$0xff]
      %v1478 = vld [vmem:[%s1474 + $0x18] sm:$0xff]
      %v1479 = vld [vmem:[%s1474 + $0x20] sm:$0xff]
      %v1480 = vld [vmem:[%s1474 + $0x28] sm:$0xff]
      %v1481 = vld [vmem:[%s1474 + $0x30] sm:$0xff]
      %v1482 = vld [vmem:[%s1474 + $0x38] sm:$0xff]
      %v1483 = vld [vmem:[%s1474 + $0x40] sm:$0xff]
      %v1484 = vld [vmem:[%s1474 + $0x48] sm:$0xff]
      %v1485 = vld [vmem:[%s1474 + $0x50] sm:$0xff]
      %v1486 = vld [vmem:[%s1474 + $0x58] sm:$0xff]
      %v1487 = vld [vmem:[%s1474 + $0x60] sm:$0xff]
      %v1488 = vld [vmem:[%s1474 + $0x68] sm:$0xff]
      %v1489 = vld [vmem:[%s1474 + $0x70] sm:$0xff]
      %v1490 = vld [vmem:[%s1474 + $0x78] sm:$0xff]
      %v1491 = vld [vmem:[%s1474 + $0x80] sm:$0xff]
      %v1492 = vld [vmem:[%s1474 + $0x88] sm:$0xff]
      %v1493 = vld [vmem:[#allocation2 + $0x97] sm:$0xff]
      %v1494 = vmul.f32 %v1475, %v978
      %v1495 = vmul.f32 %v1476, %v979
      %v1496 = vmul.f32 %v1477, %v980
      %v1497 = vmul.f32 %v1478, %v981
      %v1498 = vmul.f32 %v1479, %v982
      %v1499 = vmul.f32 %v1480, %v983
      %v1500 = vmul.f32 %v1481, %v984
      %v1501 = vmul.f32 %v1482, %v985
      %v1502 = vmul.f32 %v1483, %v986
      %v1503 = vmul.f32 %v1484, %v987
      %v1504 = vmul.f32 %v1485, %v988
      %v1505 = vmul.f32 %v1486, %v989
      %v1506 = vmul.f32 %v1487, %v990
      %v1507 = vmul.f32 %v1488, %v991
      %v1508 = vmul.f32 %v1489, %v992
      %v1509 = vmul.f32 %v1490, %v993
      %v1510 = vmul.f32 %v1491, %v994
      %v1511 = vmul.f32 %v1492, %v1493
      %v1512 = vadd.f32 %v1456, %v1494
      %v1513 = vadd.f32 %v1457, %v1495
      %v1514 = vadd.f32 %v1458, %v1496
      %v1515 = vadd.f32 %v1459, %v1497
      %v1516 = vadd.f32 %v1460, %v1498
      %v1517 = vadd.f32 %v1461, %v1499
      %v1518 = vadd.f32 %v1462, %v1500
      %v1519 = vadd.f32 %v1463, %v1501
      %v1520 = vadd.f32 %v1464, %v1502
      %v1521 = vadd.f32 %v1465, %v1503
      %v1522 = vadd.f32 %v1466, %v1504
      %v1523 = vadd.f32 %v1467, %v1505
      %v1524 = vadd.f32 %v1468, %v1506
      %v1525 = vadd.f32 %v1469, %v1507
      %v1526 = vadd.f32 %v1470, %v1508
      %v1527 = vadd.f32 %v1471, %v1509
      %v1528 = vadd.f32 %v1472, %v1510
      %v1529 = vadd.f32 %v1473, %v1511
      %s1530 = scalar_lea.vmem %s3, 2016
      %v1531 = vld [vmem:[%s1530] sm:$0xff]
      %v1532 = vld [vmem:[%s1530 + $0x8] sm:$0xff]
      %v1533 = vld [vmem:[%s1530 + $0x10] sm:$0xff]
      %v1534 = vld [vmem:[%s1530 + $0x18] sm:$0xff]
      %v1535 = vld [vmem:[%s1530 + $0x20] sm:$0xff]
      %v1536 = vld [vmem:[%s1530 + $0x28] sm:$0xff]
      %v1537 = vld [vmem:[%s1530 + $0x30] sm:$0xff]
      %v1538 = vld [vmem:[%s1530 + $0x38] sm:$0xff]
      %v1539 = vld [vmem:[%s1530 + $0x40] sm:$0xff]
      %v1540 = vld [vmem:[%s1530 + $0x48] sm:$0xff]
      %v1541 = vld [vmem:[%s1530 + $0x50] sm:$0xff]
      %v1542 = vld [vmem:[%s1530 + $0x58] sm:$0xff]
      %v1543 = vld [vmem:[%s1530 + $0x60] sm:$0xff]
      %v1544 = vld [vmem:[%s1530 + $0x68] sm:$0xff]
      %v1545 = vld [vmem:[%s1530 + $0x70] sm:$0xff]
      %v1546 = vld [vmem:[%s1530 + $0x78] sm:$0xff]
      %v1547 = vld [vmem:[%s1530 + $0x80] sm:$0xff]
      %v1548 = vld [vmem:[%s1530 + $0x88] sm:$0xff]
      %v1549 = vld [vmem:[#allocation2 + $0x99] sm:$0xff]
      %v1550 = vmul.f32 %v1531, %v1124
      %v1551 = vmul.f32 %v1532, %v1125
      %v1552 = vmul.f32 %v1533, %v1126
      %v1553 = vmul.f32 %v1534, %v1127
      %v1554 = vmul.f32 %v1535, %v1128
      %v1555 = vmul.f32 %v1536, %v1129
      %v1556 = vmul.f32 %v1537, %v1130
      %v1557 = vmul.f32 %v1538, %v1131
      %v1558 = vmul.f32 %v1539, %v1132
      %v1559 = vmul.f32 %v1540, %v1133
      %v1560 = vmul.f32 %v1541, %v1134
      %v1561 = vmul.f32 %v1542, %v1135
      %v1562 = vmul.f32 %v1543, %v1136
      %v1563 = vmul.f32 %v1544, %v1137
      %v1564 = vmul.f32 %v1545, %v1138
      %v1565 = vmul.f32 %v1546, %v1139
      %v1566 = vmul.f32 %v1547, %v1140
      %v1567 = vmul.f32 %v1548, %v1549
      %v1568 = vadd.f32 %v1512, %v1550
      %v1569 = vadd.f32 %v1513, %v1551
      %v1570 = vadd.f32 %v1514, %v1552
      %v1571 = vadd.f32 %v1515, %v1553
      %v1572 = vadd.f32 %v1516, %v1554
      %v1573 = vadd.f32 %v1517, %v1555
      %v1574 = vadd.f32 %v1518, %v1556
      %v1575 = vadd.f32 %v1519, %v1557
      %v1576 = vadd.f32 %v1520, %v1558
      %v1577 = vadd.f32 %v1521, %v1559
      %v1578 = vadd.f32 %v1522, %v1560
      %v1579 = vadd.f32 %v1523, %v1561
      %v1580 = vadd.f32 %v1524, %v1562
      %v1581 = vadd.f32 %v1525, %v1563
      %v1582 = vadd.f32 %v1526, %v1564
      %v1583 = vadd.f32 %v1527, %v1565
      %v1584 = vadd.f32 %v1528, %v1566
      %v1585 = vadd.f32 %v1529, %v1567
      %s1586 = scalar_lea.vmem %s3, 2160
      %v1587 = vld [vmem:[%s1586] sm:$0xff]
      %v1588 = vld [vmem:[%s1586 + $0x8] sm:$0xff]
      %v1589 = vld [vmem:[%s1586 + $0x10] sm:$0xff]
      %v1590 = vld [vmem:[%s1586 + $0x18] sm:$0xff]
      %v1591 = vld [vmem:[%s1586 + $0x20] sm:$0xff]
      %v1592 = vld [vmem:[%s1586 + $0x28] sm:$0xff]
      %v1593 = vld [vmem:[%s1586 + $0x30] sm:$0xff]
      %v1594 = vld [vmem:[%s1586 + $0x38] sm:$0xff]
      %v1595 = vld [vmem:[%s1586 + $0x40] sm:$0xff]
      %v1596 = vld [vmem:[%s1586 + $0x48] sm:$0xff]
      %v1597 = vld [vmem:[%s1586 + $0x50] sm:$0xff]
      %v1598 = vld [vmem:[%s1586 + $0x58] sm:$0xff]
      %v1599 = vld [vmem:[%s1586 + $0x60] sm:$0xff]
      %v1600 = vld [vmem:[%s1586 + $0x68] sm:$0xff]
      %v1601 = vld [vmem:[%s1586 + $0x70] sm:$0xff]
      %v1602 = vld [vmem:[%s1586 + $0x78] sm:$0xff]
      %v1603 = vld [vmem:[%s1586 + $0x80] sm:$0xff]
      %v1604 = vld [vmem:[%s1586 + $0x88] sm:$0xff]
      %v1605 = vld [vmem:[#allocation2 + $0x9a] sm:$0xff]
      %v1606 = vmul.f32 %v1587, %v1197
      %v1607 = vmul.f32 %v1588, %v1198
      %v1608 = vmul.f32 %v1589, %v1199
      %v1609 = vmul.f32 %v1590, %v1200
      %v1610 = vmul.f32 %v1591, %v1201
      %v1611 = vmul.f32 %v1592, %v1202
      %v1612 = vmul.f32 %v1593, %v1203
      %v1613 = vmul.f32 %v1594, %v1204
      %v1614 = vmul.f32 %v1595, %v1205
      %v1615 = vmul.f32 %v1596, %v1206
      %v1616 = vmul.f32 %v1597, %v1207
      %v1617 = vmul.f32 %v1598, %v1208
      %v1618 = vmul.f32 %v1599, %v1209
      %v1619 = vmul.f32 %v1600, %v1210
      %v1620 = vmul.f32 %v1601, %v1211
      %v1621 = vmul.f32 %v1602, %v1212
      %v1622 = vmul.f32 %v1603, %v1213
      %v1623 = vmul.f32 %v1604, %v1605
      %v1624 = vadd.f32 %v1568, %v1606
      %v1625 = vadd.f32 %v1569, %v1607
      %v1626 = vadd.f32 %v1570, %v1608
      %v1627 = vadd.f32 %v1571, %v1609
      %v1628 = vadd.f32 %v1572, %v1610
      %v1629 = vadd.f32 %v1573, %v1611
      %v1630 = vadd.f32 %v1574, %v1612
      %v1631 = vadd.f32 %v1575, %v1613
      %v1632 = vadd.f32 %v1576, %v1614
      %v1633 = vadd.f32 %v1577, %v1615
      %v1634 = vadd.f32 %v1578, %v1616
      %v1635 = vadd.f32 %v1579, %v1617
      %v1636 = vadd.f32 %v1580, %v1618
      %v1637 = vadd.f32 %v1581, %v1619
      %v1638 = vadd.f32 %v1582, %v1620
      %v1639 = vadd.f32 %v1583, %v1621
      %v1640 = vadd.f32 %v1584, %v1622
      %v1641 = vadd.f32 %v1585, %v1623
      %s1642 = scalar_lea.vmem %s3, 2304
      %v1643 = vld [vmem:[%s1642] sm:$0xff]
      %v1644 = vld [vmem:[%s1642 + $0x8] sm:$0xff]
      %v1645 = vld [vmem:[%s1642 + $0x10] sm:$0xff]
      %v1646 = vld [vmem:[%s1642 + $0x18] sm:$0xff]
      %v1647 = vld [vmem:[%s1642 + $0x20] sm:$0xff]
      %v1648 = vld [vmem:[%s1642 + $0x28] sm:$0xff]
      %v1649 = vld [vmem:[%s1642 + $0x30] sm:$0xff]
      %v1650 = vld [vmem:[%s1642 + $0x38] sm:$0xff]
      %v1651 = vld [vmem:[%s1642 + $0x40] sm:$0xff]
      %v1652 = vld [vmem:[%s1642 + $0x48] sm:$0xff]
      %v1653 = vld [vmem:[%s1642 + $0x50] sm:$0xff]
      %v1654 = vld [vmem:[%s1642 + $0x58] sm:$0xff]
      %v1655 = vld [vmem:[%s1642 + $0x60] sm:$0xff]
      %v1656 = vld [vmem:[%s1642 + $0x68] sm:$0xff]
      %v1657 = vld [vmem:[%s1642 + $0x70] sm:$0xff]
      %v1658 = vld [vmem:[%s1642 + $0x78] sm:$0xff]
      %v1659 = vld [vmem:[%s1642 + $0x80] sm:$0xff]
      %v1660 = vld [vmem:[%s1642 + $0x88] sm:$0xff]
      %v1661 = vld [vmem:[#allocation2 + $0x9b] sm:$0xff]
      %v1662 = vmul.f32 %v1643, %v687
      %v1663 = vmul.f32 %v1644, %v688
      %v1664 = vmul.f32 %v1645, %v689
      %v1665 = vmul.f32 %v1646, %v690
      %v1666 = vmul.f32 %v1647, %v691
      %v1667 = vmul.f32 %v1648, %v692
      %v1668 = vmul.f32 %v1649, %v693
      %v1669 = vmul.f32 %v1650, %v694
      %v1670 = vmul.f32 %v1651, %v695
      %v1671 = vmul.f32 %v1652, %v696
      %v1672 = vmul.f32 %v1653, %v697
      %v1673 = vmul.f32 %v1654, %v698
      %v1674 = vmul.f32 %v1655, %v699
      %v1675 = vmul.f32 %v1656, %v700
      %v1676 = vmul.f32 %v1657, %v701
      %v1677 = vmul.f32 %v1658, %v702
      %v1678 = vmul.f32 %v1659, %v1269
      %v1679 = vmul.f32 %v1660, %v1661
      %v1680 = vadd.f32 %v1624, %v1662
      %v1681 = vadd.f32 %v1625, %v1663
      %v1682 = vadd.f32 %v1626, %v1664
      %v1683 = vadd.f32 %v1627, %v1665
      %v1684 = vadd.f32 %v1628, %v1666
      %v1685 = vadd.f32 %v1629, %v1667
      %v1686 = vadd.f32 %v1630, %v1668
      %v1687 = vadd.f32 %v1631, %v1669
      %v1688 = vadd.f32 %v1632, %v1670
      %v1689 = vadd.f32 %v1633, %v1671
      %v1690 = vadd.f32 %v1634, %v1672
      %v1691 = vadd.f32 %v1635, %v1673
      %v1692 = vadd.f32 %v1636, %v1674
      %v1693 = vadd.f32 %v1637, %v1675
      %v1694 = vadd.f32 %v1638, %v1676
      %v1695 = vadd.f32 %v1639, %v1677
      %v1696 = vadd.f32 %v1640, %v1678
      %v1697 = vadd.f32 %v1641, %v1679
      %s1698 = scalar_lea.vmem %s3, 2448
      %v1699 = vld [vmem:[%s1698] sm:$0xff]
      %v1700 = vld [vmem:[%s1698 + $0x8] sm:$0xff]
      %v1701 = vld [vmem:[%s1698 + $0x10] sm:$0xff]
      %v1702 = vld [vmem:[%s1698 + $0x18] sm:$0xff]
      %v1703 = vld [vmem:[%s1698 + $0x20] sm:$0xff]
      %v1704 = vld [vmem:[%s1698 + $0x28] sm:$0xff]
      %v1705 = vld [vmem:[%s1698 + $0x30] sm:$0xff]
      %v1706 = vld [vmem:[%s1698 + $0x38] sm:$0xff]
      %v1707 = vld [vmem:[%s1698 + $0x40] sm:$0xff]
      %v1708 = vld [vmem:[%s1698 + $0x48] sm:$0xff]
      %v1709 = vld [vmem:[%s1698 + $0x50] sm:$0xff]
      %v1710 = vld [vmem:[%s1698 + $0x58] sm:$0xff]
      %v1711 = vld [vmem:[%s1698 + $0x60] sm:$0xff]
      %v1712 = vld [vmem:[%s1698 + $0x68] sm:$0xff]
      %v1713 = vld [vmem:[%s1698 + $0x70] sm:$0xff]
      %v1714 = vld [vmem:[%s1698 + $0x78] sm:$0xff]
      %v1715 = vld [vmem:[%s1698 + $0x80] sm:$0xff]
      %v1716 = vld [vmem:[%s1698 + $0x88] sm:$0xff]
      %v1717 = vld [vmem:[#allocation2 + $0x9c] sm:$0xff]
      %v1718 = vmul.f32 %v1699, %v760
      %v1719 = vmul.f32 %v1700, %v761
      %v1720 = vmul.f32 %v1701, %v762
      %v1721 = vmul.f32 %v1702, %v763
      %v1722 = vmul.f32 %v1703, %v764
      %v1723 = vmul.f32 %v1704, %v765
      %v1724 = vmul.f32 %v1705, %v766
      %v1725 = vmul.f32 %v1706, %v767
      %v1726 = vmul.f32 %v1707, %v768
      %v1727 = vmul.f32 %v1708, %v769
      %v1728 = vmul.f32 %v1709, %v770
      %v1729 = vmul.f32 %v1710, %v771
      %v1730 = vmul.f32 %v1711, %v772
      %v1731 = vmul.f32 %v1712, %v773
      %v1732 = vmul.f32 %v1713, %v774
      %v1733 = vmul.f32 %v1714, %v775
      %v1734 = vmul.f32 %v1715, %v1325
      %v1735 = vmul.f32 %v1716, %v1717
      %v1736 = vadd.f32 %v1680, %v1718
      %v1737 = vadd.f32 %v1681, %v1719
      %v1738 = vadd.f32 %v1682, %v1720
      %v1739 = vadd.f32 %v1683, %v1721
      %v1740 = vadd.f32 %v1684, %v1722
      %v1741 = vadd.f32 %v1685, %v1723
      %v1742 = vadd.f32 %v1686, %v1724
      %v1743 = vadd.f32 %v1687, %v1725
      %v1744 = vadd.f32 %v1688, %v1726
      %v1745 = vadd.f32 %v1689, %v1727
      %v1746 = vadd.f32 %v1690, %v1728
      %v1747 = vadd.f32 %v1691, %v1729
      %v1748 = vadd.f32 %v1692, %v1730
      %v1749 = vadd.f32 %v1693, %v1731
      %v1750 = vadd.f32 %v1694, %v1732
      %v1751 = vadd.f32 %v1695, %v1733
      %v1752 = vadd.f32 %v1696, %v1734
      %v1753 = vadd.f32 %v1697, %v1735
      %s1754 = scalar_lea.vmem %s3, 2592
      %v1755 = vld [vmem:[%s1754] sm:$0xff]
      %v1756 = vld [vmem:[%s1754 + $0x8] sm:$0xff]
      %v1757 = vld [vmem:[%s1754 + $0x10] sm:$0xff]
      %v1758 = vld [vmem:[%s1754 + $0x18] sm:$0xff]
      %v1759 = vld [vmem:[%s1754 + $0x20] sm:$0xff]
      %v1760 = vld [vmem:[%s1754 + $0x28] sm:$0xff]
      %v1761 = vld [vmem:[%s1754 + $0x30] sm:$0xff]
      %v1762 = vld [vmem:[%s1754 + $0x38] sm:$0xff]
      %v1763 = vld [vmem:[%s1754 + $0x40] sm:$0xff]
      %v1764 = vld [vmem:[%s1754 + $0x48] sm:$0xff]
      %v1765 = vld [vmem:[%s1754 + $0x50] sm:$0xff]
      %v1766 = vld [vmem:[%s1754 + $0x58] sm:$0xff]
      %v1767 = vld [vmem:[%s1754 + $0x60] sm:$0xff]
      %v1768 = vld [vmem:[%s1754 + $0x68] sm:$0xff]
      %v1769 = vld [vmem:[%s1754 + $0x70] sm:$0xff]
      %v1770 = vld [vmem:[%s1754 + $0x78] sm:$0xff]
      %v1771 = vld [vmem:[%s1754 + $0x80] sm:$0xff]
      %v1772 = vld [vmem:[%s1754 + $0x88] sm:$0xff]
      %v1773 = vld [vmem:[#allocation2 + $0x9d] sm:$0xff]
      %v1774 = vmul.f32 %v1755, %v833
      %v1775 = vmul.f32 %v1756, %v834
      %v1776 = vmul.f32 %v1757, %v835
      %v1777 = vmul.f32 %v1758, %v836
      %v1778 = vmul.f32 %v1759, %v837
      %v1779 = vmul.f32 %v1760, %v838
      %v1780 = vmul.f32 %v1761, %v839
      %v1781 = vmul.f32 %v1762, %v840
      %v1782 = vmul.f32 %v1763, %v841
      %v1783 = vmul.f32 %v1764, %v842
      %v1784 = vmul.f32 %v1765, %v843
      %v1785 = vmul.f32 %v1766, %v844
      %v1786 = vmul.f32 %v1767, %v845
      %v1787 = vmul.f32 %v1768, %v846
      %v1788 = vmul.f32 %v1769, %v847
      %v1789 = vmul.f32 %v1770, %v848
      %v1790 = vmul.f32 %v1771, %v1381
      %v1791 = vmul.f32 %v1772, %v1773
      %v1792 = vadd.f32 %v1736, %v1774
      %v1793 = vadd.f32 %v1737, %v1775
      %v1794 = vadd.f32 %v1738, %v1776
      %v1795 = vadd.f32 %v1739, %v1777
      %v1796 = vadd.f32 %v1740, %v1778
      %v1797 = vadd.f32 %v1741, %v1779
      %v1798 = vadd.f32 %v1742, %v1780
      %v1799 = vadd.f32 %v1743, %v1781
      %v1800 = vadd.f32 %v1744, %v1782
      %v1801 = vadd.f32 %v1745, %v1783
      %v1802 = vadd.f32 %v1746, %v1784
      %v1803 = vadd.f32 %v1747, %v1785
      %v1804 = vadd.f32 %v1748, %v1786
      %v1805 = vadd.f32 %v1749, %v1787
      %v1806 = vadd.f32 %v1750, %v1788
      %v1807 = vadd.f32 %v1751, %v1789
      %v1808 = vadd.f32 %v1752, %v1790
      %v1809 = vadd.f32 %v1753, %v1791
      %s1810 = scalar_lea.vmem %s3, 2736
      %v1811 = vld [vmem:[%s1810] sm:$0xff]
      %v1812 = vld [vmem:[%s1810 + $0x8] sm:$0xff]
      %v1813 = vld [vmem:[%s1810 + $0x10] sm:$0xff]
      %v1814 = vld [vmem:[%s1810 + $0x18] sm:$0xff]
      %v1815 = vld [vmem:[%s1810 + $0x20] sm:$0xff]
      %v1816 = vld [vmem:[%s1810 + $0x28] sm:$0xff]
      %v1817 = vld [vmem:[%s1810 + $0x30] sm:$0xff]
      %v1818 = vld [vmem:[%s1810 + $0x38] sm:$0xff]
      %v1819 = vld [vmem:[%s1810 + $0x40] sm:$0xff]
      %v1820 = vld [vmem:[%s1810 + $0x48] sm:$0xff]
      %v1821 = vld [vmem:[%s1810 + $0x50] sm:$0xff]
      %v1822 = vld [vmem:[%s1810 + $0x58] sm:$0xff]
      %v1823 = vld [vmem:[%s1810 + $0x60] sm:$0xff]
      %v1824 = vld [vmem:[%s1810 + $0x68] sm:$0xff]
      %v1825 = vld [vmem:[%s1810 + $0x70] sm:$0xff]
      %v1826 = vld [vmem:[%s1810 + $0x78] sm:$0xff]
      %v1827 = vld [vmem:[%s1810 + $0x80] sm:$0xff]
      %v1828 = vld [vmem:[%s1810 + $0x88] sm:$0xff]
      %v1829 = vld [vmem:[#allocation2 + $0x9e] sm:$0xff]
      %v1830 = vmul.f32 %v1811, %v906
      %v1831 = vmul.f32 %v1812, %v907
      %v1832 = vmul.f32 %v1813, %v908
      %v1833 = vmul.f32 %v1814, %v909
      %v1834 = vmul.f32 %v1815, %v910
      %v1835 = vmul.f32 %v1816, %v911
      %v1836 = vmul.f32 %v1817, %v912
      %v1837 = vmul.f32 %v1818, %v913
      %v1838 = vmul.f32 %v1819, %v914
      %v1839 = vmul.f32 %v1820, %v915
      %v1840 = vmul.f32 %v1821, %v916
      %v1841 = vmul.f32 %v1822, %v917
      %v1842 = vmul.f32 %v1823, %v918
      %v1843 = vmul.f32 %v1824, %v919
      %v1844 = vmul.f32 %v1825, %v920
      %v1845 = vmul.f32 %v1826, %v921
      %v1846 = vmul.f32 %v1827, %v1437
      %v1847 = vmul.f32 %v1828, %v1829
      %v1848 = vadd.f32 %v1792, %v1830
      %v1849 = vadd.f32 %v1793, %v1831
      %v1850 = vadd.f32 %v1794, %v1832
      %v1851 = vadd.f32 %v1795, %v1833
      %v1852 = vadd.f32 %v1796, %v1834
      %v1853 = vadd.f32 %v1797, %v1835
      %v1854 = vadd.f32 %v1798, %v1836
      %v1855 = vadd.f32 %v1799, %v1837
      %v1856 = vadd.f32 %v1800, %v1838
      %v1857 = vadd.f32 %v1801, %v1839
      %v1858 = vadd.f32 %v1802, %v1840
      %v1859 = vadd.f32 %v1803, %v1841
      %v1860 = vadd.f32 %v1804, %v1842
      %v1861 = vadd.f32 %v1805, %v1843
      %v1862 = vadd.f32 %v1806, %v1844
      %v1863 = vadd.f32 %v1807, %v1845
      %v1864 = vadd.f32 %v1808, %v1846
      %v1865 = vadd.f32 %v1809, %v1847
      %s1866 = scalar_lea.vmem %s3, 2880
      %v1867 = vld [vmem:[%s1866] sm:$0xff]
      %v1868 = vld [vmem:[%s1866 + $0x8] sm:$0xff]
      %v1869 = vld [vmem:[%s1866 + $0x10] sm:$0xff]
      %v1870 = vld [vmem:[%s1866 + $0x18] sm:$0xff]
      %v1871 = vld [vmem:[%s1866 + $0x20] sm:$0xff]
      %v1872 = vld [vmem:[%s1866 + $0x28] sm:$0xff]
      %v1873 = vld [vmem:[%s1866 + $0x30] sm:$0xff]
      %v1874 = vld [vmem:[%s1866 + $0x38] sm:$0xff]
      %v1875 = vld [vmem:[%s1866 + $0x40] sm:$0xff]
      %v1876 = vld [vmem:[%s1866 + $0x48] sm:$0xff]
      %v1877 = vld [vmem:[%s1866 + $0x50] sm:$0xff]
      %v1878 = vld [vmem:[%s1866 + $0x58] sm:$0xff]
      %v1879 = vld [vmem:[%s1866 + $0x60] sm:$0xff]
      %v1880 = vld [vmem:[%s1866 + $0x68] sm:$0xff]
      %v1881 = vld [vmem:[%s1866 + $0x70] sm:$0xff]
      %v1882 = vld [vmem:[%s1866 + $0x78] sm:$0xff]
      %v1883 = vld [vmem:[%s1866 + $0x80] sm:$0xff]
      %v1884 = vld [vmem:[%s1866 + $0x88] sm:$0xff]
      %v1885 = vld [vmem:[#allocation2 + $0x9f] sm:$0xff]
      %v1886 = vmul.f32 %v1867, %v979
      %v1887 = vmul.f32 %v1868, %v980
      %v1888 = vmul.f32 %v1869, %v981
      %v1889 = vmul.f32 %v1870, %v982
      %v1890 = vmul.f32 %v1871, %v983
      %v1891 = vmul.f32 %v1872, %v984
      %v1892 = vmul.f32 %v1873, %v985
      %v1893 = vmul.f32 %v1874, %v986
      %v1894 = vmul.f32 %v1875, %v987
      %v1895 = vmul.f32 %v1876, %v988
      %v1896 = vmul.f32 %v1877, %v989
      %v1897 = vmul.f32 %v1878, %v990
      %v1898 = vmul.f32 %v1879, %v991
      %v1899 = vmul.f32 %v1880, %v992
      %v1900 = vmul.f32 %v1881, %v993
      %v1901 = vmul.f32 %v1882, %v994
      %v1902 = vmul.f32 %v1883, %v1493
      %v1903 = vmul.f32 %v1884, %v1885
      %v1904 = vadd.f32 %v1848, %v1886
      %v1905 = vadd.f32 %v1849, %v1887
      %v1906 = vadd.f32 %v1850, %v1888
      %v1907 = vadd.f32 %v1851, %v1889
      %v1908 = vadd.f32 %v1852, %v1890
      %v1909 = vadd.f32 %v1853, %v1891
      %v1910 = vadd.f32 %v1854, %v1892
      %v1911 = vadd.f32 %v1855, %v1893
      %v1912 = vadd.f32 %v1856, %v1894
      %v1913 = vadd.f32 %v1857, %v1895
      %v1914 = vadd.f32 %v1858, %v1896
      %v1915 = vadd.f32 %v1859, %v1897
      %v1916 = vadd.f32 %v1860, %v1898
      %v1917 = vadd.f32 %v1861, %v1899
      %v1918 = vadd.f32 %v1862, %v1900
      %v1919 = vadd.f32 %v1863, %v1901
      %v1920 = vadd.f32 %v1864, %v1902
      %v1921 = vadd.f32 %v1865, %v1903
      %s1922 = scalar_lea.vmem %s3, 3024
      %v1923 = vld [vmem:[%s1922] sm:$0xff]
      %v1924 = vld [vmem:[%s1922 + $0x8] sm:$0xff]
      %v1925 = vld [vmem:[%s1922 + $0x10] sm:$0xff]
      %v1926 = vld [vmem:[%s1922 + $0x18] sm:$0xff]
      %v1927 = vld [vmem:[%s1922 + $0x20] sm:$0xff]
      %v1928 = vld [vmem:[%s1922 + $0x28] sm:$0xff]
      %v1929 = vld [vmem:[%s1922 + $0x30] sm:$0xff]
      %v1930 = vld [vmem:[%s1922 + $0x38] sm:$0xff]
      %v1931 = vld [vmem:[%s1922 + $0x40] sm:$0xff]
      %v1932 = vld [vmem:[%s1922 + $0x48] sm:$0xff]
      %v1933 = vld [vmem:[%s1922 + $0x50] sm:$0xff]
      %v1934 = vld [vmem:[%s1922 + $0x58] sm:$0xff]
      %v1935 = vld [vmem:[%s1922 + $0x60] sm:$0xff]
      %v1936 = vld [vmem:[%s1922 + $0x68] sm:$0xff]
      %v1937 = vld [vmem:[%s1922 + $0x70] sm:$0xff]
      %v1938 = vld [vmem:[%s1922 + $0x78] sm:$0xff]
      %v1939 = vld [vmem:[%s1922 + $0x80] sm:$0xff]
      %v1940 = vld [vmem:[%s1922 + $0x88] sm:$0xff]
      %v1941 = vld [vmem:[#allocation2 + $0x98] sm:$0xff]
      %v1942 = vld [vmem:[#allocation2 + $0xa0] sm:$0xff]
      %v1943 = vmul.f32 %v1923, %v1052
      %v1944 = vmul.f32 %v1924, %v1053
      %v1945 = vmul.f32 %v1925, %v1054
      %v1946 = vmul.f32 %v1926, %v1055
      %v1947 = vmul.f32 %v1927, %v1056
      %v1948 = vmul.f32 %v1928, %v1057
      %v1949 = vmul.f32 %v1929, %v1058
      %v1950 = vmul.f32 %v1930, %v1059
      %v1951 = vmul.f32 %v1931, %v1060
      %v1952 = vmul.f32 %v1932, %v1061
      %v1953 = vmul.f32 %v1933, %v1062
      %v1954 = vmul.f32 %v1934, %v1063
      %v1955 = vmul.f32 %v1935, %v1064
      %v1956 = vmul.f32 %v1936, %v1065
      %v1957 = vmul.f32 %v1937, %v1066
      %v1958 = vmul.f32 %v1938, %v1067
      %v1959 = vmul.f32 %v1939, %v1941
      %v1960 = vmul.f32 %v1940, %v1942
      %v1961 = vadd.f32 %v1904, %v1943
      %v1962 = vadd.f32 %v1905, %v1944
      %v1963 = vadd.f32 %v1906, %v1945
      %v1964 = vadd.f32 %v1907, %v1946
      %v1965 = vadd.f32 %v1908, %v1947
      %v1966 = vadd.f32 %v1909, %v1948
      %v1967 = vadd.f32 %v1910, %v1949
      %v1968 = vadd.f32 %v1911, %v1950
      %v1969 = vadd.f32 %v1912, %v1951
      %v1970 = vadd.f32 %v1913, %v1952
      %v1971 = vadd.f32 %v1914, %v1953
      %v1972 = vadd.f32 %v1915, %v1954
      %v1973 = vadd.f32 %v1916, %v1955
      %v1974 = vadd.f32 %v1917, %v1956
      %v1975 = vadd.f32 %v1918, %v1957
      %v1976 = vadd.f32 %v1919, %v1958
      %v1977 = vadd.f32 %v1920, %v1959
      %v1978 = vadd.f32 %v1921, %v1960
      %s1979 = scalar_lea.vmem %s3, 3168
      %v1980 = vld [vmem:[%s1979] sm:$0xff]
      %v1981 = vld [vmem:[%s1979 + $0x8] sm:$0xff]
      %v1982 = vld [vmem:[%s1979 + $0x10] sm:$0xff]
      %v1983 = vld [vmem:[%s1979 + $0x18] sm:$0xff]
      %v1984 = vld [vmem:[%s1979 + $0x20] sm:$0xff]
      %v1985 = vld [vmem:[%s1979 + $0x28] sm:$0xff]
      %v1986 = vld [vmem:[%s1979 + $0x30] sm:$0xff]
      %v1987 = vld [vmem:[%s1979 + $0x38] sm:$0xff]
      %v1988 = vld [vmem:[%s1979 + $0x40] sm:$0xff]
      %v1989 = vld [vmem:[%s1979 + $0x48] sm:$0xff]
      %v1990 = vld [vmem:[%s1979 + $0x50] sm:$0xff]
      %v1991 = vld [vmem:[%s1979 + $0x58] sm:$0xff]
      %v1992 = vld [vmem:[%s1979 + $0x60] sm:$0xff]
      %v1993 = vld [vmem:[%s1979 + $0x68] sm:$0xff]
      %v1994 = vld [vmem:[%s1979 + $0x70] sm:$0xff]
      %v1995 = vld [vmem:[%s1979 + $0x78] sm:$0xff]
      %v1996 = vld [vmem:[%s1979 + $0x80] sm:$0xff]
      %v1997 = vld [vmem:[%s1979 + $0x88] sm:$0xff]
      %v1998 = vld [vmem:[#allocation2 + $0xa1] sm:$0xff]
      %v1999 = vmul.f32 %v1980, %v1125
      %v2000 = vmul.f32 %v1981, %v1126
      %v2001 = vmul.f32 %v1982, %v1127
      %v2002 = vmul.f32 %v1983, %v1128
      %v2003 = vmul.f32 %v1984, %v1129
      %v2004 = vmul.f32 %v1985, %v1130
      %v2005 = vmul.f32 %v1986, %v1131
      %v2006 = vmul.f32 %v1987, %v1132
      %v2007 = vmul.f32 %v1988, %v1133
      %v2008 = vmul.f32 %v1989, %v1134
      %v2009 = vmul.f32 %v1990, %v1135
      %v2010 = vmul.f32 %v1991, %v1136
      %v2011 = vmul.f32 %v1992, %v1137
      %v2012 = vmul.f32 %v1993, %v1138
      %v2013 = vmul.f32 %v1994, %v1139
      %v2014 = vmul.f32 %v1995, %v1140
      %v2015 = vmul.f32 %v1996, %v1549
      %v2016 = vmul.f32 %v1997, %v1998
      %v2017 = vadd.f32 %v1961, %v1999
      %v2018 = vadd.f32 %v1962, %v2000
      %v2019 = vadd.f32 %v1963, %v2001
      %v2020 = vadd.f32 %v1964, %v2002
      %v2021 = vadd.f32 %v1965, %v2003
      %v2022 = vadd.f32 %v1966, %v2004
      %v2023 = vadd.f32 %v1967, %v2005
      %v2024 = vadd.f32 %v1968, %v2006
      %v2025 = vadd.f32 %v1969, %v2007
      %v2026 = vadd.f32 %v1970, %v2008
      %v2027 = vadd.f32 %v1971, %v2009
      %v2028 = vadd.f32 %v1972, %v2010
      %v2029 = vadd.f32 %v1973, %v2011
      %v2030 = vadd.f32 %v1974, %v2012
      %v2031 = vadd.f32 %v1975, %v2013
      %v2032 = vadd.f32 %v1976, %v2014
      %v2033 = vadd.f32 %v1977, %v2015
      %v2034 = vadd.f32 %v1978, %v2016
      %s2035 = scalar_lea.vmem %s3, 3312
      %v2036 = vld [vmem:[%s2035] sm:$0xff]
      %v2037 = vld [vmem:[%s2035 + $0x8] sm:$0xff]
      %v2038 = vld [vmem:[%s2035 + $0x10] sm:$0xff]
      %v2039 = vld [vmem:[%s2035 + $0x18] sm:$0xff]
      %v2040 = vld [vmem:[%s2035 + $0x20] sm:$0xff]
      %v2041 = vld [vmem:[%s2035 + $0x28] sm:$0xff]
      %v2042 = vld [vmem:[%s2035 + $0x30] sm:$0xff]
      %v2043 = vld [vmem:[%s2035 + $0x38] sm:$0xff]
      %v2044 = vld [vmem:[%s2035 + $0x40] sm:$0xff]
      %v2045 = vld [vmem:[%s2035 + $0x48] sm:$0xff]
      %v2046 = vld [vmem:[%s2035 + $0x50] sm:$0xff]
      %v2047 = vld [vmem:[%s2035 + $0x58] sm:$0xff]
      %v2048 = vld [vmem:[%s2035 + $0x60] sm:$0xff]
      %v2049 = vld [vmem:[%s2035 + $0x68] sm:$0xff]
      %v2050 = vld [vmem:[%s2035 + $0x70] sm:$0xff]
      %v2051 = vld [vmem:[%s2035 + $0x78] sm:$0xff]
      %v2052 = vld [vmem:[%s2035 + $0x80] sm:$0xff]
      %v2053 = vld [vmem:[%s2035 + $0x88] sm:$0xff]
      %v2054 = vld [vmem:[#allocation2 + $0xa2] sm:$0xff]
      %v2055 = vmul.f32 %v2036, %v1198
      %v2056 = vmul.f32 %v2037, %v1199
      %v2057 = vmul.f32 %v2038, %v1200
      %v2058 = vmul.f32 %v2039, %v1201
      %v2059 = vmul.f32 %v2040, %v1202
      %v2060 = vmul.f32 %v2041, %v1203
      %v2061 = vmul.f32 %v2042, %v1204
      %v2062 = vmul.f32 %v2043, %v1205
      %v2063 = vmul.f32 %v2044, %v1206
      %v2064 = vmul.f32 %v2045, %v1207
      %v2065 = vmul.f32 %v2046, %v1208
      %v2066 = vmul.f32 %v2047, %v1209
      %v2067 = vmul.f32 %v2048, %v1210
      %v2068 = vmul.f32 %v2049, %v1211
      %v2069 = vmul.f32 %v2050, %v1212
      %v2070 = vmul.f32 %v2051, %v1213
      %v2071 = vmul.f32 %v2052, %v1605
      %v2072 = vmul.f32 %v2053, %v2054
      %v2073 = vadd.f32 %v2017, %v2055
      %v2074 = vadd.f32 %v2018, %v2056
      %v2075 = vadd.f32 %v2019, %v2057
      %v2076 = vadd.f32 %v2020, %v2058
      %v2077 = vadd.f32 %v2021, %v2059
      %v2078 = vadd.f32 %v2022, %v2060
      %v2079 = vadd.f32 %v2023, %v2061
      %v2080 = vadd.f32 %v2024, %v2062
      %v2081 = vadd.f32 %v2025, %v2063
      %v2082 = vadd.f32 %v2026, %v2064
      %v2083 = vadd.f32 %v2027, %v2065
      %v2084 = vadd.f32 %v2028, %v2066
      %v2085 = vadd.f32 %v2029, %v2067
      %v2086 = vadd.f32 %v2030, %v2068
      %v2087 = vadd.f32 %v2031, %v2069
      %v2088 = vadd.f32 %v2032, %v2070
      %v2089 = vadd.f32 %v2033, %v2071
      %v2090 = vadd.f32 %v2034, %v2072
      %s2091 = scalar_lea.vmem %s3, 3456
      %v2092 = vld [vmem:[%s2091] sm:$0xff]
      %v2093 = vld [vmem:[%s2091 + $0x8] sm:$0xff]
      %v2094 = vld [vmem:[%s2091 + $0x10] sm:$0xff]
      %v2095 = vld [vmem:[%s2091 + $0x18] sm:$0xff]
      %v2096 = vld [vmem:[%s2091 + $0x20] sm:$0xff]
      %v2097 = vld [vmem:[%s2091 + $0x28] sm:$0xff]
      %v2098 = vld [vmem:[%s2091 + $0x30] sm:$0xff]
      %v2099 = vld [vmem:[%s2091 + $0x38] sm:$0xff]
      %v2100 = vld [vmem:[%s2091 + $0x40] sm:$0xff]
      %v2101 = vld [vmem:[%s2091 + $0x48] sm:$0xff]
      %v2102 = vld [vmem:[%s2091 + $0x50] sm:$0xff]
      %v2103 = vld [vmem:[%s2091 + $0x58] sm:$0xff]
      %v2104 = vld [vmem:[%s2091 + $0x60] sm:$0xff]
      %v2105 = vld [vmem:[%s2091 + $0x68] sm:$0xff]
      %v2106 = vld [vmem:[%s2091 + $0x70] sm:$0xff]
      %v2107 = vld [vmem:[%s2091 + $0x78] sm:$0xff]
      %v2108 = vld [vmem:[%s2091 + $0x80] sm:$0xff]
      %v2109 = vld [vmem:[%s2091 + $0x88] sm:$0xff]
      %v2110 = vld [vmem:[#allocation2 + $0xa3] sm:$0xff]
      %v2111 = vmul.f32 %v2092, %v688
      %v2112 = vmul.f32 %v2093, %v689
      %v2113 = vmul.f32 %v2094, %v690
      %v2114 = vmul.f32 %v2095, %v691
      %v2115 = vmul.f32 %v2096, %v692
      %v2116 = vmul.f32 %v2097, %v693
      %v2117 = vmul.f32 %v2098, %v694
      %v2118 = vmul.f32 %v2099, %v695
      %v2119 = vmul.f32 %v2100, %v696
      %v2120 = vmul.f32 %v2101, %v697
      %v2121 = vmul.f32 %v2102, %v698
      %v2122 = vmul.f32 %v2103, %v699
      %v2123 = vmul.f32 %v2104, %v700
      %v2124 = vmul.f32 %v2105, %v701
      %v2125 = vmul.f32 %v2106, %v702
      %v2126 = vmul.f32 %v2107, %v1269
      %v2127 = vmul.f32 %v2108, %v1661
      %v2128 = vmul.f32 %v2109, %v2110
      %v2129 = vadd.f32 %v2073, %v2111
      %v2130 = vadd.f32 %v2074, %v2112
      %v2131 = vadd.f32 %v2075, %v2113
      %v2132 = vadd.f32 %v2076, %v2114
      %v2133 = vadd.f32 %v2077, %v2115
      %v2134 = vadd.f32 %v2078, %v2116
      %v2135 = vadd.f32 %v2079, %v2117
      %v2136 = vadd.f32 %v2080, %v2118
      %v2137 = vadd.f32 %v2081, %v2119
      %v2138 = vadd.f32 %v2082, %v2120
      %v2139 = vadd.f32 %v2083, %v2121
      %v2140 = vadd.f32 %v2084, %v2122
      %v2141 = vadd.f32 %v2085, %v2123
      %v2142 = vadd.f32 %v2086, %v2124
      %v2143 = vadd.f32 %v2087, %v2125
      %v2144 = vadd.f32 %v2088, %v2126
      %v2145 = vadd.f32 %v2089, %v2127
      %v2146 = vadd.f32 %v2090, %v2128
      %s2147 = scalar_lea.vmem %s3, 3600
      %v2148 = vld [vmem:[%s2147] sm:$0xff]
      %v2149 = vld [vmem:[%s2147 + $0x8] sm:$0xff]
      %v2150 = vld [vmem:[%s2147 + $0x10] sm:$0xff]
      %v2151 = vld [vmem:[%s2147 + $0x18] sm:$0xff]
      %v2152 = vld [vmem:[%s2147 + $0x20] sm:$0xff]
      %v2153 = vld [vmem:[%s2147 + $0x28] sm:$0xff]
      %v2154 = vld [vmem:[%s2147 + $0x30] sm:$0xff]
      %v2155 = vld [vmem:[%s2147 + $0x38] sm:$0xff]
      %v2156 = vld [vmem:[%s2147 + $0x40] sm:$0xff]
      %v2157 = vld [vmem:[%s2147 + $0x48] sm:$0xff]
      %v2158 = vld [vmem:[%s2147 + $0x50] sm:$0xff]
      %v2159 = vld [vmem:[%s2147 + $0x58] sm:$0xff]
      %v2160 = vld [vmem:[%s2147 + $0x60] sm:$0xff]
      %v2161 = vld [vmem:[%s2147 + $0x68] sm:$0xff]
      %v2162 = vld [vmem:[%s2147 + $0x70] sm:$0xff]
      %v2163 = vld [vmem:[%s2147 + $0x78] sm:$0xff]
      %v2164 = vld [vmem:[%s2147 + $0x80] sm:$0xff]
      %v2165 = vld [vmem:[%s2147 + $0x88] sm:$0xff]
      %v2166 = vld [vmem:[#allocation2 + $0xa4] sm:$0xff]
      %v2167 = vmul.f32 %v2148, %v761
      %v2168 = vmul.f32 %v2149, %v762
      %v2169 = vmul.f32 %v2150, %v763
      %v2170 = vmul.f32 %v2151, %v764
      %v2171 = vmul.f32 %v2152, %v765
      %v2172 = vmul.f32 %v2153, %v766
      %v2173 = vmul.f32 %v2154, %v767
      %v2174 = vmul.f32 %v2155, %v768
      %v2175 = vmul.f32 %v2156, %v769
      %v2176 = vmul.f32 %v2157, %v770
      %v2177 = vmul.f32 %v2158, %v771
      %v2178 = vmul.f32 %v2159, %v772
      %v2179 = vmul.f32 %v2160, %v773
      %v2180 = vmul.f32 %v2161, %v774
      %v2181 = vmul.f32 %v2162, %v775
      %v2182 = vmul.f32 %v2163, %v1325
      %v2183 = vmul.f32 %v2164, %v1717
      %v2184 = vmul.f32 %v2165, %v2166
      %v2185 = vadd.f32 %v2129, %v2167
      %v2186 = vadd.f32 %v2130, %v2168
      %v2187 = vadd.f32 %v2131, %v2169
      %v2188 = vadd.f32 %v2132, %v2170
      %v2189 = vadd.f32 %v2133, %v2171
      %v2190 = vadd.f32 %v2134, %v2172
      %v2191 = vadd.f32 %v2135, %v2173
      %v2192 = vadd.f32 %v2136, %v2174
      %v2193 = vadd.f32 %v2137, %v2175
      %v2194 = vadd.f32 %v2138, %v2176
      %v2195 = vadd.f32 %v2139, %v2177
      %v2196 = vadd.f32 %v2140, %v2178
      %v2197 = vadd.f32 %v2141, %v2179
      %v2198 = vadd.f32 %v2142, %v2180
      %v2199 = vadd.f32 %v2143, %v2181
      %v2200 = vadd.f32 %v2144, %v2182
      %v2201 = vadd.f32 %v2145, %v2183
      %v2202 = vadd.f32 %v2146, %v2184
      %s2203 = scalar_lea.vmem %s3, 3744
      %v2204 = vld [vmem:[%s2203] sm:$0xff]
      %v2205 = vld [vmem:[%s2203 + $0x8] sm:$0xff]
      %v2206 = vld [vmem:[%s2203 + $0x10] sm:$0xff]
      %v2207 = vld [vmem:[%s2203 + $0x18] sm:$0xff]
      %v2208 = vld [vmem:[%s2203 + $0x20] sm:$0xff]
      %v2209 = vld [vmem:[%s2203 + $0x28] sm:$0xff]
      %v2210 = vld [vmem:[%s2203 + $0x30] sm:$0xff]
      %v2211 = vld [vmem:[%s2203 + $0x38] sm:$0xff]
      %v2212 = vld [vmem:[%s2203 + $0x40] sm:$0xff]
      %v2213 = vld [vmem:[%s2203 + $0x48] sm:$0xff]
      %v2214 = vld [vmem:[%s2203 + $0x50] sm:$0xff]
      %v2215 = vld [vmem:[%s2203 + $0x58] sm:$0xff]
      %v2216 = vld [vmem:[%s2203 + $0x60] sm:$0xff]
      %v2217 = vld [vmem:[%s2203 + $0x68] sm:$0xff]
      %v2218 = vld [vmem:[%s2203 + $0x70] sm:$0xff]
      %v2219 = vld [vmem:[%s2203 + $0x78] sm:$0xff]
      %v2220 = vld [vmem:[%s2203 + $0x80] sm:$0xff]
      %v2221 = vld [vmem:[%s2203 + $0x88] sm:$0xff]
      %v2222 = vld [vmem:[#allocation2 + $0xa5] sm:$0xff]
      %v2223 = vmul.f32 %v2204, %v834
      %v2224 = vmul.f32 %v2205, %v835
      %v2225 = vmul.f32 %v2206, %v836
      %v2226 = vmul.f32 %v2207, %v837
      %v2227 = vmul.f32 %v2208, %v838
      %v2228 = vmul.f32 %v2209, %v839
      %v2229 = vmul.f32 %v2210, %v840
      %v2230 = vmul.f32 %v2211, %v841
      %v2231 = vmul.f32 %v2212, %v842
      %v2232 = vmul.f32 %v2213, %v843
      %v2233 = vmul.f32 %v2214, %v844
      %v2234 = vmul.f32 %v2215, %v845
      %v2235 = vmul.f32 %v2216, %v846
      %v2236 = vmul.f32 %v2217, %v847
      %v2237 = vmul.f32 %v2218, %v848
      %v2238 = vmul.f32 %v2219, %v1381
      %v2239 = vmul.f32 %v2220, %v1773
      %v2240 = vmul.f32 %v2221, %v2222
      %v2241 = vadd.f32 %v2185, %v2223
      %v2242 = vadd.f32 %v2186, %v2224
      %v2243 = vadd.f32 %v2187, %v2225
      %v2244 = vadd.f32 %v2188, %v2226
      %v2245 = vadd.f32 %v2189, %v2227
      %v2246 = vadd.f32 %v2190, %v2228
      %v2247 = vadd.f32 %v2191, %v2229
      %v2248 = vadd.f32 %v2192, %v2230
      %v2249 = vadd.f32 %v2193, %v2231
      %v2250 = vadd.f32 %v2194, %v2232
      %v2251 = vadd.f32 %v2195, %v2233
      %v2252 = vadd.f32 %v2196, %v2234
      %v2253 = vadd.f32 %v2197, %v2235
      %v2254 = vadd.f32 %v2198, %v2236
      %v2255 = vadd.f32 %v2199, %v2237
      %v2256 = vadd.f32 %v2200, %v2238
      %v2257 = vadd.f32 %v2201, %v2239
      %v2258 = vadd.f32 %v2202, %v2240
      %v2259 = vld [vmem:[%s4] sm:$0x1]
      %v2261 = vlaneseq
      %v2262 = vshrl.u32 %v2261, 7
      %v2263 = vsub.s32 0, %v2262
      %v2264 = vrot.slane %v2259, %v2263
      %v2266 = vadd.f32 %v2241, %v2264
      %v2267 = vadd.f32 %v2242, %v2264
      %v2268 = vadd.f32 %v2243, %v2264
      %v2269 = vadd.f32 %v2244, %v2264
      %v2270 = vadd.f32 %v2245, %v2264
      %v2271 = vadd.f32 %v2246, %v2264
      %v2272 = vadd.f32 %v2247, %v2264
      %v2273 = vadd.f32 %v2248, %v2264
      %v2274 = vadd.f32 %v2249, %v2264
      %v2275 = vadd.f32 %v2250, %v2264
      %v2276 = vadd.f32 %v2251, %v2264
      %v2277 = vadd.f32 %v2252, %v2264
      %v2278 = vadd.f32 %v2253, %v2264
      %v2279 = vadd.f32 %v2254, %v2264
      %v2280 = vadd.f32 %v2255, %v2264
      %v2281 = vadd.f32 %v2256, %v2264
      %v2282 = vadd.f32 %v2257, %v2264
      %v2283 = vadd.f32 %v2258, %v2264
      %vm2284 = vcmp.gt.f32.partialorder %v2266, 0.0
      %vm2285 = vcmp.gt.f32.partialorder %v2267, 0.0
      %vm2286 = vcmp.gt.f32.partialorder %v2268, 0.0
      %vm2287 = vcmp.gt.f32.partialorder %v2269, 0.0
      %vm2288 = vcmp.gt.f32.partialorder %v2270, 0.0
      %vm2289 = vcmp.gt.f32.partialorder %v2271, 0.0
      %vm2290 = vcmp.gt.f32.partialorder %v2272, 0.0
      %vm2291 = vcmp.gt.f32.partialorder %v2273, 0.0
      %vm2292 = vcmp.gt.f32.partialorder %v2274, 0.0
      %vm2293 = vcmp.gt.f32.partialorder %v2275, 0.0
      %vm2294 = vcmp.gt.f32.partialorder %v2276, 0.0
      %vm2295 = vcmp.gt.f32.partialorder %v2277, 0.0
      %vm2296 = vcmp.gt.f32.partialorder %v2278, 0.0
      %vm2297 = vcmp.gt.f32.partialorder %v2279, 0.0
      %vm2298 = vcmp.gt.f32.partialorder %v2280, 0.0
      %vm2299 = vcmp.gt.f32.partialorder %v2281, 0.0
      %vm2300 = vcmp.gt.f32.partialorder %v2282, 0.0
      %vm2301 = vcmp.gt.f32.partialorder %v2283, 0.0
      %v2302 = vmul.f32 %v2266, 0.5
      %v2303 = vmul.f32 %v2267, 0.5
      %v2304 = vmul.f32 %v2268, 0.5
      %v2305 = vmul.f32 %v2269, 0.5
      %v2306 = vmul.f32 %v2270, 0.5
      %v2307 = vmul.f32 %v2271, 0.5
      %v2308 = vmul.f32 %v2272, 0.5
      %v2309 = vmul.f32 %v2273, 0.5
      %v2310 = vmul.f32 %v2274, 0.5
      %v2311 = vmul.f32 %v2275, 0.5
      %v2312 = vmul.f32 %v2276, 0.5
      %v2313 = vmul.f32 %v2277, 0.5
      %v2314 = vmul.f32 %v2278, 0.5
      %v2315 = vmul.f32 %v2279, 0.5
      %v2316 = vmul.f32 %v2280, 0.5
      %v2317 = vmul.f32 %v2281, 0.5
      %v2318 = vmul.f32 %v2282, 0.5
      %v2319 = vmul.f32 %v2283, 0.5
      %v2320 = vtanh.pop %v2302
      %v2321 = vtanh.pop %v2303
      %v2322 = vtanh.pop %v2304
      %v2323 = vtanh.pop %v2305
      %v2324 = vtanh.pop %v2306
      %v2325 = vtanh.pop %v2307
      %v2326 = vtanh.pop %v2308
      %v2327 = vtanh.pop %v2309
      %v2328 = vtanh.pop %v2310
      %v2329 = vtanh.pop %v2311
      %v2330 = vtanh.pop %v2312
      %v2331 = vtanh.pop %v2313
      %v2332 = vtanh.pop %v2314
      %v2333 = vtanh.pop %v2315
      %v2334 = vtanh.pop %v2316
      %v2335 = vtanh.pop %v2317
      %v2336 = vtanh.pop %v2318
      %v2337 = vtanh.pop %v2319
      %v2338 = vmul.f32 %v2266, 1.442695
      %v2339 = vpow.pop %v2338
      %v2340 = vmul.f32 %v2267, 1.442695
      %v2341 = vpow.pop %v2340
      %v2342 = vmul.f32 %v2268, 1.442695
      %v2343 = vpow.pop %v2342
      %v2344 = vmul.f32 %v2269, 1.442695
      %v2345 = vpow.pop %v2344
      %v2346 = vmul.f32 %v2270, 1.442695
      %v2347 = vpow.pop %v2346
      %v2348 = vmul.f32 %v2271, 1.442695
      %v2349 = vpow.pop %v2348
      %v2350 = vmul.f32 %v2272, 1.442695
      %v2351 = vpow.pop %v2350
      %v2352 = vmul.f32 %v2273, 1.442695
      %v2353 = vpow.pop %v2352
      %v2354 = vmul.f32 %v2274, 1.442695
      %v2355 = vpow.pop %v2354
      %v2356 = vmul.f32 %v2275, 1.442695
      %v2357 = vpow.pop %v2356
      %v2358 = vmul.f32 %v2276, 1.442695
      %v2359 = vpow.pop %v2358
      %v2360 = vmul.f32 %v2277, 1.442695
      %v2361 = vpow.pop %v2360
      %v2362 = vmul.f32 %v2278, 1.442695
      %v2363 = vpow.pop %v2362
      %v2364 = vmul.f32 %v2279, 1.442695
      %v2365 = vpow.pop %v2364
      %v2366 = vmul.f32 %v2280, 1.442695
      %v2367 = vpow.pop %v2366
      %v2368 = vmul.f32 %v2281, 1.442695
      %v2369 = vpow.pop %v2368
      %v2370 = vmul.f32 %v2282, 1.442695
      %v2371 = vpow.pop %v2370
      %v2372 = vmul.f32 %v2283, 1.442695
      %v2373 = vpow.pop %v2372
      %v2374 = vadd.f32 %v2339, 1.0
      %v2375 = vadd.f32 %v2341, 1.0
      %v2376 = vadd.f32 %v2343, 1.0
      %v2377 = vadd.f32 %v2345, 1.0
      %v2378 = vadd.f32 %v2347, 1.0
      %v2379 = vadd.f32 %v2349, 1.0
      %v2380 = vadd.f32 %v2351, 1.0
      %v2381 = vadd.f32 %v2353, 1.0
      %v2382 = vadd.f32 %v2355, 1.0
      %v2383 = vadd.f32 %v2357, 1.0
      %v2384 = vadd.f32 %v2359, 1.0
      %v2385 = vadd.f32 %v2361, 1.0
      %v2386 = vadd.f32 %v2363, 1.0
      %v2387 = vadd.f32 %v2365, 1.0
      %v2388 = vadd.f32 %v2367, 1.0
      %v2389 = vadd.f32 %v2369, 1.0
      %v2390 = vadd.f32 %v2371, 1.0
      %v2391 = vadd.f32 %v2373, 1.0
      %v2392 = vmul.f32 %v2320, %v2374
      %v2393 = vmul.f32 %v2321, %v2375
      %v2394 = vmul.f32 %v2322, %v2376
      %v2395 = vmul.f32 %v2323, %v2377
      %v2396 = vmul.f32 %v2324, %v2378
      %v2397 = vmul.f32 %v2325, %v2379
      %v2398 = vmul.f32 %v2326, %v2380
      %v2399 = vmul.f32 %v2327, %v2381
      %v2400 = vmul.f32 %v2328, %v2382
      %v2401 = vmul.f32 %v2329, %v2383
      %v2402 = vmul.f32 %v2330, %v2384
      %v2403 = vmul.f32 %v2331, %v2385
      %v2404 = vmul.f32 %v2332, %v2386
      %v2405 = vmul.f32 %v2333, %v2387
      %v2406 = vmul.f32 %v2334, %v2388
      %v2407 = vmul.f32 %v2335, %v2389
      %v2408 = vmul.f32 %v2336, %v2390
      %v2409 = vmul.f32 %v2337, %v2391
      %v2410 = vsel %vm2284, %v2266, %v2392
      %v2411 = vsel %vm2285, %v2267, %v2393
      %v2412 = vsel %vm2286, %v2268, %v2394
      %v2413 = vsel %vm2287, %v2269, %v2395
      %v2414 = vsel %vm2288, %v2270, %v2396
      %v2415 = vsel %vm2289, %v2271, %v2397
      %v2416 = vsel %vm2290, %v2272, %v2398
      %v2417 = vsel %vm2291, %v2273, %v2399
      %v2418 = vsel %vm2292, %v2274, %v2400
      %v2419 = vsel %vm2293, %v2275, %v2401
      %v2420 = vsel %vm2294, %v2276, %v2402
      %v2421 = vsel %vm2295, %v2277, %v2403
      %v2422 = vsel %vm2296, %v2278, %v2404
      %v2423 = vsel %vm2297, %v2279, %v2405
      %v2424 = vsel %vm2298, %v2280, %v2406
      %v2425 = vsel %vm2299, %v2281, %v2407
      %v2426 = vsel %vm2300, %v2282, %v2408
      %v2427 = vsel %vm2301, %v2283, %v2409
      %v2428 = vpack.c.bf16 %v2411, %v2410
      %v2429 = vpack.c.bf16 %v2413, %v2412
      %v2430 = vpack.c.bf16 %v2415, %v2414
      %v2431 = vpack.c.bf16 %v2417, %v2416
      %v2432 = vpack.c.bf16 %v2419, %v2418
      %v2433 = vpack.c.bf16 %v2421, %v2420
      %v2434 = vpack.c.bf16 %v2423, %v2422
      %v2435 = vpack.c.bf16 %v2425, %v2424
      %v2436 = vpack.c.bf16 %v2427, %v2426
      %v2437 = vld [vmem:[%s5] sm:$0xf]
      %v2438 = vld [vmem:[%s5 + $0x4] sm:$0xf]
      %v2439 = vld [vmem:[%s5 + $0x8] sm:$0xf]
      %v2440 = vld [vmem:[%s5 + $0xc] sm:$0xf]
      %v2441 = vld [vmem:[%s5 + $0x10] sm:$0xf]
      %v2442 = vld [vmem:[%s5 + $0x14] sm:$0xf]
      %v2443 = vld [vmem:[%s5 + $0x18] sm:$0xf]
      %v2444 = vld [vmem:[%s5 + $0x1c] sm:$0xf]
      %v2445 = vld [vmem:[%s6] sm:$0x1]
      %v2447 = vlaneseq
      %v2448 = vshrl.u32 %v2447, 7
      %v2449 = vsub.s32 0, %v2448
      %v2450 = vrot.slane %v2445, %v2449
      %v2460 = vunpack.c.l.b16 %v2437
      %v2461 = vunpack.c.l.b16 %v2438
      %v2462 = vunpack.c.l.b16 %v2439
      %v2463 = vunpack.c.l.b16 %v2440
      %v2464 = vunpack.c.l.b16 %v2441
      %v2465 = vunpack.c.l.b16 %v2442
      %v2466 = vunpack.c.l.b16 %v2443
      %v2467 = vunpack.c.l.b16 %v2444
      %v2468 = vpack.c.b16 %v2461, %v2460
      %v2469 = vpack.c.b16 %v2463, %v2462
      %v2470 = vpack.c.b16 %v2465, %v2464
      %v2471 = vpack.c.b16 %v2467, %v2466
      %v2477 = vsel %vm607, %v2428, 0
      %v2480 = vsel %vm607, %v2429, 0
      %v2483 = vsel %vm607, %v2430, 0
      %v2486 = vsel %vm607, %v2431, 0
      %v2489 = vsel %vm607, %v2432, 0
      %v2492 = vsel %vm607, %v2433, 0
      %v2495 = vsel %vm607, %v2434, 0
      %v2498 = vsel %vm607, %v2435, 0
      %v2501 = vsel %vm607, %v2436, 0
      %2503 = vmatprep.subr.bf16.mxu0 0
      %2504 = vmatpush1.bf16.msra.mxu0 0
      %2505 = vmatprep.subr.bf16.mxu0 0
      %2506 = vmatpush1.bf16.msra.mxu0 0
      %2507 = vmatprep.subr.bf16.mxu0 0
      %2508 = vmatpush1.bf16.msra.mxu0 0
      %2509 = vmatprep.subr.bf16.mxu0 0
      %2510 = vmatpush1.bf16.msra.mxu0 0
      %2511 = vmatprep.subr.bf16.mxu0 0
      %2512 = vmatpush1.bf16.msra.mxu0 %v2471
      %2513 = vmatprep.subr.bf16.mxu0 0
      %2514 = vmatpush1.bf16.msra.mxu0 %v2470
      %2515 = vmatprep.subr.bf16.mxu0 0
      %2516 = vmatpush1.bf16.msra.mxu0 %v2469
      %2517 = vmatprep.subr.bf16.mxu0 0
      %2518 = vmatpush1.bf16.msra.mxu0 %v2468
      %2519 = vmatprep.subr.bf16.mxu0 0
      %2520 = vmatpush2.bf16.msra.mxu0 0
      %2521 = vmatprep.subr.bf16.mxu0 0
      %2522 = vmatpush2.bf16.msra.mxu0 0
      %2523 = vmatprep.subr.bf16.mxu0 0
      %2524 = vmatpush2.bf16.msra.mxu0 0
      %2525 = vmatprep.subr.bf16.mxu0 0
      %2526 = vmatpush2.bf16.msra.mxu0 0
      %2527 = vmatprep.subr.bf16.mxu0 0
      %2528 = vmatpush2.bf16.msra.mxu0 0
      %2529 = vmatprep.subr.bf16.mxu0 0
      %2530 = vmatpush2.bf16.msra.mxu0 0
      %2531 = vmatprep.subr.bf16.mxu0 0
      %2532 = vmatpush2.bf16.msra.mxu0 0
      %2533 = vmatprep.subr.bf16.mxu0 0
      %2534 = vmatpush2.bf16.msra.mxu0 0
      %2535 = vmatprep.mubr.bf16.mxu0 0
      %2536 = vmatmul.mubr.bf16.gmra.mxu0 %v2477
      %v2537 = vpop.f32.mrf.mxu0
      %v2538 = vadd.f32 %v2450, %v2537
      %v2539 = vpop.f32.mrf.mxu0
      %v2540 = vpop.f32.mrf.mxu0
      %v2541 = vadd.f32 %v2450, %v2540
      %v2542 = vpop.f32.mrf.mxu0
      %2543 = vmatprep.mubr.bf16.mxu0 0
      %2544 = vmatmul.mubr.bf16.gmra.mxu0 %v2480
      %v2545 = vpop.f32.mrf.mxu0
      %v2546 = vadd.f32 %v2450, %v2545
      %v2547 = vpop.f32.mrf.mxu0
      %v2548 = vpop.f32.mrf.mxu0
      %v2549 = vadd.f32 %v2450, %v2548
      %v2550 = vpop.f32.mrf.mxu0
      %2551 = vmatprep.mubr.bf16.mxu0 0
      %2552 = vmatmul.mubr.bf16.gmra.mxu0 %v2483
      %v2553 = vpop.f32.mrf.mxu0
      %v2554 = vadd.f32 %v2450, %v2553
      %v2555 = vpop.f32.mrf.mxu0
      %v2556 = vpop.f32.mrf.mxu0
      %v2557 = vadd.f32 %v2450, %v2556
      %v2558 = vpop.f32.mrf.mxu0
      %2559 = vmatprep.mubr.bf16.mxu0 0
      %2560 = vmatmul.mubr.bf16.gmra.mxu0 %v2486
      %v2561 = vpop.f32.mrf.mxu0
      %v2562 = vadd.f32 %v2450, %v2561
      %v2563 = vpop.f32.mrf.mxu0
      %v2564 = vpop.f32.mrf.mxu0
      %v2565 = vadd.f32 %v2450, %v2564
      %v2566 = vpop.f32.mrf.mxu0
      %2567 = vmatprep.mubr.bf16.mxu0 0
      %2568 = vmatmul.mubr.bf16.gmra.mxu0 %v2489
      %v2569 = vpop.f32.mrf.mxu0
      %v2570 = vadd.f32 %v2450, %v2569
      %v2571 = vpop.f32.mrf.mxu0
      %v2572 = vpop.f32.mrf.mxu0
      %v2573 = vadd.f32 %v2450, %v2572
      %v2574 = vpop.f32.mrf.mxu0
      %2575 = vmatprep.mubr.bf16.mxu0 0
      %2576 = vmatmul.mubr.bf16.gmra.mxu0 %v2492
      %v2577 = vpop.f32.mrf.mxu0
      %v2578 = vadd.f32 %v2450, %v2577
      %v2579 = vpop.f32.mrf.mxu0
      %v2580 = vpop.f32.mrf.mxu0
      %v2581 = vadd.f32 %v2450, %v2580
      %v2582 = vpop.f32.mrf.mxu0
      %2583 = vmatprep.mubr.bf16.mxu0 0
      %2584 = vmatmul.mubr.bf16.gmra.mxu0 %v2495
      %v2585 = vpop.f32.mrf.mxu0
      %v2586 = vadd.f32 %v2450, %v2585
      %v2587 = vpop.f32.mrf.mxu0
      %v2588 = vpop.f32.mrf.mxu0
      %v2589 = vadd.f32 %v2450, %v2588
      %v2590 = vpop.f32.mrf.mxu0
      %2591 = vmatprep.mubr.bf16.mxu0 0
      %2592 = vmatmul.mubr.bf16.gmra.mxu0 %v2498
      %v2593 = vpop.f32.mrf.mxu0
      %v2594 = vadd.f32 %v2450, %v2593
      %v2595 = vpop.f32.mrf.mxu0
      %v2596 = vpop.f32.mrf.mxu0
      %v2597 = vadd.f32 %v2450, %v2596
      %v2598 = vpop.f32.mrf.mxu0
      %2599 = vmatprep.mubr.bf16.mxu0 0
      %2600 = vmatmul.mubr.bf16.gmra.mxu0 %v2501
      %v2601 = vpop.f32.mrf.mxu0
      %v2602 = vadd.f32 %v2450, %v2601
      %v2603 = vpop.f32.mrf.mxu0
      %v2604 = vpop.f32.mrf.mxu0
      %v2605 = vadd.f32 %v2450, %v2604
      %v2606 = vpop.f32.mrf.mxu0
      %2607 = vdwg.mxu0
      %2608 = vst.msk [vmem:[%s278] sm:$0xff] %vm330, %v2538
      %2609 = vst.msk [vmem:[%s278 + $0x8] sm:$0xff] %vm330, %v2541
      %2610 = vst.msk [vmem:[%s278 + $0x10] sm:$0xff] %vm330, %v2546
      %2611 = vst.msk [vmem:[%s278 + $0x18] sm:$0xff] %vm330, %v2549
      %2612 = vst.msk [vmem:[%s278 + $0x20] sm:$0xff] %vm330, %v2554
      %2613 = vst.msk [vmem:[%s278 + $0x28] sm:$0xff] %vm330, %v2557
      %2614 = vst.msk [vmem:[%s278 + $0x30] sm:$0xff] %vm330, %v2562
      %2615 = vst.msk [vmem:[%s278 + $0x38] sm:$0xff] %vm330, %v2565
      %2616 = vst.msk [vmem:[%s278 + $0x40] sm:$0xff] %vm330, %v2570
      %2617 = vst.msk [vmem:[%s278 + $0x48] sm:$0xff] %vm330, %v2573
      %2618 = vst.msk [vmem:[%s278 + $0x50] sm:$0xff] %vm330, %v2578
      %2619 = vst.msk [vmem:[%s278 + $0x58] sm:$0xff] %vm330, %v2581
      %2620 = vst.msk [vmem:[%s278 + $0x60] sm:$0xff] %vm330, %v2586
      %2621 = vst.msk [vmem:[%s278 + $0x68] sm:$0xff] %vm330, %v2589
      %2622 = vst.msk [vmem:[%s278 + $0x70] sm:$0xff] %vm330, %v2594
      %2623 = vst.msk [vmem:[%s278 + $0x78] sm:$0xff] %vm330, %v2597
      %2624 = vst.msk [vmem:[%s278 + $0x80] sm:$0xff] %vm330, %v2602
      %2625 = vst.msk [vmem:[%s278 + $0x88] sm:$0xff] %vm330, %v2605
      %p2626 = scmp.lt.s32.totalorder %s18, 1
      %s2627 = scalar_select %p2626, %s18, 1
      %s2628 = smul.addr %s2627, 18
      %s2629 = smul.addr %s2628, 8
      %s2630 = scalar_lea.vmem %s7, %s2629
      // Predicated region
      $region49: #{tpu_custom_call.1} parent=47 // pred_check
        %p2631 = pneg %p188
      $region50: #{tpu_custom_call.1} parent=47 // pred_check_branch
        %2633 = sbr.rel (%p2631) target = $region52
      $region51: #{tpu_custom_call.1} parent=47 // pred_region
        _
      $region52: #{tpu_custom_call.1} parent=47 // pred_fallthru
        _
    $region48: #{tpu_custom_call.1} parent=5 // pred_fallthru
      _
    %p2634 = scmp.le.s32.totalorder 2, %s13
    // Predicated region
    $region53: #{tpu_custom_call.1} parent=5 // pred_check
      %p2635 = pneg %p2634
    $region54: #{tpu_custom_call.1} parent=5 // pred_check_branch
      %2637 = sbr.rel (%p2635) target = $region56
    $region55: #{tpu_custom_call.1} parent=5 // pred_region
      %s2638 = ssub.s32 %s13, 2
      // Predicated region
      $region57: #{tpu_custom_call.1} parent=55 // pred_check
        %p2639 = pneg %p194
      $region58: #{tpu_custom_call.1} parent=55 // pred_check_branch
        %2641 = sbr.rel (%p2639) target = $region60
      $region59: #{tpu_custom_call.1} parent=55 // pred_region
        %p2642 = scmp.lt.s32.totalorder %s19, 1
        %s2643 = scalar_select %p2642, %s19, 1
        %s2644 = smul.addr %s2643, 18
        %s2645 = smul.addr %s2644, 8
        %s2646 = scalar_lea.vmem %s7, %s2645
      $region60: #{tpu_custom_call.1} parent=55 // pred_fallthru
        _
    $region56: #{tpu_custom_call.1} parent=5 // pred_fallthru
      _
  $region6: #{tpu_custom_call.1} parent=0 // loop_footer
    %s17 = sadd.s32 1, %s13
  $region7: #{tpu_custom_call.1} parent=0 // loop_footer_branch
    %12 = sbr.rel target = $region3
  $region8: #{tpu_custom_call.1} parent=0 // loop_exit
    _

</llo_original>
